<compile_context>
chip_gen: v6e
topology: v6e:2x2x1
jax: 0.10.0
libtpu: 0.0.40
codegen_flags: <defaults>
</compile_context>

<pallas_src>
import math
from functools import partial

import numpy as np

import jax
import jax.numpy as jnp
from jax.experimental import pallas as pl
from jax.experimental.pallas import tpu as pltpu

_GELU_C = math.sqrt(2.0 / math.pi)


def _vmem_limit_bytes():
    try:
        cap = int(pltpu.get_tpu_info().vmem_capacity_bytes)
    except Exception:
        cap = 128 * 1024 * 1024
    return (cap * 3) // 4


_VMEM_LIMIT = _vmem_limit_bytes()
# Bigger sequence tiles on v5e/v6e (128 MiB physical VMEM), tighter on v7x (64 MiB).
_SEQ_CAP = 512 if _VMEM_LIMIT >= 64 * 1024 * 1024 else 256
_FF_CAP = 512     # feed-forward intermediate-dim tile cap (lane/contraction dim)
_KV_CAP = 256     # flash kv tile cap (contraction depth of the P@V matmul)


def _pick_tile(n, cap, align):
    """Largest multiple of `align` dividing n that is <= cap (n itself if n <= cap)."""
    if n <= cap:
        return n
    t = (cap // align) * align
    while t >= align:
        if n % t == 0:
            return t
        t -= align
    # TODO(synk): pad + mask ragged tiles instead of falling back to the full dim.
    return n


# ----------------------------------------------------------------------------
# RoPE pair-swap: probe pltpu.roll direction/availability once per lane width.
# ----------------------------------------------------------------------------

_ROPE_ROLL_MODE = {}   # width -> (shift_next, shift_prev) or None (matmul fallback)


def _rope_roll_shifts(width):
    """Probe pltpu.roll at `width` lanes: direction + lowering support."""
    if width in _ROPE_ROLL_MODE:
        return _ROPE_ROLL_MODE[width]
    mode = None
    try:
        def _probe(o_ref):
            x = jax.lax.broadcasted_iota(jnp.float32, (8, width), 1)
            o_ref[0] = pltpu.roll(x, 1, 1)
            o_ref[1] = pltpu.roll(x, width - 1, 1)

        out = jax.device_get(pl.pallas_call(
            _probe,
            out_shape=jax.ShapeDtypeStruct((2, 8, width), jnp.float32))())
        expect_prev = (np.arange(width) - 1) % width    # x[j-1]
        expect_next = (np.arange(width) + 1) % width    # x[j+1]
        if (np.array_equal(out[0, 0], expect_prev)
                and np.array_equal(out[1, 0], expect_next)):
            mode = (width - 1, 1)        # jnp.roll-like: shift=width-1 -> next, 1 -> prev
        elif (np.array_equal(out[0, 0], expect_next)
              and np.array_equal(out[1, 0], expect_prev)):
            mode = (1, width - 1)
    except Exception:
        mode = None
    _ROPE_ROLL_MODE[width] = mode
    return mode


def _pair_swap(x, roll_shifts):
    """Return y with y[..., 2i] = x[..., 2i+1], y[..., 2i+1] = x[..., 2i]."""
    ax = x.ndim - 1
    n = x.shape[-1]
    if roll_shifts is not None:
        shift_next, shift_prev = roll_shifts
        nxt = pltpu.roll(x, shift_next, ax)      # lane j -> x[j+1]
        prv = pltpu.roll(x, shift_prev, ax)      # lane j -> x[j-1]
        lane = jax.lax.broadcasted_iota(jnp.int32, x.shape, ax)
        return jnp.where(lane % 2 == 0, nxt, prv)
    # Fallback (only if roll is unusable at this width): exact pair-swap as a
    # permutation matmul with P built in-register (no extra HBM-resident matrix).
    rows = jax.lax.broadcasted_iota(jnp.int32, (n, n), 0)
    cols = jax.lax.broadcasted_iota(jnp.int32, (n, n), 1)
    pswap = (jnp.bitwise_xor(rows, 1) == cols).astype(jnp.float32)
    return jnp.dot(x, pswap, preferred_element_type=jnp.float32)


# ----------------------------------------------------------------------------
# Kernel 1: norm1 + adaLN modulate + fused QKV projection + q/k RMSNorm + RoPE
# ----------------------------------------------------------------------------

def _norm_qkv_rope_kernel(x_ref, scale_ref, shift_ref, wqkv_ref, bqkv_ref,
                          gq_ref, gk_ref, cos_ref, sins_ref,
                          q_ref, k_ref, v_ref,
                          *, inner, in_eps, qk_eps, roll_shifts):
    x = x_ref[0]                                         # (tS, D) f32
    var = jnp.mean(x * x, axis=-1, keepdims=True)
    xm = x * jax.lax.rsqrt(var + in_eps) * (1.0 + scale_ref[0]) + shift_ref[0]
    xb = xm.astype(jnp.bfloat16)                         # MXU operands in bf16

    qkv = jnp.dot(xb, wqkv_ref[...], preferred_element_type=jnp.float32) + bqkv_ref[...]
    q = qkv[:, :inner]
    k = qkv[:, inner:2 * inner]
    v = qkv[:, 2 * inner:]

    # RMSNorm across heads (gamma_q already carries 1/sqrt(head_dim)).
    q = q * jax.lax.rsqrt(jnp.mean(q * q, axis=-1, keepdims=True) + qk_eps) * gq_ref[...]
    k = k * jax.lax.rsqrt(jnp.mean(k * k, axis=-1, keepdims=True) + qk_eps) * gk_ref[...]

    # RoPE: out = x*cos + pair_swap(x)*sin_signed (sign pre-folded into sin).
    cos = cos_ref[...]
    sins = sins_ref[...]
    q = q * cos + _pair_swap(q, roll_shifts) * sins
    k = k * cos + _pair_swap(k, roll_shifts) * sins

    q_ref[0] = q.astype(q_ref.dtype)
    k_ref[0] = k.astype(k_ref.dtype)
    v_ref[0] = v.astype(v_ref.dtype)


def norm_qkv_rope(hidden, scale, shift, wqkv, bqkv, gq, gk, cos, sins,
                  *, inner, in_eps, qk_eps):
    B, S, D = hidden.shape
    tS = _pick_tile(S, _SEQ_CAP, 8)
    grid = (B, S // tS)
    roll_shifts = _rope_roll_shifts(inner)
    out_sd = jax.ShapeDtypeStruct((B, S, inner), jnp.bfloat16)
    return pl.pallas_call(
        partial(_norm_qkv_rope_kernel, inner=inner, in_eps=in_eps, qk_eps=qk_eps,
                roll_shifts=roll_shifts),
        out_shape=(out_sd, out_sd, out_sd),
        grid=grid,
        in_specs=[
            pl.BlockSpec((1, tS, D), lambda b, s: (b, s, 0)),      # hidden
            pl.BlockSpec((1, 1, D), lambda b, s: (b, 0, 0)),       # scale_msa
            pl.BlockSpec((1, 1, D), lambda b, s: (b, 0, 0)),       # shift_msa
            # TODO(synk): on v7x mark this constant weight pipeline_mode=pl.Buffered(1)
            # (or stream its columns over an extra grid axis) to halve its VMEM footprint.
            pl.BlockSpec((D, 3 * inner), lambda b, s: (0, 0)),     # fused wq|wk|wv
            pl.BlockSpec((1, 3 * inner), lambda b, s: (0, 0)),     # fused bias
            pl.BlockSpec((1, inner), lambda b, s: (0, 0)),         # gamma_q * 1/sqrt(dh)
            pl.BlockSpec((1, inner), lambda b, s: (0, 0)),         # gamma_k
            pl.BlockSpec((tS, inner), lambda b, s: (s, 0)),        # cos
            pl.BlockSpec((tS, inner), lambda b, s: (s, 0)),        # sin (pre-signed)
        ],
        out_specs=(
            pl.BlockSpec((1, tS, inner), lambda b, s: (b, s, 0)),
            pl.BlockSpec((1, tS, inner), lambda b, s: (b, s, 0)),
            pl.BlockSpec((1, tS, inner), lambda b, s: (b, s, 0)),
        ),
        compiler_params=pltpu.CompilerParams(
            dimension_semantics=("parallel", "parallel"),
            vmem_limit_bytes=_VMEM_LIMIT),
    )(hidden, scale, shift, wqkv, bqkv, gq, gk, cos, sins)


# ----------------------------------------------------------------------------
# Kernel 2: flash attention directly on the (B, S, inner) head-column layout
# ----------------------------------------------------------------------------

def _flash_kernel(q_ref, k_ref, v_ref, o_ref, m_sc, l_sc, acc_sc, *, heads):
    ki = pl.program_id(2)

    @pl.when(ki == 0)
    def _():
        m_sc[...] = jnp.full(m_sc.shape, -jnp.inf, m_sc.dtype)
        l_sc[...] = jnp.zeros(l_sc.shape, l_sc.dtype)
        acc_sc[...] = jnp.zeros(acc_sc.shape, acc_sc.dtype)

    q = q_ref[0]          # (tq, inner) bf16, 1/sqrt(dh) already folded into norm_q
    k = k_ref[0]          # (tk, inner) bf16
    v = v_ref[0]          # (tk, inner) bf16
    dh = q.shape[-1] // heads

    for h in range(heads):                         # static unroll: per-head online softmax
        sl = slice(h * dh, (h + 1) * dh)
        s = jax.lax.dot_general(q[:, sl], k[:, sl],
                                (((1,), (1,)), ((), ())),
                                preferred_element_type=jnp.float32)    # (tq, tk)
        m_prev = m_sc[:, h:h + 1]
        m_new = jnp.maximum(m_prev, s.max(axis=-1, keepdims=True))
        alpha = jnp.exp(m_prev - m_new)
        p = jnp.exp(s - m_new)
        l_sc[:, h:h + 1] = alpha * l_sc[:, h:h + 1] + p.sum(axis=-1, keepdims=True)
        acc_sc[:, sl] = alpha * acc_sc[:, sl] + jnp.dot(
            p.astype(v.dtype), v[:, sl], preferred_element_type=jnp.float32)
        m_sc[:, h:h + 1] = m_new

    @pl.when(ki == pl.num_programs(2) - 1)
    def _():
        for h in range(heads):
            sl = slice(h * dh, (h + 1) * dh)
            inv_l = pl.reciprocal(l_sc[:, h:h + 1], approx=False)
            o_ref[0, :, sl] = (acc_sc[:, sl] * inv_l).astype(o_ref.dtype)


def flash_attention(q, k, v, *, heads):
    """q: (B,Sq,inner), k/v: (B,Skv,inner) bf16 -> (B,Sq,inner) bf16 (same column layout)."""
    B, Sq, inner = q.shape
    Skv = k.shape[1]
    tq = _pick_tile(Sq, 256, 8)
    tk = _pick_tile(Skv, _KV_CAP, 128)
    grid = (B, Sq // tq, Skv // tk)
    # TODO(synk): for tiny kv tiles (short cross-attn), pl.Buffered(3) on k/v would
    # hide the small-DMA issue latency.
    return pl.pallas_call(
        partial(_flash_kernel, heads=heads),
        out_shape=jax.ShapeDtypeStruct((B, Sq, inner), jnp.bfloat16),
        grid=grid,
        in_specs=[
            pl.BlockSpec((1, tq, inner), lambda b, qi, ki: (b, qi, 0)),
            pl.BlockSpec((1, tk, inner), lambda b, qi, ki: (b, ki, 0)),
            pl.BlockSpec((1, tk, inner), lambda b, qi, ki: (b, ki, 0)),
        ],
        out_specs=pl.BlockSpec((1, tq, inner), lambda b, qi, ki: (b, qi, 0)),
        scratch_shapes=[
            pltpu.VMEM((tq, heads), jnp.float32),    # running max per head
            pltpu.VMEM((tq, heads), jnp.float32),    # running sum per head
            pltpu.VMEM((tq, inner), jnp.float32),    # output accumulator
        ],
        compiler_params=pltpu.CompilerParams(
            dimension_semantics=("parallel", "parallel", "arbitrary"),
            vmem_limit_bytes=_VMEM_LIMIT),
    )(q, k, v)


# ----------------------------------------------------------------------------
# Kernel 3: attn1 out-proj + gate + residual, fused with attn2 q-proj + RMSNorm
# ----------------------------------------------------------------------------

def _attn1_out_q2_kernel(a_ref, wo_ref, bo_ref, gate_ref, res_ref,
                         wq_ref, bq_ref, gq_ref, h_ref, q_ref, *, qk_eps):
    a = a_ref[0]                                          # (tS, inner) bf16
    y = jnp.dot(a, wo_ref[...], preferred_element_type=jnp.float32) + bo_ref[...]
    h = res_ref[0] + y * gate_ref[0]
    h_ref[0] = h
    hb = h.astype(jnp.bfloat16)
    q = jnp.dot(hb, wq_ref[...], preferred_element_type=jnp.float32) + bq_ref[...]
    q = q * jax.lax.rsqrt(jnp.mean(q * q, axis=-1, keepdims=True) + qk_eps) * gq_ref[...]
    q_ref[0] = q.astype(q_ref.dtype)


def attn1_out_proj_q2(attn_out, wo, bo, gate, residual, wq2, bq2, gq2, *, qk_eps):
    B, S, inner = attn_out.shape
    D = wo.shape[1]
    tS = _pick_tile(S, _SEQ_CAP, 8)
    grid = (B, S // tS)
    return pl.pallas_call(
        partial(_attn1_out_q2_kernel, qk_eps=qk_eps),
        out_shape=(jax.ShapeDtypeStruct((B, S, D), jnp.float32),
                   jax.ShapeDtypeStruct((B, S, inner), jnp.bfloat16)),
        grid=grid,
        in_specs=[
            pl.BlockSpec((1, tS, inner), lambda b, s: (b, s, 0)),   # attn1 output
            pl.BlockSpec((inner, D), lambda b, s: (0, 0)),          # wo1
            pl.BlockSpec((1, D), lambda b, s: (0, 0)),              # bo1
            pl.BlockSpec((1, 1, D), lambda b, s: (b, 0, 0)),        # gate_msa
            pl.BlockSpec((1, tS, D), lambda b, s: (b, s, 0)),       # residual hidden
            pl.BlockSpec((D, inner), lambda b, s: (0, 0)),          # wq2
            pl.BlockSpec((1, inner), lambda b, s: (0, 0)),          # bq2
            pl.BlockSpec((1, inner), lambda b, s: (0, 0)),          # gamma_q2 * 1/sqrt(dh)
        ],
        out_specs=(
            pl.BlockSpec((1, tS, D), lambda b, s: (b, s, 0)),       # new hidden
            pl.BlockSpec((1, tS, inner), lambda b, s: (b, s, 0)),   # q2 (normed)
        ),
        compiler_params=pltpu.CompilerParams(
            dimension_semantics=("parallel", "parallel"),
            vmem_limit_bytes=_VMEM_LIMIT),
    )(attn_out, wo, bo, gate, residual, wq2, bq2, gq2)


# ----------------------------------------------------------------------------
# Kernel 4: attn2 fused k|v projection + k RMSNorm (encoder stream)
# ----------------------------------------------------------------------------

def _kv_proj_kernel(e_ref, wkv_ref, bkv_ref, gk_ref, k_ref, v_ref, *, inner, qk_eps):
    eb = e_ref[0].astype(jnp.bfloat16)
    kv = jnp.dot(eb, wkv_ref[...], preferred_element_type=jnp.float32) + bkv_ref[...]
    k = kv[:, :inner]
    v = kv[:, inner:]
    k = k * jax.lax.rsqrt(jnp.mean(k * k, axis=-1, keepdims=True) + qk_eps) * gk_ref[...]
    k_ref[0] = k.astype(k_ref.dtype)
    v_ref[0] = v.astype(v_ref.dtype)


def kv_proj_norm(enc, wkv, bkv, gk, *, inner, qk_eps):
    B, S, C = enc.shape
    tS = _pick_tile(S, _SEQ_CAP, 8)
    grid = (B, S // tS)
    out_sd = jax.ShapeDtypeStruct((B, S, inner), jnp.bfloat16)
    return pl.pallas_call(
        partial(_kv_proj_kernel, inner=inner, qk_eps=qk_eps),
        out_shape=(out_sd, out_sd),
        grid=grid,
        in_specs=[
            pl.BlockSpec((1, tS, C), lambda b, s: (b, s, 0)),
            pl.BlockSpec((C, 2 * inner), lambda b, s: (0, 0)),      # fused wk|wv
            pl.BlockSpec((1, 2 * inner), lambda b, s: (0, 0)),      # fused bias
            pl.BlockSpec((1, inner), lambda b, s: (0, 0)),          # gamma_k
        ],
        out_specs=(
            pl.BlockSpec((1, tS, inner), lambda b, s: (b, s, 0)),
            pl.BlockSpec((1, tS, inner), lambda b, s: (b, s, 0)),
        ),
        compiler_params=pltpu.CompilerParams(
            dimension_semantics=("parallel", "parallel"),
            vmem_limit_bytes=_VMEM_LIMIT),
    )(enc, wkv, bkv, gk)


# ----------------------------------------------------------------------------
# Kernel 5: attn2 out-proj + residual, fused with norm2 + modulate + FF + gate
# ----------------------------------------------------------------------------

def _attn2_out_ff_kernel(a_ref, wo_ref, bo_ref, res_ref, scale_ref, shift_ref, gate_ref,
                         w1_ref, b1_ref, w2_ref, b2_ref, o_ref,
                         h_sc, xn_sc, acc_sc, *, eps):
    i = pl.program_id(2)

    @pl.when(i == 0)
    def _():
        a = a_ref[0]                                      # (tS, inner) bf16
        y = jnp.dot(a, wo_ref[...], preferred_element_type=jnp.float32) + bo_ref[...]
        h = res_ref[0] + y                                # attn2 residual (no gate)
        h_sc[...] = h
        var = jnp.mean(h * h, axis=-1, keepdims=True)
        xm = h * jax.lax.rsqrt(var + eps) * (1.0 + scale_ref[0]) + shift_ref[0]
        xn_sc[...] = xm.astype(jnp.bfloat16)
        acc_sc[...] = jnp.zeros(acc_sc.shape, acc_sc.dtype)

    hmid = jnp.dot(xn_sc[...], w1_ref[...], preferred_element_type=jnp.float32) + b1_ref[...]
    g = 0.5 * hmid * (1.0 + jnp.tanh(_GELU_C * (hmid + 0.044715 * hmid * hmid * hmid)))
    acc_sc[...] += jnp.dot(g.astype(jnp.bfloat16), w2_ref[...],
                           preferred_element_type=jnp.float32)

    @pl.when(i == pl.num_programs(2) - 1)
    def _():
        o_ref[0] = h_sc[...] + (acc_sc[...] + b2_ref[...]) * gate_ref[0]


def attn2_out_ff(attn_out, wo, bo, residual, scale, shift, gate, w1, b1, w2, b2, *, eps):
    B, S, inner = attn_out.shape
    D = wo.shape[1]
    dff = w1.shape[1]
    tS = _pick_tile(S, _SEQ_CAP, 8)
    tI = _pick_tile(dff, _FF_CAP, 128)
    grid = (B, S // tS, dff // tI)
    return pl.pallas_call(
        partial(_attn2_out_ff_kernel, eps=eps),
        out_shape=jax.ShapeDtypeStruct((B, S, D), jnp.float32),
        grid=grid,
        in_specs=[
            pl.BlockSpec((1, tS, inner), lambda b, s, i: (b, s, 0)),  # attn2 output
            pl.BlockSpec((inner, D), lambda b, s, i: (0, 0)),         # wo2 (constant block)
            pl.BlockSpec((1, D), lambda b, s, i: (0, 0)),             # bo2
            pl.BlockSpec((1, tS, D), lambda b, s, i: (b, s, 0)),      # residual hidden
            pl.BlockSpec((1, 1, D), lambda b, s, i: (b, 0, 0)),       # scale_mlp
            pl.BlockSpec((1, 1, D), lambda b, s, i: (b, 0, 0)),       # shift_mlp
            pl.BlockSpec((1, 1, D), lambda b, s, i: (b, 0, 0)),       # gate_mlp
            pl.BlockSpec((D, tI), lambda b, s, i: (0, i)),            # w1 tile
            pl.BlockSpec((1, tI), lambda b, s, i: (0, i)),            # b1 tile
            pl.BlockSpec((tI, D), lambda b, s, i: (i, 0)),            # w2 tile
            pl.BlockSpec((1, D), lambda b, s, i: (0, 0)),             # b2
        ],
        out_specs=pl.BlockSpec((1, tS, D), lambda b, s, i: (b, s, 0)),
        scratch_shapes=[
            pltpu.VMEM((tS, D), jnp.float32),    # hidden after attn2 residual
            pltpu.VMEM((tS, D), jnp.bfloat16),   # norm2 + modulated activations
            pltpu.VMEM((tS, D), jnp.float32),    # FF accumulator
        ],
        compiler_params=pltpu.CompilerParams(
            dimension_semantics=("parallel", "parallel", "arbitrary"),
            vmem_limit_bytes=_VMEM_LIMIT),
    )(attn_out, wo, bo, residual, scale, shift, gate, w1, b1, w2, b2)


# ----------------------------------------------------------------------------
# Forward orchestration (plain JAX only for adaLN slicing)
# ----------------------------------------------------------------------------

def ltx_block_forward(params, hidden, encoder_hidden, temb, rope_tables, *, heads):
    """LTXVideoTransformerBlock.forward (temb sequence length assumed to be 1)."""
    # TODO(synk): encoder_attention_mask (attention bias) not implemented; mask=None only.
    B, S, D = hidden.shape
    inner = params["attn1"]["wqkv"].shape[1] // 3

    ada = params["scale_shift_table"][None, None] + temb.reshape(B, temb.shape[1], 6, D)
    shift_msa, scale_msa, gate_msa, shift_mlp, scale_mlp, gate_mlp = [
        ada[:, :, i] for i in range(6)]

    cos2, sin_signed = rope_tables                     # precomputed once, (S, inner)

    # --- attn1 (self attention, modulated norm1, RoPE) ---
    p1 = params["attn1"]
    q, k, v = norm_qkv_rope(hidden, scale_msa, shift_msa,
                            p1["wqkv"], p1["bqkv"],
                            p1["norm_q_scaled"], p1["norm_k"],
                            cos2, sin_signed,
                            inner=inner, in_eps=1e-6, qk_eps=1e-5)
    attn1 = flash_attention(q, k, v, heads=heads)

    # --- attn1 epilogue fused with attn2 q front-end ---
    p2 = params["attn2"]
    hidden, q2 = attn1_out_proj_q2(attn1, p1["wo"], p1["bo"], gate_msa, hidden,
                                   p2["wq"], p2["bq"], p2["norm_q_scaled"], qk_eps=1e-5)

    # --- attn2 (cross attention, no RoPE, no gate) ---
    k2, v2 = kv_proj_norm(encoder_hidden, p2["wkv"], p2["bkv"], p2["norm_k"],
                          inner=inner, qk_eps=1e-5)
    attn2 = flash_attention(q2, k2, v2, heads=heads)

    # --- attn2 epilogue fused with norm2 + modulate + feed-forward + gate ---
    hidden = attn2_out_ff(attn2, p2["wo"], p2["bo"], hidden,
                          scale_mlp, shift_mlp, gate_mlp,
                          params["ff"]["w1"], params["ff"]["b1"],
                          params["ff"]["w2"], params["ff"]["b2"], eps=1e-6)
    return hidden


# ----------------------------------------------------------------------------
# One-time preparation: params (fused bf16 weights) and RoPE tables
# ----------------------------------------------------------------------------

def prepare_params(p, heads):
    """Kernel-friendly params: fused bf16 weights stored (in, out), (1, n) biases/gammas,
    1/sqrt(head_dim) folded into the q RMSNorm gamma (commutes with the RoPE rotation)."""
    inner = p["attn1"]["wq"].shape[1]
    qscale = 1.0 / math.sqrt(inner // heads)

    def common(a):
        return dict(
            wo=a["wo"].astype(jnp.bfloat16),
            bo=a["bo"].reshape(1, -1).astype(jnp.float32),
            norm_q_scaled=(a["norm_q"] * qscale).reshape(1, -1).astype(jnp.float32),
            norm_k=a["norm_k"].reshape(1, -1).astype(jnp.float32),
        )

    a1, a2 = p["attn1"], p["attn2"]
    k1 = common(a1)
    k1["wqkv"] = jnp.concatenate([a1["wq"], a1["wk"], a1["wv"]], axis=1).astype(jnp.bfloat16)
    k1["bqkv"] = jnp.concatenate([a1["bq"], a1["bk"], a1["bv"]]).reshape(1, -1)
    k2 = common(a2)
    k2["wq"] = a2["wq"].astype(jnp.bfloat16)
    k2["bq"] = a2["bq"].reshape(1, -1)
    k2["wkv"] = jnp.concatenate([a2["wk"], a2["wv"]], axis=1).astype(jnp.bfloat16)
    k2["bkv"] = jnp.concatenate([a2["bk"], a2["bv"]]).reshape(1, -1)

    ff = p["ff"]
    # TODO(synk): on v7x, fp8 weight storage for these matmuls would halve VMEM/HBM traffic.
    return dict(
        scale_shift_table=p["scale_shift_table"],
        attn1=k1, attn2=k2,
        ff=dict(w1=ff["w1"].astype(jnp.bfloat16), b1=ff["b1"].reshape(1, -1),
                w2=ff["w2"].astype(jnp.bfloat16), b2=ff["b2"].reshape(1, -1)),
    )


def prepare_rope_tables(rope, seq_len, inner):
    """Hoisted RoPE preprocessing (constant across forward calls): flatten cos/sin to
    (S, inner) and fold the interleaved [-,+] sign into sin. Also resolves the
    pltpu.roll direction once, outside any jit trace."""
    cos, sin = rope
    cos2 = jnp.asarray(cos, jnp.float32).reshape(-1, inner)[:seq_len]
    alt = jnp.tile(jnp.array([-1.0, 1.0], jnp.float32), inner // 2)
    sin2 = jnp.asarray(sin, jnp.float32).reshape(-1, inner)[:seq_len] * alt
    _rope_roll_shifts(inner)
    return cos2, sin2


# ----------------------------------------------------------------------------
# Pure-JAX reference (same bf16 matmul precision) for correctness checking
# ----------------------------------------------------------------------------

def _rope_ref(x, cos, sin):
    B, S, D = x.shape
    xr = x.reshape(B, S, D // 2, 2)
    x_real = xr[..., 0]
    x_imag = xr[..., 1]
    x_rot = jnp.stack([-x_imag, x_real], axis=-1).reshape(B, S, D)
    return x * cos + x_rot * sin


def _ref_forward(params, hidden, enc, temb, rope, heads):
    def rms(x, eps, w=None):
        var = jnp.mean(x * x, axis=-1, keepdims=True)
        y = x * jax.lax.rsqrt(var + eps)
        return y if w is None else y * w

    def lin(x, w, b):
        return jnp.dot(x.astype(jnp.bfloat16), w.astype(jnp.bfloat16),
                       preferred_element_type=jnp.float32) + b

    def attn(x, ctx, p, rp):
        B, Sq, _ = x.shape
        Skv = ctx.shape[1]
        q = lin(x, p["wq"], p["bq"])
        k = lin(ctx, p["wk"], p["bk"])
        v = lin(ctx, p["wv"], p["bv"])
        q = rms(q, 1e-5, p["norm_q"])
        k = rms(k, 1e-5, p["norm_k"])
        if rp is not None:
            q = _rope_ref(q, *rp)
            k = _rope_ref(k, *rp)
        H = heads
        Dh = q.shape[-1] // H
        q = q.reshape(B, Sq, H, Dh).transpose(0, 2, 1, 3)
        k = k.reshape(B, Skv, H, Dh).transpose(0, 2, 1, 3)
        v = v.reshape(B, Skv, H, Dh).transpose(0, 2, 1, 3)
        s = jnp.einsum("bhqd,bhkd->bhqk", q.astype(jnp.bfloat16), k.astype(jnp.bfloat16),
                       preferred_element_type=jnp.float32) / math.sqrt(Dh)
        w_ = jax.nn.softmax(s, axis=-1)
        o = jnp.einsum("bhqk,bhkd->bhqd", w_, v)
        o = o.transpose(0, 2, 1, 3).reshape(B, Sq, -1)
        return lin(o, p["wo"], p["bo"])

    B, _, D = hidden.shape
    ada = params["scale_shift_table"][None, None] + temb.reshape(B, temb.shape[1], 6, D)
    sm, cm, gm, sp, cp, gp = [ada[:, :, i] for i in range(6)]
    nh = rms(hidden, 1e-6) * (1 + cm) + sm
    h = hidden + attn(nh, nh, params["attn1"], rope) * gm
    h = h + attn(h, enc, params["attn2"], None)
    nh = rms(h, 1e-6) * (1 + cp) + sp
    ff = lin(nh, params["ff"]["w1"], params["ff"]["b1"])
    ff = 0.5 * ff * (1.0 + jnp.tanh(_GELU_C * (ff + 0.044715 * ff ** 3)))
    ff = lin(ff, params["ff"]["w2"], params["ff"]["b2"])
    return h + ff * gp


# ----------------------------------------------------------------------------
# Deterministic parameter init
# ----------------------------------------------------------------------------

def init_params(key, dim, heads, head_dim, cross_dim):
    inner = heads * head_dim
    keys = iter(jax.random.split(key, 32))

    def w(shape, scale=0.02):
        return jax.random.normal(next(keys), shape, jnp.float32) * scale

    def attn_params(q_in, kv_in):
        return dict(
            wq=w((q_in, inner)), bq=w((inner,)),
            wk=w((kv_in, inner)), bk=w((inner,)),
            wv=w((kv_in, inner)), bv=w((inner,)),
            wo=w((inner, dim)), bo=w((dim,)),
            norm_q=1.0 + w((inner,)),
            norm_k=1.0 + w((inner,)),
        )

    return dict(
        scale_shift_table=w((6, dim), scale=1.0 / math.sqrt(dim)),
        attn1=attn_params(dim, dim),
        attn2=attn_params(dim, cross_dim),
        ff=dict(
            w1=w((dim, 4 * dim)), b1=w((4 * dim,)),
            w2=w((4 * dim, dim)), b2=w((dim,)),
        ),
    )


# ----------------------------------------------------------------------------
# Main
# ----------------------------------------------------------------------------

if __name__ == "__main__":
    B, S, S_enc = 2, 16, 8
    dim, heads, head_dim = 32, 2, 16
    cross_dim = 16
    inner = heads * head_dim

    root = jax.random.PRNGKey(0)
    k_par, k_h, k_e, k_t = jax.random.split(root, 4)

    raw_params = init_params(k_par, dim, heads, head_dim, cross_dim)
    kparams = prepare_params(raw_params, heads)

    hidden = jax.random.normal(k_h, (B, S, dim), jnp.float32)
    encoder_hidden = jax.random.normal(k_e, (B, S_enc, cross_dim), jnp.float32)
    temb = jax.random.normal(k_t, (B, 1, 6 * dim), jnp.float32)

    # rotary embedding (interleaved-pair / repeat_interleave layout, as in LTX)
    half = inner // 2
    inv_freq = 1.0 / (10000.0 ** (jnp.arange(half, dtype=jnp.float32) / half))
    angles = jnp.arange(S, dtype=jnp.float32)[:, None] * inv_freq[None, :]     # (S, half)
    cos = jnp.repeat(jnp.cos(angles), 2, axis=-1)[None]                        # (1, S, inner)
    sin = jnp.repeat(jnp.sin(angles), 2, axis=-1)[None]
    rope = (cos, sin)

    rope_tables = prepare_rope_tables(rope, S, inner)    # one-time, outside jit

    fwd = jax.jit(partial(ltx_block_forward, heads=heads))
    out = fwd(kparams, hidden, encoder_hidden, temb, rope_tables)
    jax.block_until_ready(out)

    ref = _ref_forward(raw_params, hidden, encoder_hidden, temb, rope, heads)
    assert out.shape == (B, S, dim)
    max_err = float(jnp.max(jnp.abs(out - ref)))
    assert bool(jnp.allclose(out, ref, atol=3e-2, rtol=3e-2)), (
        f"mismatch vs reference (max abs err {max_err})")

    print("KERNEL_OK")
</pallas_src>

<mosaic_0001>
module attributes {stable_mosaic.version = 11 : i64} {
  func.func @_norm_qkv_rope_kernel(%arg0: i32, %arg1: i32, %arg2: memref<1x16x32xf32, #tpu.memory_space<vmem>>, %arg3: memref<1x1x32xf32, #tpu.memory_space<vmem>>, %arg4: memref<1x1x32xf32, #tpu.memory_space<vmem>>, %arg5: memref<32x96xbf16, #tpu.memory_space<vmem>>, %arg6: memref<1x96xf32, #tpu.memory_space<vmem>>, %arg7: memref<1x32xf32, #tpu.memory_space<vmem>>, %arg8: memref<1x32xf32, #tpu.memory_space<vmem>>, %arg9: memref<16x32xf32, #tpu.memory_space<vmem>>, %arg10: memref<16x32xf32, #tpu.memory_space<vmem>>, %arg11: memref<1x16x32xbf16, #tpu.memory_space<vmem>>, %arg12: memref<1x16x32xbf16, #tpu.memory_space<vmem>>, %arg13: memref<1x16x32xbf16, #tpu.memory_space<vmem>>) attributes {dimension_semantics = [#tpu.dimension_semantics<parallel>, #tpu.dimension_semantics<parallel>], iteration_bounds = array<i64: 2, 1>, scalar_prefetch = 0 : i64, scratch_operands = 0 : i64, tpu.core_type = #tpu.core_type<tc>, window_params = [{transform_indices = @transform_0, window_bounds = array<i64: 1, 16, 32>}, {transform_indices = @transform_1, window_bounds = array<i64: 1, 1, 32>}, {transform_indices = @transform_2, window_bounds = array<i64: 1, 1, 32>}, {pipeline_mode = #tpu.pipeline_mode<synchronous>, transform_indices = @transform_3, window_bounds = array<i64: 32, 96>}, {pipeline_mode = #tpu.pipeline_mode<synchronous>, transform_indices = @transform_4, window_bounds = array<i64: 1, 96>}, {pipeline_mode = #tpu.pipeline_mode<synchronous>, transform_indices = @transform_5, window_bounds = array<i64: 1, 32>}, {pipeline_mode = #tpu.pipeline_mode<synchronous>, transform_indices = @transform_6, window_bounds = array<i64: 1, 32>}, {transform_indices = @transform_7, window_bounds = array<i64: 16, 32>}, {transform_indices = @transform_8, window_bounds = array<i64: 16, 32>}, {transform_indices = @transform_9, window_bounds = array<i64: 1, 16, 32>}, {transform_indices = @transform_10, window_bounds = array<i64: 1, 16, 32>}, {transform_indices = @transform_11, window_bounds = array<i64: 1, 16, 32>}]} {
    %c0 = arith.constant 0 : index
    %c0_0 = arith.constant 0 : index
    %c0_1 = arith.constant 0 : index
    %0 = vector.load %arg2[%c0, %c0_0, %c0_1] : memref<1x16x32xf32, #tpu.memory_space<vmem>>, vector<1x16x32xf32>
    %1 = vector.shape_cast %0 : vector<1x16x32xf32> to vector<16x32xf32>
    %2 = arith.mulf %1, %1 : vector<16x32xf32>
    %cst = arith.constant dense<0.000000e+00> : vector<16xf32>
    %3 = vector.multi_reduction <add>, %2, %cst [1] : vector<16x32xf32> to vector<16xf32>
    %4 = vector.shape_cast %3 : vector<16xf32> to vector<16x1xf32>
    %cst_2 = arith.constant 3.200000e+01 : f32
    %5 = vector.broadcast %cst_2 : f32 to vector<16x1xf32>
    %6 = arith.divf %4, %5 : vector<16x1xf32>
    %cst_3 = arith.constant 9.99999997E-7 : f32
    %7 = vector.broadcast %cst_3 : f32 to vector<16x1xf32>
    %8 = arith.addf %6, %7 : vector<16x1xf32>
    %9 = math.rsqrt %8 : vector<16x1xf32>
    %10 = vector.broadcast %9 : vector<16x1xf32> to vector<16x32xf32>
    %11 = arith.mulf %1, %10 : vector<16x32xf32>
    %c0_4 = arith.constant 0 : index
    %c0_5 = arith.constant 0 : index
    %c0_6 = arith.constant 0 : index
    %12 = vector.load %arg3[%c0_4, %c0_5, %c0_6] : memref<1x1x32xf32, #tpu.memory_space<vmem>>, vector<1x1x32xf32>
    %13 = vector.shape_cast %12 : vector<1x1x32xf32> to vector<1x32xf32>
    %cst_7 = arith.constant 1.000000e+00 : f32
    %14 = vector.broadcast %cst_7 : f32 to vector<1x32xf32>
    %15 = arith.addf %14, %13 : vector<1x32xf32>
    %16 = vector.broadcast %15 : vector<1x32xf32> to vector<16x32xf32>
    %17 = arith.mulf %11, %16 : vector<16x32xf32>
    %c0_8 = arith.constant 0 : index
    %c0_9 = arith.constant 0 : index
    %c0_10 = arith.constant 0 : index
    %18 = vector.load %arg4[%c0_8, %c0_9, %c0_10] : memref<1x1x32xf32, #tpu.memory_space<vmem>>, vector<1x1x32xf32>
    %19 = vector.shape_cast %18 : vector<1x1x32xf32> to vector<1x32xf32>
    %20 = vector.broadcast %19 : vector<1x32xf32> to vector<16x32xf32>
    %21 = arith.addf %17, %20 : vector<16x32xf32>
    %22 = arith.truncf %21 : vector<16x32xf32> to vector<16x32xbf16>
    %c0_11 = arith.constant 0 : index
    %c0_12 = arith.constant 0 : index
    %23 = vector.load %arg5[%c0_11, %c0_12] : memref<32x96xbf16, #tpu.memory_space<vmem>>, vector<32x96xbf16>
    %cst_13 = arith.constant dense<0.000000e+00> : vector<16x96xf32>
    %24 = tpu.matmul %22, %23, %cst_13 {dimension_numbers = #tpu.dot_dimension_numbers<[1], [0], [0], [1], [0, 0, 1, 1], [], []>} : vector<16x32xbf16>, vector<32x96xbf16>, vector<16x96xf32> -> vector<16x96xf32>
    %c0_14 = arith.constant 0 : index
    %c0_15 = arith.constant 0 : index
    %25 = vector.load %arg6[%c0_14, %c0_15] : memref<1x96xf32, #tpu.memory_space<vmem>>, vector<1x96xf32>
    %26 = vector.broadcast %25 : vector<1x96xf32> to vector<16x96xf32>
    %27 = arith.addf %24, %26 : vector<16x96xf32>
    %28 = vector.extract_strided_slice %27 {offsets = [0, 0], sizes = [16, 32], strides = [1, 1]} : vector<16x96xf32> to vector<16x32xf32>
    %29 = vector.extract_strided_slice %27 {offsets = [0, 32], sizes = [16, 32], strides = [1, 1]} : vector<16x96xf32> to vector<16x32xf32>
    %30 = vector.extract_strided_slice %27 {offsets = [0, 64], sizes = [16, 32], strides = [1, 1]} : vector<16x96xf32> to vector<16x32xf32>
    %31 = arith.mulf %28, %28 : vector<16x32xf32>
    %cst_16 = arith.constant dense<0.000000e+00> : vector<16xf32>
    %32 = vector.multi_reduction <add>, %31, %cst_16 [1] : vector<16x32xf32> to vector<16xf32>
    %33 = vector.shape_cast %32 : vector<16xf32> to vector<16x1xf32>
    %cst_17 = arith.constant 3.200000e+01 : f32
    %34 = vector.broadcast %cst_17 : f32 to vector<16x1xf32>
    %35 = arith.divf %33, %34 : vector<16x1xf32>
    %cst_18 = arith.constant 9.99999974E-6 : f32
    %36 = vector.broadcast %cst_18 : f32 to vector<16x1xf32>
    %37 = arith.addf %35, %36 : vector<16x1xf32>
    %38 = math.rsqrt %37 : vector<16x1xf32>
    %39 = vector.broadcast %38 : vector<16x1xf32> to vector<16x32xf32>
    %40 = arith.mulf %28, %39 : vector<16x32xf32>
    %c0_19 = arith.constant 0 : index
    %c0_20 = arith.constant 0 : index
    %41 = vector.load %arg7[%c0_19, %c0_20] : memref<1x32xf32, #tpu.memory_space<vmem>>, vector<1x32xf32>
    %42 = vector.broadcast %41 : vector<1x32xf32> to vector<16x32xf32>
    %43 = arith.mulf %40, %42 : vector<16x32xf32>
    %44 = arith.mulf %29, %29 : vector<16x32xf32>
    %cst_21 = arith.constant dense<0.000000e+00> : vector<16xf32>
    %45 = vector.multi_reduction <add>, %44, %cst_21 [1] : vector<16x32xf32> to vector<16xf32>
    %46 = vector.shape_cast %45 : vector<16xf32> to vector<16x1xf32>
    %cst_22 = arith.constant 3.200000e+01 : f32
    %47 = vector.broadcast %cst_22 : f32 to vector<16x1xf32>
    %48 = arith.divf %46, %47 : vector<16x1xf32>
    %cst_23 = arith.constant 9.99999974E-6 : f32
    %49 = vector.broadcast %cst_23 : f32 to vector<16x1xf32>
    %50 = arith.addf %48, %49 : vector<16x1xf32>
    %51 = math.rsqrt %50 : vector<16x1xf32>
    %52 = vector.broadcast %51 : vector<16x1xf32> to vector<16x32xf32>
    %53 = arith.mulf %29, %52 : vector<16x32xf32>
    %c0_24 = arith.constant 0 : index
    %c0_25 = arith.constant 0 : index
    %54 = vector.load %arg8[%c0_24, %c0_25] : memref<1x32xf32, #tpu.memory_space<vmem>>, vector<1x32xf32>
    %55 = vector.broadcast %54 : vector<1x32xf32> to vector<16x32xf32>
    %56 = arith.mulf %53, %55 : vector<16x32xf32>
    %c0_26 = arith.constant 0 : index
    %c0_27 = arith.constant 0 : index
    %57 = vector.load %arg9[%c0_26, %c0_27] : memref<16x32xf32, #tpu.memory_space<vmem>>, vector<16x32xf32>
    %c0_28 = arith.constant 0 : index
    %c0_29 = arith.constant 0 : index
    %58 = vector.load %arg10[%c0_28, %c0_29] : memref<16x32xf32, #tpu.memory_space<vmem>>, vector<16x32xf32>
    %59 = arith.mulf %43, %57 : vector<16x32xf32>
    %60 = tpu.iota {dimensions = array<i32: 0>} : vector<32x32xi32>
    %61 = tpu.iota {dimensions = array<i32: 1>} : vector<32x32xi32>
    %c1_i32 = arith.constant 1 : i32
    %62 = vector.broadcast %c1_i32 : i32 to vector<32x32xi32>
    %63 = arith.xori %60, %62 : vector<32x32xi32>
    %64 = arith.cmpi eq, %63, %61 : vector<32x32xi32>
    %65 = arith.extui %64 : vector<32x32xi1> to vector<32x32xi32>
    %66 = arith.sitofp %65 : vector<32x32xi32> to vector<32x32xf32>
    %cst_30 = arith.constant dense<0.000000e+00> : vector<16x32xf32>
    %67 = tpu.matmul %43, %66, %cst_30 {dimension_numbers = #tpu.dot_dimension_numbers<[1], [0], [0], [1], [0, 0, 1, 1], [], []>} : vector<16x32xf32>, vector<32x32xf32>, vector<16x32xf32> -> vector<16x32xf32>
    %68 = arith.mulf %67, %58 : vector<16x32xf32>
    %69 = arith.addf %59, %68 : vector<16x32xf32>
    %70 = arith.mulf %56, %57 : vector<16x32xf32>
    %71 = tpu.iota {dimensions = array<i32: 0>} : vector<32x32xi32>
    %72 = tpu.iota {dimensions = array<i32: 1>} : vector<32x32xi32>
    %c1_i32_31 = arith.constant 1 : i32
    %73 = vector.broadcast %c1_i32_31 : i32 to vector<32x32xi32>
    %74 = arith.xori %71, %73 : vector<32x32xi32>
    %75 = arith.cmpi eq, %74, %72 : vector<32x32xi32>
    %76 = arith.extui %75 : vector<32x32xi1> to vector<32x32xi32>
    %77 = arith.sitofp %76 : vector<32x32xi32> to vector<32x32xf32>
    %cst_32 = arith.constant dense<0.000000e+00> : vector<16x32xf32>
    %78 = tpu.matmul %56, %77, %cst_32 {dimension_numbers = #tpu.dot_dimension_numbers<[1], [0], [0], [1], [0, 0, 1, 1], [], []>} : vector<16x32xf32>, vector<32x32xf32>, vector<16x32xf32> -> vector<16x32xf32>
    %79 = arith.mulf %78, %58 : vector<16x32xf32>
    %80 = arith.addf %70, %79 : vector<16x32xf32>
    %81 = arith.truncf %69 : vector<16x32xf32> to vector<16x32xbf16>
    %c0_33 = arith.constant 0 : index
    %c0_34 = arith.constant 0 : index
    %c0_35 = arith.constant 0 : index
    %82 = vector.load %arg11[%c0_33, %c0_34, %c0_35] : memref<1x16x32xbf16, #tpu.memory_space<vmem>>, vector<1x16x32xbf16>
    %83 = vector.shape_cast %82 : vector<1x16x32xbf16> to vector<16x32xbf16>
    %84 = vector.shape_cast %81 : vector<16x32xbf16> to vector<1x16x32xbf16>
    tpu.vector_store %arg11[%c0_33, %c0_34, %c0_35], %84 {strides = array<i32>} : memref<1x16x32xbf16, #tpu.memory_space<vmem>>, vector<1x16x32xbf16>,
    %85 = arith.truncf %80 : vector<16x32xf32> to vector<16x32xbf16>
    %c0_36 = arith.constant 0 : index
    %c0_37 = arith.constant 0 : index
    %c0_38 = arith.constant 0 : index
    %86 = vector.load %arg12[%c0_36, %c0_37, %c0_38] : memref<1x16x32xbf16, #tpu.memory_space<vmem>>, vector<1x16x32xbf16>
    %87 = vector.shape_cast %86 : vector<1x16x32xbf16> to vector<16x32xbf16>
    %88 = vector.shape_cast %85 : vector<16x32xbf16> to vector<1x16x32xbf16>
    tpu.vector_store %arg12[%c0_36, %c0_37, %c0_38], %88 {strides = array<i32>} : memref<1x16x32xbf16, #tpu.memory_space<vmem>>, vector<1x16x32xbf16>,
    %89 = arith.truncf %30 : vector<16x32xf32> to vector<16x32xbf16>
    %c0_39 = arith.constant 0 : index
    %c0_40 = arith.constant 0 : index
    %c0_41 = arith.constant 0 : index
    %90 = vector.load %arg13[%c0_39, %c0_40, %c0_41] : memref<1x16x32xbf16, #tpu.memory_space<vmem>>, vector<1x16x32xbf16>
    %91 = vector.shape_cast %90 : vector<1x16x32xbf16> to vector<16x32xbf16>
    %92 = vector.shape_cast %89 : vector<16x32xbf16> to vector<1x16x32xbf16>
    tpu.vector_store %arg13[%c0_39, %c0_40, %c0_41], %92 {strides = array<i32>} : memref<1x16x32xbf16, #tpu.memory_space<vmem>>, vector<1x16x32xbf16>,
    return
  }
  func.func @transform_0(%arg0: i32, %arg1: i32) -> (i32, i32, i32) {
    %c0_i32 = arith.constant 0 : i32
    %c0_i32_0 = arith.constant 0 : i32
    return %arg0, %arg1, %c0_i32 : i32, i32, i32
  }
  func.func @transform_1(%arg0: i32, %arg1: i32) -> (i32, i32, i32) {
    %c0_i32 = arith.constant 0 : i32
    %c0_i32_0 = arith.constant 0 : i32
    %c0_i32_1 = arith.constant 0 : i32
    return %arg0, %c0_i32, %c0_i32_0 : i32, i32, i32
  }
  func.func @transform_2(%arg0: i32, %arg1: i32) -> (i32, i32, i32) {
    %c0_i32 = arith.constant 0 : i32
    %c0_i32_0 = arith.constant 0 : i32
    %c0_i32_1 = arith.constant 0 : i32
    return %arg0, %c0_i32, %c0_i32_0 : i32, i32, i32
  }
  func.func @transform_3(%arg0: i32, %arg1: i32) -> (i32, i32) {
    %c0_i32 = arith.constant 0 : i32
    %c0_i32_0 = arith.constant 0 : i32
    %c0_i32_1 = arith.constant 0 : i32
    return %c0_i32, %c0_i32_0 : i32, i32
  }
  func.func @transform_4(%arg0: i32, %arg1: i32) -> (i32, i32) {
    %c0_i32 = arith.constant 0 : i32
    %c0_i32_0 = arith.constant 0 : i32
    %c0_i32_1 = arith.constant 0 : i32
    return %c0_i32, %c0_i32_0 : i32, i32
  }
  func.func @transform_5(%arg0: i32, %arg1: i32) -> (i32, i32) {
    %c0_i32 = arith.constant 0 : i32
    %c0_i32_0 = arith.constant 0 : i32
    %c0_i32_1 = arith.constant 0 : i32
    return %c0_i32, %c0_i32_0 : i32, i32
  }
  func.func @transform_6(%arg0: i32, %arg1: i32) -> (i32, i32) {
    %c0_i32 = arith.constant 0 : i32
    %c0_i32_0 = arith.constant 0 : i32
    %c0_i32_1 = arith.constant 0 : i32
    return %c0_i32, %c0_i32_0 : i32, i32
  }
  func.func @transform_7(%arg0: i32, %arg1: i32) -> (i32, i32) {
    %c0_i32 = arith.constant 0 : i32
    %c0_i32_0 = arith.constant 0 : i32
    return %arg1, %c0_i32 : i32, i32
  }
  func.func @transform_8(%arg0: i32, %arg1: i32) -> (i32, i32) {
    %c0_i32 = arith.constant 0 : i32
    %c0_i32_0 = arith.constant 0 : i32
    return %arg1, %c0_i32 : i32, i32
  }
  func.func @transform_9(%arg0: i32, %arg1: i32) -> (i32, i32, i32) {
    %c0_i32 = arith.constant 0 : i32
    %c0_i32_0 = arith.constant 0 : i32
    return %arg0, %arg1, %c0_i32 : i32, i32, i32
  }
  func.func @transform_10(%arg0: i32, %arg1: i32) -> (i32, i32, i32) {
    %c0_i32 = arith.constant 0 : i32
    %c0_i32_0 = arith.constant 0 : i32
    return %arg0, %arg1, %c0_i32 : i32, i32, i32
  }
  func.func @transform_11(%arg0: i32, %arg1: i32) -> (i32, i32, i32) {
    %c0_i32 = arith.constant 0 : i32
    %c0_i32_0 = arith.constant 0 : i32
    return %arg0, %arg1, %c0_i32 : i32, i32, i32
  }
}

module attributes {stable_mosaic.version = 11 : i64} {
  func.func @_kv_proj_kernel(%arg0: i32, %arg1: i32, %arg2: memref<1x8x16xf32, #tpu.memory_space<vmem>>, %arg3: memref<16x64xbf16, #tpu.memory_space<vmem>>, %arg4: memref<1x64xf32, #tpu.memory_space<vmem>>, %arg5: memref<1x32xf32, #tpu.memory_space<vmem>>, %arg6: memref<1x8x32xbf16, #tpu.memory_space<vmem>>, %arg7: memref<1x8x32xbf16, #tpu.memory_space<vmem>>) attributes {dimension_semantics = [#tpu.dimension_semantics<parallel>, #tpu.dimension_semantics<parallel>], iteration_bounds = array<i64: 2, 1>, scalar_prefetch = 0 : i64, scratch_operands = 0 : i64, tpu.core_type = #tpu.core_type<tc>, window_params = [{transform_indices = @transform_0, window_bounds = array<i64: 1, 8, 16>}, {pipeline_mode = #tpu.pipeline_mode<synchronous>, transform_indices = @transform_1, window_bounds = array<i64: 16, 64>}, {pipeline_mode = #tpu.pipeline_mode<synchronous>, transform_indices = @transform_2, window_bounds = array<i64: 1, 64>}, {pipeline_mode = #tpu.pipeline_mode<synchronous>, transform_indices = @transform_3, window_bounds = array<i64: 1, 32>}, {transform_indices = @transform_4, window_bounds = array<i64: 1, 8, 32>}, {transform_indices = @transform_5, window_bounds = array<i64: 1, 8, 32>}]} {
    %c0 = arith.constant 0 : index
    %c0_0 = arith.constant 0 : index
    %c0_1 = arith.constant 0 : index
    %0 = vector.load %arg2[%c0, %c0_0, %c0_1] : memref<1x8x16xf32, #tpu.memory_space<vmem>>, vector<1x8x16xf32>
    %1 = vector.shape_cast %0 : vector<1x8x16xf32> to vector<8x16xf32>
    %2 = arith.truncf %1 : vector<8x16xf32> to vector<8x16xbf16>
    %c0_2 = arith.constant 0 : index
    %c0_3 = arith.constant 0 : index
    %3 = vector.load %arg3[%c0_2, %c0_3] : memref<16x64xbf16, #tpu.memory_space<vmem>>, vector<16x64xbf16>
    %cst = arith.constant dense<0.000000e+00> : vector<8x64xf32>
    %4 = tpu.matmul %2, %3, %cst {dimension_numbers = #tpu.dot_dimension_numbers<[1], [0], [0], [1], [0, 0, 1, 1], [], []>} : vector<8x16xbf16>, vector<16x64xbf16>, vector<8x64xf32> -> vector<8x64xf32>
    %c0_4 = arith.constant 0 : index
    %c0_5 = arith.constant 0 : index
    %5 = vector.load %arg4[%c0_4, %c0_5] : memref<1x64xf32, #tpu.memory_space<vmem>>, vector<1x64xf32>
    %6 = vector.broadcast %5 : vector<1x64xf32> to vector<8x64xf32>
    %7 = arith.addf %4, %6 : vector<8x64xf32>
    %8 = vector.extract_strided_slice %7 {offsets = [0, 0], sizes = [8, 32], strides = [1, 1]} : vector<8x64xf32> to vector<8x32xf32>
    %9 = vector.extract_strided_slice %7 {offsets = [0, 32], sizes = [8, 32], strides = [1, 1]} : vector<8x64xf32> to vector<8x32xf32>
    %10 = arith.mulf %8, %8 : vector<8x32xf32>
    %cst_6 = arith.constant dense<0.000000e+00> : vector<8xf32>
    %11 = vector.multi_reduction <add>, %10, %cst_6 [1] : vector<8x32xf32> to vector<8xf32>
    %12 = vector.shape_cast %11 : vector<8xf32> to vector<8x1xf32>
    %cst_7 = arith.constant 3.200000e+01 : f32
    %13 = vector.broadcast %cst_7 : f32 to vector<8x1xf32>
    %14 = arith.divf %12, %13 : vector<8x1xf32>
    %cst_8 = arith.constant 9.99999974E-6 : f32
    %15 = vector.broadcast %cst_8 : f32 to vector<8x1xf32>
    %16 = arith.addf %14, %15 : vector<8x1xf32>
    %17 = math.rsqrt %16 : vector<8x1xf32>
    %18 = vector.broadcast %17 : vector<8x1xf32> to vector<8x32xf32>
    %19 = arith.mulf %8, %18 : vector<8x32xf32>
    %c0_9 = arith.constant 0 : index
    %c0_10 = arith.constant 0 : index
    %20 = vector.load %arg5[%c0_9, %c0_10] : memref<1x32xf32, #tpu.memory_space<vmem>>, vector<1x32xf32>
    %21 = vector.broadcast %20 : vector<1x32xf32> to vector<8x32xf32>
    %22 = arith.mulf %19, %21 : vector<8x32xf32>
    %23 = arith.truncf %22 : vector<8x32xf32> to vector<8x32xbf16>
    %c0_11 = arith.constant 0 : index
    %c0_12 = arith.constant 0 : index
    %c0_13 = arith.constant 0 : index
    %24 = vector.load %arg6[%c0_11, %c0_12, %c0_13] : memref<1x8x32xbf16, #tpu.memory_space<vmem>>, vector<1x8x32xbf16>
    %25 = vector.shape_cast %24 : vector<1x8x32xbf16> to vector<8x32xbf16>
    %26 = vector.shape_cast %23 : vector<8x32xbf16> to vector<1x8x32xbf16>
    tpu.vector_store %arg6[%c0_11, %c0_12, %c0_13], %26 {strides = array<i32>} : memref<1x8x32xbf16, #tpu.memory_space<vmem>>, vector<1x8x32xbf16>,
    %27 = arith.truncf %9 : vector<8x32xf32> to vector<8x32xbf16>
    %c0_14 = arith.constant 0 : index
    %c0_15 = arith.constant 0 : index
    %c0_16 = arith.constant 0 : index
    %28 = vector.load %arg7[%c0_14, %c0_15, %c0_16] : memref<1x8x32xbf16, #tpu.memory_space<vmem>>, vector<1x8x32xbf16>
    %29 = vector.shape_cast %28 : vector<1x8x32xbf16> to vector<8x32xbf16>
    %30 = vector.shape_cast %27 : vector<8x32xbf16> to vector<1x8x32xbf16>
    tpu.vector_store %arg7[%c0_14, %c0_15, %c0_16], %30 {strides = array<i32>} : memref<1x8x32xbf16, #tpu.memory_space<vmem>>, vector<1x8x32xbf16>,
    return
  }
  func.func @transform_0(%arg0: i32, %arg1: i32) -> (i32, i32, i32) {
    %c0_i32 = arith.constant 0 : i32
    %c0_i32_0 = arith.constant 0 : i32
    return %arg0, %arg1, %c0_i32 : i32, i32, i32
  }
  func.func @transform_1(%arg0: i32, %arg1: i32) -> (i32, i32) {
    %c0_i32 = arith.constant 0 : i32
    %c0_i32_0 = arith.constant 0 : i32
    %c0_i32_1 = arith.constant 0 : i32
    return %c0_i32, %c0_i32_0 : i32, i32
  }
  func.func @transform_2(%arg0: i32, %arg1: i32) -> (i32, i32) {
    %c0_i32 = arith.constant 0 : i32
    %c0_i32_0 = arith.constant 0 : i32
    %c0_i32_1 = arith.constant 0 : i32
    return %c0_i32, %c0_i32_0 : i32, i32
  }
  func.func @transform_3(%arg0: i32, %arg1: i32) -> (i32, i32) {
    %c0_i32 = arith.constant 0 : i32
    %c0_i32_0 = arith.constant 0 : i32
    %c0_i32_1 = arith.constant 0 : i32
    return %c0_i32, %c0_i32_0 : i32, i32
  }
  func.func @transform_4(%arg0: i32, %arg1: i32) -> (i32, i32, i32) {
    %c0_i32 = arith.constant 0 : i32
    %c0_i32_0 = arith.constant 0 : i32
    return %arg0, %arg1, %c0_i32 : i32, i32, i32
  }
  func.func @transform_5(%arg0: i32, %arg1: i32) -> (i32, i32, i32) {
    %c0_i32 = arith.constant 0 : i32
    %c0_i32_0 = arith.constant 0 : i32
    return %arg0, %arg1, %c0_i32 : i32, i32, i32
  }
}

module attributes {stable_mosaic.version = 11 : i64} {
  func.func @_attn1_out_q2_kernel(%arg0: i32, %arg1: i32, %arg2: memref<1x16x32xbf16, #tpu.memory_space<vmem>>, %arg3: memref<32x32xbf16, #tpu.memory_space<vmem>>, %arg4: memref<1x32xf32, #tpu.memory_space<vmem>>, %arg5: memref<1x1x32xf32, #tpu.memory_space<vmem>>, %arg6: memref<1x16x32xf32, #tpu.memory_space<vmem>>, %arg7: memref<32x32xbf16, #tpu.memory_space<vmem>>, %arg8: memref<1x32xf32, #tpu.memory_space<vmem>>, %arg9: memref<1x32xf32, #tpu.memory_space<vmem>>, %arg10: memref<1x16x32xf32, #tpu.memory_space<vmem>>, %arg11: memref<1x16x32xbf16, #tpu.memory_space<vmem>>) attributes {dimension_semantics = [#tpu.dimension_semantics<parallel>, #tpu.dimension_semantics<parallel>], iteration_bounds = array<i64: 2, 1>, scalar_prefetch = 0 : i64, scratch_operands = 0 : i64, tpu.core_type = #tpu.core_type<tc>, window_params = [{transform_indices = @transform_0, window_bounds = array<i64: 1, 16, 32>}, {pipeline_mode = #tpu.pipeline_mode<synchronous>, transform_indices = @transform_1, window_bounds = array<i64: 32, 32>}, {pipeline_mode = #tpu.pipeline_mode<synchronous>, transform_indices = @transform_2, window_bounds = array<i64: 1, 32>}, {transform_indices = @transform_3, window_bounds = array<i64: 1, 1, 32>}, {transform_indices = @transform_4, window_bounds = array<i64: 1, 16, 32>}, {pipeline_mode = #tpu.pipeline_mode<synchronous>, transform_indices = @transform_5, window_bounds = array<i64: 32, 32>}, {pipeline_mode = #tpu.pipeline_mode<synchronous>, transform_indices = @transform_6, window_bounds = array<i64: 1, 32>}, {pipeline_mode = #tpu.pipeline_mode<synchronous>, transform_indices = @transform_7, window_bounds = array<i64: 1, 32>}, {transform_indices = @transform_8, window_bounds = array<i64: 1, 16, 32>}, {transform_indices = @transform_9, window_bounds = array<i64: 1, 16, 32>}]} {
    %c0 = arith.constant 0 : index
    %c0_0 = arith.constant 0 : index
    %c0_1 = arith.constant 0 : index
    %0 = vector.load %arg2[%c0, %c0_0, %c0_1] : memref<1x16x32xbf16, #tpu.memory_space<vmem>>, vector<1x16x32xbf16>
    %1 = vector.shape_cast %0 : vector<1x16x32xbf16> to vector<16x32xbf16>
    %c0_2 = arith.constant 0 : index
    %c0_3 = arith.constant 0 : index
    %2 = vector.load %arg3[%c0_2, %c0_3] : memref<32x32xbf16, #tpu.memory_space<vmem>>, vector<32x32xbf16>
    %cst = arith.constant dense<0.000000e+00> : vector<16x32xf32>
    %3 = tpu.matmul %1, %2, %cst {dimension_numbers = #tpu.dot_dimension_numbers<[1], [0], [0], [1], [0, 0, 1, 1], [], []>} : vector<16x32xbf16>, vector<32x32xbf16>, vector<16x32xf32> -> vector<16x32xf32>
    %c0_4 = arith.constant 0 : index
    %c0_5 = arith.constant 0 : index
    %4 = vector.load %arg4[%c0_4, %c0_5] : memref<1x32xf32, #tpu.memory_space<vmem>>, vector<1x32xf32>
    %5 = vector.broadcast %4 : vector<1x32xf32> to vector<16x32xf32>
    %6 = arith.addf %3, %5 : vector<16x32xf32>
    %c0_6 = arith.constant 0 : index
    %c0_7 = arith.constant 0 : index
    %c0_8 = arith.constant 0 : index
    %7 = vector.load %arg6[%c0_6, %c0_7, %c0_8] : memref<1x16x32xf32, #tpu.memory_space<vmem>>, vector<1x16x32xf32>
    %8 = vector.shape_cast %7 : vector<1x16x32xf32> to vector<16x32xf32>
    %c0_9 = arith.constant 0 : index
    %c0_10 = arith.constant 0 : index
    %c0_11 = arith.constant 0 : index
    %9 = vector.load %arg5[%c0_9, %c0_10, %c0_11] : memref<1x1x32xf32, #tpu.memory_space<vmem>>, vector<1x1x32xf32>
    %10 = vector.shape_cast %9 : vector<1x1x32xf32> to vector<1x32xf32>
    %11 = vector.broadcast %10 : vector<1x32xf32> to vector<16x32xf32>
    %12 = arith.mulf %6, %11 : vector<16x32xf32>
    %13 = arith.addf %8, %12 : vector<16x32xf32>
    %c0_12 = arith.constant 0 : index
    %c0_13 = arith.constant 0 : index
    %c0_14 = arith.constant 0 : index
    %14 = vector.load %arg10[%c0_12, %c0_13, %c0_14] : memref<1x16x32xf32, #tpu.memory_space<vmem>>, vector<1x16x32xf32>
    %15 = vector.shape_cast %14 : vector<1x16x32xf32> to vector<16x32xf32>
    %16 = vector.shape_cast %13 : vector<16x32xf32> to vector<1x16x32xf32>
    tpu.vector_store %arg10[%c0_12, %c0_13, %c0_14], %16 {strides = array<i32>} : memref<1x16x32xf32, #tpu.memory_space<vmem>>, vector<1x16x32xf32>,
    %17 = arith.truncf %13 : vector<16x32xf32> to vector<16x32xbf16>
    %c0_15 = arith.constant 0 : index
    %c0_16 = arith.constant 0 : index
    %18 = vector.load %arg7[%c0_15, %c0_16] : memref<32x32xbf16, #tpu.memory_space<vmem>>, vector<32x32xbf16>
    %cst_17 = arith.constant dense<0.000000e+00> : vector<16x32xf32>
    %19 = tpu.matmul %17, %18, %cst_17 {dimension_numbers = #tpu.dot_dimension_numbers<[1], [0], [0], [1], [0, 0, 1, 1], [], []>} : vector<16x32xbf16>, vector<32x32xbf16>, vector<16x32xf32> -> vector<16x32xf32>
    %c0_18 = arith.constant 0 : index
    %c0_19 = arith.constant 0 : index
    %20 = vector.load %arg8[%c0_18, %c0_19] : memref<1x32xf32, #tpu.memory_space<vmem>>, vector<1x32xf32>
    %21 = vector.broadcast %20 : vector<1x32xf32> to vector<16x32xf32>
    %22 = arith.addf %19, %21 : vector<16x32xf32>
    %23 = arith.mulf %22, %22 : vector<16x32xf32>
    %cst_20 = arith.constant dense<0.000000e+00> : vector<16xf32>
    %24 = vector.multi_reduction <add>, %23, %cst_20 [1] : vector<16x32xf32> to vector<16xf32>
    %25 = vector.shape_cast %24 : vector<16xf32> to vector<16x1xf32>
    %cst_21 = arith.constant 3.200000e+01 : f32
    %26 = vector.broadcast %cst_21 : f32 to vector<16x1xf32>
    %27 = arith.divf %25, %26 : vector<16x1xf32>
    %cst_22 = arith.constant 9.99999974E-6 : f32
    %28 = vector.broadcast %cst_22 : f32 to vector<16x1xf32>
    %29 = arith.addf %27, %28 : vector<16x1xf32>
    %30 = math.rsqrt %29 : vector<16x1xf32>
    %31 = vector.broadcast %30 : vector<16x1xf32> to vector<16x32xf32>
    %32 = arith.mulf %22, %31 : vector<16x32xf32>
    %c0_23 = arith.constant 0 : index
    %c0_24 = arith.constant 0 : index
    %33 = vector.load %arg9[%c0_23, %c0_24] : memref<1x32xf32, #tpu.memory_space<vmem>>, vector<1x32xf32>
    %34 = vector.broadcast %33 : vector<1x32xf32> to vector<16x32xf32>
    %35 = arith.mulf %32, %34 : vector<16x32xf32>
    %36 = arith.truncf %35 : vector<16x32xf32> to vector<16x32xbf16>
    %c0_25 = arith.constant 0 : index
    %c0_26 = arith.constant 0 : index
    %c0_27 = arith.constant 0 : index
    %37 = vector.load %arg11[%c0_25, %c0_26, %c0_27] : memref<1x16x32xbf16, #tpu.memory_space<vmem>>, vector<1x16x32xbf16>
    %38 = vector.shape_cast %37 : vector<1x16x32xbf16> to vector<16x32xbf16>
    %39 = vector.shape_cast %36 : vector<16x32xbf16> to vector<1x16x32xbf16>
    tpu.vector_store %arg11[%c0_25, %c0_26, %c0_27], %39 {strides = array<i32>} : memref<1x16x32xbf16, #tpu.memory_space<vmem>>, vector<1x16x32xbf16>,
    return
  }
  func.func @transform_0(%arg0: i32, %arg1: i32) -> (i32, i32, i32) {
    %c0_i32 = arith.constant 0 : i32
    %c0_i32_0 = arith.constant 0 : i32
    return %arg0, %arg1, %c0_i32 : i32, i32, i32
  }
  func.func @transform_1(%arg0: i32, %arg1: i32) -> (i32, i32) {
    %c0_i32 = arith.constant 0 : i32
    %c0_i32_0 = arith.constant 0 : i32
    %c0_i32_1 = arith.constant 0 : i32
    return %c0_i32, %c0_i32_0 : i32, i32
  }
  func.func @transform_2(%arg0: i32, %arg1: i32) -> (i32, i32) {
    %c0_i32 = arith.constant 0 : i32
    %c0_i32_0 = arith.constant 0 : i32
    %c0_i32_1 = arith.constant 0 : i32
    return %c0_i32, %c0_i32_0 : i32, i32
  }
  func.func @transform_3(%arg0: i32, %arg1: i32) -> (i32, i32, i32) {
    %c0_i32 = arith.constant 0 : i32
    %c0_i32_0 = arith.constant 0 : i32
    %c0_i32_1 = arith.constant 0 : i32
    return %arg0, %c0_i32, %c0_i32_0 : i32, i32, i32
  }
  func.func @transform_4(%arg0: i32, %arg1: i32) -> (i32, i32, i32) {
    %c0_i32 = arith.constant 0 : i32
    %c0_i32_0 = arith.constant 0 : i32
    return %arg0, %arg1, %c0_i32 : i32, i32, i32
  }
  func.func @transform_5(%arg0: i32, %arg1: i32) -> (i32, i32) {
    %c0_i32 = arith.constant 0 : i32
    %c0_i32_0 = arith.constant 0 : i32
    %c0_i32_1 = arith.constant 0 : i32
    return %c0_i32, %c0_i32_0 : i32, i32
  }
  func.func @transform_6(%arg0: i32, %arg1: i32) -> (i32, i32) {
    %c0_i32 = arith.constant 0 : i32
    %c0_i32_0 = arith.constant 0 : i32
    %c0_i32_1 = arith.constant 0 : i32
    return %c0_i32, %c0_i32_0 : i32, i32
  }
  func.func @transform_7(%arg0: i32, %arg1: i32) -> (i32, i32) {
    %c0_i32 = arith.constant 0 : i32
    %c0_i32_0 = arith.constant 0 : i32
    %c0_i32_1 = arith.constant 0 : i32
    return %c0_i32, %c0_i32_0 : i32, i32
  }
  func.func @transform_8(%arg0: i32, %arg1: i32) -> (i32, i32, i32) {
    %c0_i32 = arith.constant 0 : i32
    %c0_i32_0 = arith.constant 0 : i32
    return %arg0, %arg1, %c0_i32 : i32, i32, i32
  }
  func.func @transform_9(%arg0: i32, %arg1: i32) -> (i32, i32, i32) {
    %c0_i32 = arith.constant 0 : i32
    %c0_i32_0 = arith.constant 0 : i32
    return %arg0, %arg1, %c0_i32 : i32, i32, i32
  }
}

module attributes {stable_mosaic.version = 11 : i64} {
  func.func @_flash_kernel(%arg0: i32, %arg1: i32, %arg2: i32, %arg3: memref<1x16x32xbf16, #tpu.memory_space<vmem>>, %arg4: memref<1x16x32xbf16, #tpu.memory_space<vmem>>, %arg5: memref<1x16x32xbf16, #tpu.memory_space<vmem>>, %arg6: memref<1x16x32xbf16, #tpu.memory_space<vmem>>, %arg7: memref<16x2xf32, #tpu.memory_space<vmem>>, %arg8: memref<16x2xf32, #tpu.memory_space<vmem>>, %arg9: memref<16x32xf32, #tpu.memory_space<vmem>>) attributes {dimension_semantics = [#tpu.dimension_semantics<parallel>, #tpu.dimension_semantics<parallel>, #tpu.dimension_semantics<arbitrary>], iteration_bounds = array<i64: 2, 1, 1>, scalar_prefetch = 0 : i64, scratch_operands = 3 : i64, tpu.core_type = #tpu.core_type<tc>, window_params = [{transform_indices = @transform_0, window_bounds = array<i64: 1, 16, 32>}, {transform_indices = @transform_1, window_bounds = array<i64: 1, 16, 32>}, {transform_indices = @transform_2, window_bounds = array<i64: 1, 16, 32>}, {transform_indices = @transform_3, window_bounds = array<i64: 1, 16, 32>}]} {
    %c0_i32 = arith.constant 0 : i32
    %0 = arith.cmpi eq, %arg2, %c0_i32 : i32
    %1 = arith.extui %0 : i1 to i32
    %c0_i32_0 = arith.constant 0 : i32
    %2 = arith.cmpi ne, %1, %c0_i32_0 : i32
    scf.if %2 {
      %cst_40 = arith.constant 0xFF800000 : f32
      %66 = vector.broadcast %cst_40 : f32 to vector<16x2xf32>
      %c0_41 = arith.constant 0 : index
      %c0_42 = arith.constant 0 : index
      %67 = vector.load %arg7[%c0_41, %c0_42] : memref<16x2xf32, #tpu.memory_space<vmem>>, vector<16x2xf32>
      tpu.vector_store %arg7[%c0_41, %c0_42], %66 {strides = array<i32>} : memref<16x2xf32, #tpu.memory_space<vmem>>, vector<16x2xf32>,
      %cst_43 = arith.constant 0.000000e+00 : f32
      %68 = vector.broadcast %cst_43 : f32 to vector<16x2xf32>
      %c0_44 = arith.constant 0 : index
      %c0_45 = arith.constant 0 : index
      %69 = vector.load %arg8[%c0_44, %c0_45] : memref<16x2xf32, #tpu.memory_space<vmem>>, vector<16x2xf32>
      tpu.vector_store %arg8[%c0_44, %c0_45], %68 {strides = array<i32>} : memref<16x2xf32, #tpu.memory_space<vmem>>, vector<16x2xf32>,
      %cst_46 = arith.constant 0.000000e+00 : f32
      %70 = vector.broadcast %cst_46 : f32 to vector<16x32xf32>
      %c0_47 = arith.constant 0 : index
      %c0_48 = arith.constant 0 : index
      %71 = vector.load %arg9[%c0_47, %c0_48] : memref<16x32xf32, #tpu.memory_space<vmem>>, vector<16x32xf32>
      tpu.vector_store %arg9[%c0_47, %c0_48], %70 {strides = array<i32>} : memref<16x32xf32, #tpu.memory_space<vmem>>, vector<16x32xf32>,
    } else {
    }
    %c0 = arith.constant 0 : index
    %c0_1 = arith.constant 0 : index
    %c0_2 = arith.constant 0 : index
    %3 = vector.load %arg3[%c0, %c0_1, %c0_2] : memref<1x16x32xbf16, #tpu.memory_space<vmem>>, vector<1x16x32xbf16>
    %4 = vector.shape_cast %3 : vector<1x16x32xbf16> to vector<16x32xbf16>
    %c0_3 = arith.constant 0 : index
    %c0_4 = arith.constant 0 : index
    %c0_5 = arith.constant 0 : index
    %5 = vector.load %arg4[%c0_3, %c0_4, %c0_5] : memref<1x16x32xbf16, #tpu.memory_space<vmem>>, vector<1x16x32xbf16>
    %6 = vector.shape_cast %5 : vector<1x16x32xbf16> to vector<16x32xbf16>
    %c0_6 = arith.constant 0 : index
    %c0_7 = arith.constant 0 : index
    %c0_8 = arith.constant 0 : index
    %7 = vector.load %arg5[%c0_6, %c0_7, %c0_8] : memref<1x16x32xbf16, #tpu.memory_space<vmem>>, vector<1x16x32xbf16>
    %8 = vector.shape_cast %7 : vector<1x16x32xbf16> to vector<16x32xbf16>
    %9 = vector.extract_strided_slice %4 {offsets = [0, 0], sizes = [16, 16], strides = [1, 1]} : vector<16x32xbf16> to vector<16x16xbf16>
    %10 = vector.extract_strided_slice %6 {offsets = [0, 0], sizes = [16, 16], strides = [1, 1]} : vector<16x32xbf16> to vector<16x16xbf16>
    %cst = arith.constant dense<0.000000e+00> : vector<16x16xf32>
    %11 = tpu.matmul %9, %10, %cst {dimension_numbers = #tpu.dot_dimension_numbers<[1], [1], [0], [0], [0, 0, 1, 0], [], []>} : vector<16x16xbf16>, vector<16x16xbf16>, vector<16x16xf32> -> vector<16x16xf32>
    %c0_9 = arith.constant 0 : index
    %c0_10 = arith.constant 0 : index
    %12 = vector.load %arg7[%c0_9, %c0_10] : memref<16x2xf32, #tpu.memory_space<vmem>>, vector<16x1xf32>
    %cst_11 = arith.constant dense<0xFF800000> : vector<16xf32>
    %13 = vector.multi_reduction <maximumf>, %11, %cst_11 [1] : vector<16x16xf32> to vector<16xf32>
    %14 = vector.shape_cast %13 : vector<16xf32> to vector<16x1xf32>
    %15 = arith.maximumf %12, %14 : vector<16x1xf32>
    %16 = arith.subf %12, %15 : vector<16x1xf32>
    %17 = math.exp %16 : vector<16x1xf32>
    %18 = vector.broadcast %15 : vector<16x1xf32> to vector<16x16xf32>
    %19 = arith.subf %11, %18 : vector<16x16xf32>
    %20 = math.exp %19 : vector<16x16xf32>
    %c0_12 = arith.constant 0 : index
    %c0_13 = arith.constant 0 : index
    %21 = vector.load %arg8[%c0_12, %c0_13] : memref<16x2xf32, #tpu.memory_space<vmem>>, vector<16x1xf32>
    %22 = arith.mulf %17, %21 : vector<16x1xf32>
    %cst_14 = arith.constant dense<0.000000e+00> : vector<16xf32>
    %23 = vector.multi_reduction <add>, %20, %cst_14 [1] : vector<16x16xf32> to vector<16xf32>
    %24 = vector.shape_cast %23 : vector<16xf32> to vector<16x1xf32>
    %25 = arith.addf %22, %24 : vector<16x1xf32>
    %c0_15 = arith.constant 0 : index
    %c0_16 = arith.constant 0 : index
    %26 = vector.load %arg8[%c0_15, %c0_16] : memref<16x2xf32, #tpu.memory_space<vmem>>, vector<16x1xf32>
    tpu.vector_store %arg8[%c0_15, %c0_16], %25 {strides = array<i32>} : memref<16x2xf32, #tpu.memory_space<vmem>>, vector<16x1xf32>,
    %c0_17 = arith.constant 0 : index
    %c0_18 = arith.constant 0 : index
    %27 = vector.load %arg9[%c0_17, %c0_18] : memref<16x32xf32, #tpu.memory_space<vmem>>, vector<16x16xf32>
    %28 = vector.broadcast %17 : vector<16x1xf32> to vector<16x16xf32>
    %29 = arith.mulf %28, %27 : vector<16x16xf32>
    %30 = arith.truncf %20 : vector<16x16xf32> to vector<16x16xbf16>
    %31 = vector.extract_strided_slice %8 {offsets = [0, 0], sizes = [16, 16], strides = [1, 1]} : vector<16x32xbf16> to vector<16x16xbf16>
    %cst_19 = arith.constant dense<0.000000e+00> : vector<16x16xf32>
    %32 = tpu.matmul %30, %31, %cst_19 {dimension_numbers = #tpu.dot_dimension_numbers<[1], [0], [0], [1], [0, 0, 1, 1], [], []>} : vector<16x16xbf16>, vector<16x16xbf16>, vector<16x16xf32> -> vector<16x16xf32>
    %33 = arith.addf %29, %32 : vector<16x16xf32>
    %c0_20 = arith.constant 0 : index
    %c0_21 = arith.constant 0 : index
    %34 = vector.load %arg9[%c0_20, %c0_21] : memref<16x32xf32, #tpu.memory_space<vmem>>, vector<16x16xf32>
    tpu.vector_store %arg9[%c0_20, %c0_21], %33 {strides = array<i32>} : memref<16x32xf32, #tpu.memory_space<vmem>>, vector<16x16xf32>,
    %c0_22 = arith.constant 0 : index
    %c0_23 = arith.constant 0 : index
    %35 = vector.load %arg7[%c0_22, %c0_23] : memref<16x2xf32, #tpu.memory_space<vmem>>, vector<16x1xf32>
    tpu.vector_store %arg7[%c0_22, %c0_23], %15 {strides = array<i32>} : memref<16x2xf32, #tpu.memory_space<vmem>>, vector<16x1xf32>,
    %36 = vector.extract_strided_slice %4 {offsets = [0, 16], sizes = [16, 16], strides = [1, 1]} : vector<16x32xbf16> to vector<16x16xbf16>
    %37 = vector.extract_strided_slice %6 {offsets = [0, 16], sizes = [16, 16], strides = [1, 1]} : vector<16x32xbf16> to vector<16x16xbf16>
    %cst_24 = arith.constant dense<0.000000e+00> : vector<16x16xf32>
    %38 = tpu.matmul %36, %37, %cst_24 {dimension_numbers = #tpu.dot_dimension_numbers<[1], [1], [0], [0], [0, 0, 1, 0], [], []>} : vector<16x16xbf16>, vector<16x16xbf16>, vector<16x16xf32> -> vector<16x16xf32>
    %c0_25 = arith.constant 0 : index
    %c1 = arith.constant 1 : index
    %39 = vector.load %arg7[%c0_25, %c1] : memref<16x2xf32, #tpu.memory_space<vmem>>, vector<16x1xf32>
    %cst_26 = arith.constant dense<0xFF800000> : vector<16xf32>
    %40 = vector.multi_reduction <maximumf>, %38, %cst_26 [1] : vector<16x16xf32> to vector<16xf32>
    %41 = vector.shape_cast %40 : vector<16xf32> to vector<16x1xf32>
    %42 = arith.maximumf %39, %41 : vector<16x1xf32>
    %43 = arith.subf %39, %42 : vector<16x1xf32>
    %44 = math.exp %43 : vector<16x1xf32>
    %45 = vector.broadcast %42 : vector<16x1xf32> to vector<16x16xf32>
    %46 = arith.subf %38, %45 : vector<16x16xf32>
    %47 = math.exp %46 : vector<16x16xf32>
    %c0_27 = arith.constant 0 : index
    %c1_28 = arith.constant 1 : index
    %48 = vector.load %arg8[%c0_27, %c1_28] : memref<16x2xf32, #tpu.memory_space<vmem>>, vector<16x1xf32>
    %49 = arith.mulf %44, %48 : vector<16x1xf32>
    %cst_29 = arith.constant dense<0.000000e+00> : vector<16xf32>
    %50 = vector.multi_reduction <add>, %47, %cst_29 [1] : vector<16x16xf32> to vector<16xf32>
    %51 = vector.shape_cast %50 : vector<16xf32> to vector<16x1xf32>
    %52 = arith.addf %49, %51 : vector<16x1xf32>
    %c0_30 = arith.constant 0 : index
    %c1_31 = arith.constant 1 : index
    %53 = vector.load %arg8[%c0_30, %c1_31] : memref<16x2xf32, #tpu.memory_space<vmem>>, vector<16x1xf32>
    tpu.vector_store %arg8[%c0_30, %c1_31], %52 {strides = array<i32>} : memref<16x2xf32, #tpu.memory_space<vmem>>, vector<16x1xf32>,
    %c0_32 = arith.constant 0 : index
    %c16 = arith.constant 16 : index
    %54 = vector.load %arg9[%c0_32, %c16] : memref<16x32xf32, #tpu.memory_space<vmem>>, vector<16x16xf32>
    %55 = vector.broadcast %44 : vector<16x1xf32> to vector<16x16xf32>
    %56 = arith.mulf %55, %54 : vector<16x16xf32>
    %57 = arith.truncf %47 : vector<16x16xf32> to vector<16x16xbf16>
    %58 = vector.extract_strided_slice %8 {offsets = [0, 16], sizes = [16, 16], strides = [1, 1]} : vector<16x32xbf16> to vector<16x16xbf16>
    %cst_33 = arith.constant dense<0.000000e+00> : vector<16x16xf32>
    %59 = tpu.matmul %57, %58, %cst_33 {dimension_numbers = #tpu.dot_dimension_numbers<[1], [0], [0], [1], [0, 0, 1, 1], [], []>} : vector<16x16xbf16>, vector<16x16xbf16>, vector<16x16xf32> -> vector<16x16xf32>
    %60 = arith.addf %56, %59 : vector<16x16xf32>
    %c0_34 = arith.constant 0 : index
    %c16_35 = arith.constant 16 : index
    %61 = vector.load %arg9[%c0_34, %c16_35] : memref<16x32xf32, #tpu.memory_space<vmem>>, vector<16x16xf32>
    tpu.vector_store %arg9[%c0_34, %c16_35], %60 {strides = array<i32>} : memref<16x32xf32, #tpu.memory_space<vmem>>, vector<16x16xf32>,
    %c0_36 = arith.constant 0 : index
    %c1_37 = arith.constant 1 : index
    %62 = vector.load %arg7[%c0_36, %c1_37] : memref<16x2xf32, #tpu.memory_space<vmem>>, vector<16x1xf32>
    tpu.vector_store %arg7[%c0_36, %c1_37], %42 {strides = array<i32>} : memref<16x2xf32, #tpu.memory_space<vmem>>, vector<16x1xf32>,
    %c0_i32_38 = arith.constant 0 : i32
    %63 = arith.cmpi eq, %arg2, %c0_i32_38 : i32
    %64 = arith.extui %63 : i1 to i32
    %c0_i32_39 = arith.constant 0 : i32
    %65 = arith.cmpi ne, %64, %c0_i32_39 : i32
    scf.if %65 {
      %c0_40 = arith.constant 0 : index
      %c0_41 = arith.constant 0 : index
      %66 = vector.load %arg8[%c0_40, %c0_41] : memref<16x2xf32, #tpu.memory_space<vmem>>, vector<16x1xf32>
      %67 = tpu.reciprocal %66 : vector<16x1xf32> -> vector<16x1xf32>
      %c0_42 = arith.constant 0 : index
      %c0_43 = arith.constant 0 : index
      %68 = vector.load %arg9[%c0_42, %c0_43] : memref<16x32xf32, #tpu.memory_space<vmem>>, vector<16x16xf32>
      %69 = vector.broadcast %67 : vector<16x1xf32> to vector<16x16xf32>
      %70 = arith.mulf %68, %69 : vector<16x16xf32>
      %71 = arith.truncf %70 : vector<16x16xf32> to vector<16x16xbf16>
      %c0_44 = arith.constant 0 : index
      %c0_45 = arith.constant 0 : index
      %c0_46 = arith.constant 0 : index
      %72 = vector.load %arg6[%c0_44, %c0_45, %c0_46] : memref<1x16x32xbf16, #tpu.memory_space<vmem>>, vector<1x16x16xbf16>
      %73 = vector.shape_cast %72 : vector<1x16x16xbf16> to vector<16x16xbf16>
      %74 = vector.shape_cast %71 : vector<16x16xbf16> to vector<1x16x16xbf16>
      tpu.vector_store %arg6[%c0_44, %c0_45, %c0_46], %74 {strides = array<i32>} : memref<1x16x32xbf16, #tpu.memory_space<vmem>>, vector<1x16x16xbf16>,
      %c0_47 = arith.constant 0 : index
      %c1_48 = arith.constant 1 : index
      %75 = vector.load %arg8[%c0_47, %c1_48] : memref<16x2xf32, #tpu.memory_space<vmem>>, vector<16x1xf32>
      %76 = tpu.reciprocal %75 : vector<16x1xf32> -> vector<16x1xf32>
      %c0_49 = arith.constant 0 : index
      %c16_50 = arith.constant 16 : index
      %77 = vector.load %arg9[%c0_49, %c16_50] : memref<16x32xf32, #tpu.memory_space<vmem>>, vector<16x16xf32>
      %78 = vector.broadcast %76 : vector<16x1xf32> to vector<16x16xf32>
      %79 = arith.mulf %77, %78 : vector<16x16xf32>
      %80 = arith.truncf %79 : vector<16x16xf32> to vector<16x16xbf16>
      %c0_51 = arith.constant 0 : index
      %c0_52 = arith.constant 0 : index
      %c16_53 = arith.constant 16 : index
      %81 = vector.load %arg6[%c0_51, %c0_52, %c16_53] : memref<1x16x32xbf16, #tpu.memory_space<vmem>>, vector<1x16x16xbf16>
      %82 = vector.shape_cast %81 : vector<1x16x16xbf16> to vector<16x16xbf16>
      %83 = vector.shape_cast %80 : vector<16x16xbf16> to vector<1x16x16xbf16>
      tpu.vector_store %arg6[%c0_51, %c0_52, %c16_53], %83 {strides = array<i32>} : memref<1x16x32xbf16, #tpu.memory_space<vmem>>, vector<1x16x16xbf16>,
    } else {
    }
    return
  }
  func.func @transform_0(%arg0: i32, %arg1: i32, %arg2: i32) -> (i32, i32, i32) {
    %c0_i32 = arith.constant 0 : i32
    %c0_i32_0 = arith.constant 0 : i32
    return %arg0, %arg1, %c0_i32 : i32, i32, i32
  }
  func.func @transform_1(%arg0: i32, %arg1: i32, %arg2: i32) -> (i32, i32, i32) {
    %c0_i32 = arith.constant 0 : i32
    %c0_i32_0 = arith.constant 0 : i32
    return %arg0, %arg2, %c0_i32 : i32, i32, i32
  }
  func.func @transform_2(%arg0: i32, %arg1: i32, %arg2: i32) -> (i32, i32, i32) {
    %c0_i32 = arith.constant 0 : i32
    %c0_i32_0 = arith.constant 0 : i32
    return %arg0, %arg2, %c0_i32 : i32, i32, i32
  }
  func.func @transform_3(%arg0: i32, %arg1: i32, %arg2: i32) -> (i32, i32, i32) {
    %c0_i32 = arith.constant 0 : i32
    %c0_i32_0 = arith.constant 0 : i32
    return %arg0, %arg1, %c0_i32 : i32, i32, i32
  }
}

module attributes {stable_mosaic.version = 11 : i64} {
  func.func @_flash_kernel(%arg0: i32, %arg1: i32, %arg2: i32, %arg3: memref<1x16x32xbf16, #tpu.memory_space<vmem>>, %arg4: memref<1x8x32xbf16, #tpu.memory_space<vmem>>, %arg5: memref<1x8x32xbf16, #tpu.memory_space<vmem>>, %arg6: memref<1x16x32xbf16, #tpu.memory_space<vmem>>, %arg7: memref<16x2xf32, #tpu.memory_space<vmem>>, %arg8: memref<16x2xf32, #tpu.memory_space<vmem>>, %arg9: memref<16x32xf32, #tpu.memory_space<vmem>>) attributes {dimension_semantics = [#tpu.dimension_semantics<parallel>, #tpu.dimension_semantics<parallel>, #tpu.dimension_semantics<arbitrary>], iteration_bounds = array<i64: 2, 1, 1>, scalar_prefetch = 0 : i64, scratch_operands = 3 : i64, tpu.core_type = #tpu.core_type<tc>, window_params = [{transform_indices = @transform_0, window_bounds = array<i64: 1, 16, 32>}, {transform_indices = @transform_1, window_bounds = array<i64: 1, 8, 32>}, {transform_indices = @transform_2, window_bounds = array<i64: 1, 8, 32>}, {transform_indices = @transform_3, window_bounds = array<i64: 1, 16, 32>}]} {
    %c0_i32 = arith.constant 0 : i32
    %0 = arith.cmpi eq, %arg2, %c0_i32 : i32
    %1 = arith.extui %0 : i1 to i32
    %c0_i32_0 = arith.constant 0 : i32
    %2 = arith.cmpi ne, %1, %c0_i32_0 : i32
    scf.if %2 {
      %cst_40 = arith.constant 0xFF800000 : f32
      %66 = vector.broadcast %cst_40 : f32 to vector<16x2xf32>
      %c0_41 = arith.constant 0 : index
      %c0_42 = arith.constant 0 : index
      %67 = vector.load %arg7[%c0_41, %c0_42] : memref<16x2xf32, #tpu.memory_space<vmem>>, vector<16x2xf32>
      tpu.vector_store %arg7[%c0_41, %c0_42], %66 {strides = array<i32>} : memref<16x2xf32, #tpu.memory_space<vmem>>, vector<16x2xf32>,
      %cst_43 = arith.constant 0.000000e+00 : f32
      %68 = vector.broadcast %cst_43 : f32 to vector<16x2xf32>
      %c0_44 = arith.constant 0 : index
      %c0_45 = arith.constant 0 : index
      %69 = vector.load %arg8[%c0_44, %c0_45] : memref<16x2xf32, #tpu.memory_space<vmem>>, vector<16x2xf32>
      tpu.vector_store %arg8[%c0_44, %c0_45], %68 {strides = array<i32>} : memref<16x2xf32, #tpu.memory_space<vmem>>, vector<16x2xf32>,
      %cst_46 = arith.constant 0.000000e+00 : f32
      %70 = vector.broadcast %cst_46 : f32 to vector<16x32xf32>
      %c0_47 = arith.constant 0 : index
      %c0_48 = arith.constant 0 : index
      %71 = vector.load %arg9[%c0_47, %c0_48] : memref<16x32xf32, #tpu.memory_space<vmem>>, vector<16x32xf32>
      tpu.vector_store %arg9[%c0_47, %c0_48], %70 {strides = array<i32>} : memref<16x32xf32, #tpu.memory_space<vmem>>, vector<16x32xf32>,
    } else {
    }
    %c0 = arith.constant 0 : index
    %c0_1 = arith.constant 0 : index
    %c0_2 = arith.constant 0 : index
    %3 = vector.load %arg3[%c0, %c0_1, %c0_2] : memref<1x16x32xbf16, #tpu.memory_space<vmem>>, vector<1x16x32xbf16>
    %4 = vector.shape_cast %3 : vector<1x16x32xbf16> to vector<16x32xbf16>
    %c0_3 = arith.constant 0 : index
    %c0_4 = arith.constant 0 : index
    %c0_5 = arith.constant 0 : index
    %5 = vector.load %arg4[%c0_3, %c0_4, %c0_5] : memref<1x8x32xbf16, #tpu.memory_space<vmem>>, vector<1x8x32xbf16>
    %6 = vector.shape_cast %5 : vector<1x8x32xbf16> to vector<8x32xbf16>
    %c0_6 = arith.constant 0 : index
    %c0_7 = arith.constant 0 : index
    %c0_8 = arith.constant 0 : index
    %7 = vector.load %arg5[%c0_6, %c0_7, %c0_8] : memref<1x8x32xbf16, #tpu.memory_space<vmem>>, vector<1x8x32xbf16>
    %8 = vector.shape_cast %7 : vector<1x8x32xbf16> to vector<8x32xbf16>
    %9 = vector.extract_strided_slice %4 {offsets = [0, 0], sizes = [16, 16], strides = [1, 1]} : vector<16x32xbf16> to vector<16x16xbf16>
    %10 = vector.extract_strided_slice %6 {offsets = [0, 0], sizes = [8, 16], strides = [1, 1]} : vector<8x32xbf16> to vector<8x16xbf16>
    %cst = arith.constant dense<0.000000e+00> : vector<16x8xf32>
    %11 = tpu.matmul %9, %10, %cst {dimension_numbers = #tpu.dot_dimension_numbers<[1], [1], [0], [0], [0, 0, 1, 0], [], []>} : vector<16x16xbf16>, vector<8x16xbf16>, vector<16x8xf32> -> vector<16x8xf32>
    %c0_9 = arith.constant 0 : index
    %c0_10 = arith.constant 0 : index
    %12 = vector.load %arg7[%c0_9, %c0_10] : memref<16x2xf32, #tpu.memory_space<vmem>>, vector<16x1xf32>
    %cst_11 = arith.constant dense<0xFF800000> : vector<16xf32>
    %13 = vector.multi_reduction <maximumf>, %11, %cst_11 [1] : vector<16x8xf32> to vector<16xf32>
    %14 = vector.shape_cast %13 : vector<16xf32> to vector<16x1xf32>
    %15 = arith.maximumf %12, %14 : vector<16x1xf32>
    %16 = arith.subf %12, %15 : vector<16x1xf32>
    %17 = math.exp %16 : vector<16x1xf32>
    %18 = vector.broadcast %15 : vector<16x1xf32> to vector<16x8xf32>
    %19 = arith.subf %11, %18 : vector<16x8xf32>
    %20 = math.exp %19 : vector<16x8xf32>
    %c0_12 = arith.constant 0 : index
    %c0_13 = arith.constant 0 : index
    %21 = vector.load %arg8[%c0_12, %c0_13] : memref<16x2xf32, #tpu.memory_space<vmem>>, vector<16x1xf32>
    %22 = arith.mulf %17, %21 : vector<16x1xf32>
    %cst_14 = arith.constant dense<0.000000e+00> : vector<16xf32>
    %23 = vector.multi_reduction <add>, %20, %cst_14 [1] : vector<16x8xf32> to vector<16xf32>
    %24 = vector.shape_cast %23 : vector<16xf32> to vector<16x1xf32>
    %25 = arith.addf %22, %24 : vector<16x1xf32>
    %c0_15 = arith.constant 0 : index
    %c0_16 = arith.constant 0 : index
    %26 = vector.load %arg8[%c0_15, %c0_16] : memref<16x2xf32, #tpu.memory_space<vmem>>, vector<16x1xf32>
    tpu.vector_store %arg8[%c0_15, %c0_16], %25 {strides = array<i32>} : memref<16x2xf32, #tpu.memory_space<vmem>>, vector<16x1xf32>,
    %c0_17 = arith.constant 0 : index
    %c0_18 = arith.constant 0 : index
    %27 = vector.load %arg9[%c0_17, %c0_18] : memref<16x32xf32, #tpu.memory_space<vmem>>, vector<16x16xf32>
    %28 = vector.broadcast %17 : vector<16x1xf32> to vector<16x16xf32>
    %29 = arith.mulf %28, %27 : vector<16x16xf32>
    %30 = arith.truncf %20 : vector<16x8xf32> to vector<16x8xbf16>
    %31 = vector.extract_strided_slice %8 {offsets = [0, 0], sizes = [8, 16], strides = [1, 1]} : vector<8x32xbf16> to vector<8x16xbf16>
    %cst_19 = arith.constant dense<0.000000e+00> : vector<16x16xf32>
    %32 = tpu.matmul %30, %31, %cst_19 {dimension_numbers = #tpu.dot_dimension_numbers<[1], [0], [0], [1], [0, 0, 1, 1], [], []>} : vector<16x8xbf16>, vector<8x16xbf16>, vector<16x16xf32> -> vector<16x16xf32>
    %33 = arith.addf %29, %32 : vector<16x16xf32>
    %c0_20 = arith.constant 0 : index
    %c0_21 = arith.constant 0 : index
    %34 = vector.load %arg9[%c0_20, %c0_21] : memref<16x32xf32, #tpu.memory_space<vmem>>, vector<16x16xf32>
    tpu.vector_store %arg9[%c0_20, %c0_21], %33 {strides = array<i32>} : memref<16x32xf32, #tpu.memory_space<vmem>>, vector<16x16xf32>,
    %c0_22 = arith.constant 0 : index
    %c0_23 = arith.constant 0 : index
    %35 = vector.load %arg7[%c0_22, %c0_23] : memref<16x2xf32, #tpu.memory_space<vmem>>, vector<16x1xf32>
    tpu.vector_store %arg7[%c0_22, %c0_23], %15 {strides = array<i32>} : memref<16x2xf32, #tpu.memory_space<vmem>>, vector<16x1xf32>,
    %36 = vector.extract_strided_slice %4 {offsets = [0, 16], sizes = [16, 16], strides = [1, 1]} : vector<16x32xbf16> to vector<16x16xbf16>
    %37 = vector.extract_strided_slice %6 {offsets = [0, 16], sizes = [8, 16], strides = [1, 1]} : vector<8x32xbf16> to vector<8x16xbf16>
    %cst_24 = arith.constant dense<0.000000e+00> : vector<16x8xf32>
    %38 = tpu.matmul %36, %37, %cst_24 {dimension_numbers = #tpu.dot_dimension_numbers<[1], [1], [0], [0], [0, 0, 1, 0], [], []>} : vector<16x16xbf16>, vector<8x16xbf16>, vector<16x8xf32> -> vector<16x8xf32>
    %c0_25 = arith.constant 0 : index
    %c1 = arith.constant 1 : index
    %39 = vector.load %arg7[%c0_25, %c1] : memref<16x2xf32, #tpu.memory_space<vmem>>, vector<16x1xf32>
    %cst_26 = arith.constant dense<0xFF800000> : vector<16xf32>
    %40 = vector.multi_reduction <maximumf>, %38, %cst_26 [1] : vector<16x8xf32> to vector<16xf32>
    %41 = vector.shape_cast %40 : vector<16xf32> to vector<16x1xf32>
    %42 = arith.maximumf %39, %41 : vector<16x1xf32>
    %43 = arith.subf %39, %42 : vector<16x1xf32>
    %44 = math.exp %43 : vector<16x1xf32>
    %45 = vector.broadcast %42 : vector<16x1xf32> to vector<16x8xf32>
    %46 = arith.subf %38, %45 : vector<16x8xf32>
    %47 = math.exp %46 : vector<16x8xf32>
    %c0_27 = arith.constant 0 : index
    %c1_28 = arith.constant 1 : index
    %48 = vector.load %arg8[%c0_27, %c1_28] : memref<16x2xf32, #tpu.memory_space<vmem>>, vector<16x1xf32>
    %49 = arith.mulf %44, %48 : vector<16x1xf32>
    %cst_29 = arith.constant dense<0.000000e+00> : vector<16xf32>
    %50 = vector.multi_reduction <add>, %47, %cst_29 [1] : vector<16x8xf32> to vector<16xf32>
    %51 = vector.shape_cast %50 : vector<16xf32> to vector<16x1xf32>
    %52 = arith.addf %49, %51 : vector<16x1xf32>
    %c0_30 = arith.constant 0 : index
    %c1_31 = arith.constant 1 : index
    %53 = vector.load %arg8[%c0_30, %c1_31] : memref<16x2xf32, #tpu.memory_space<vmem>>, vector<16x1xf32>
    tpu.vector_store %arg8[%c0_30, %c1_31], %52 {strides = array<i32>} : memref<16x2xf32, #tpu.memory_space<vmem>>, vector<16x1xf32>,
    %c0_32 = arith.constant 0 : index
    %c16 = arith.constant 16 : index
    %54 = vector.load %arg9[%c0_32, %c16] : memref<16x32xf32, #tpu.memory_space<vmem>>, vector<16x16xf32>
    %55 = vector.broadcast %44 : vector<16x1xf32> to vector<16x16xf32>
    %56 = arith.mulf %55, %54 : vector<16x16xf32>
    %57 = arith.truncf %47 : vector<16x8xf32> to vector<16x8xbf16>
    %58 = vector.extract_strided_slice %8 {offsets = [0, 16], sizes = [8, 16], strides = [1, 1]} : vector<8x32xbf16> to vector<8x16xbf16>
    %cst_33 = arith.constant dense<0.000000e+00> : vector<16x16xf32>
    %59 = tpu.matmul %57, %58, %cst_33 {dimension_numbers = #tpu.dot_dimension_numbers<[1], [0], [0], [1], [0, 0, 1, 1], [], []>} : vector<16x8xbf16>, vector<8x16xbf16>, vector<16x16xf32> -> vector<16x16xf32>
    %60 = arith.addf %56, %59 : vector<16x16xf32>
    %c0_34 = arith.constant 0 : index
    %c16_35 = arith.constant 16 : index
    %61 = vector.load %arg9[%c0_34, %c16_35] : memref<16x32xf32, #tpu.memory_space<vmem>>, vector<16x16xf32>
    tpu.vector_store %arg9[%c0_34, %c16_35], %60 {strides = array<i32>} : memref<16x32xf32, #tpu.memory_space<vmem>>, vector<16x16xf32>,
    %c0_36 = arith.constant 0 : index
    %c1_37 = arith.constant 1 : index
    %62 = vector.load %arg7[%c0_36, %c1_37] : memref<16x2xf32, #tpu.memory_space<vmem>>, vector<16x1xf32>
    tpu.vector_store %arg7[%c0_36, %c1_37], %42 {strides = array<i32>} : memref<16x2xf32, #tpu.memory_space<vmem>>, vector<16x1xf32>,
    %c0_i32_38 = arith.constant 0 : i32
    %63 = arith.cmpi eq, %arg2, %c0_i32_38 : i32
    %64 = arith.extui %63 : i1 to i32
    %c0_i32_39 = arith.constant 0 : i32
    %65 = arith.cmpi ne, %64, %c0_i32_39 : i32
    scf.if %65 {
      %c0_40 = arith.constant 0 : index
      %c0_41 = arith.constant 0 : index
      %66 = vector.load %arg8[%c0_40, %c0_41] : memref<16x2xf32, #tpu.memory_space<vmem>>, vector<16x1xf32>
      %67 = tpu.reciprocal %66 : vector<16x1xf32> -> vector<16x1xf32>
      %c0_42 = arith.constant 0 : index
      %c0_43 = arith.constant 0 : index
      %68 = vector.load %arg9[%c0_42, %c0_43] : memref<16x32xf32, #tpu.memory_space<vmem>>, vector<16x16xf32>
      %69 = vector.broadcast %67 : vector<16x1xf32> to vector<16x16xf32>
      %70 = arith.mulf %68, %69 : vector<16x16xf32>
      %71 = arith.truncf %70 : vector<16x16xf32> to vector<16x16xbf16>
      %c0_44 = arith.constant 0 : index
      %c0_45 = arith.constant 0 : index
      %c0_46 = arith.constant 0 : index
      %72 = vector.load %arg6[%c0_44, %c0_45, %c0_46] : memref<1x16x32xbf16, #tpu.memory_space<vmem>>, vector<1x16x16xbf16>
      %73 = vector.shape_cast %72 : vector<1x16x16xbf16> to vector<16x16xbf16>
      %74 = vector.shape_cast %71 : vector<16x16xbf16> to vector<1x16x16xbf16>
      tpu.vector_store %arg6[%c0_44, %c0_45, %c0_46], %74 {strides = array<i32>} : memref<1x16x32xbf16, #tpu.memory_space<vmem>>, vector<1x16x16xbf16>,
      %c0_47 = arith.constant 0 : index
      %c1_48 = arith.constant 1 : index
      %75 = vector.load %arg8[%c0_47, %c1_48] : memref<16x2xf32, #tpu.memory_space<vmem>>, vector<16x1xf32>
      %76 = tpu.reciprocal %75 : vector<16x1xf32> -> vector<16x1xf32>
      %c0_49 = arith.constant 0 : index
      %c16_50 = arith.constant 16 : index
      %77 = vector.load %arg9[%c0_49, %c16_50] : memref<16x32xf32, #tpu.memory_space<vmem>>, vector<16x16xf32>
      %78 = vector.broadcast %76 : vector<16x1xf32> to vector<16x16xf32>
      %79 = arith.mulf %77, %78 : vector<16x16xf32>
      %80 = arith.truncf %79 : vector<16x16xf32> to vector<16x16xbf16>
      %c0_51 = arith.constant 0 : index
      %c0_52 = arith.constant 0 : index
      %c16_53 = arith.constant 16 : index
      %81 = vector.load %arg6[%c0_51, %c0_52, %c16_53] : memref<1x16x32xbf16, #tpu.memory_space<vmem>>, vector<1x16x16xbf16>
      %82 = vector.shape_cast %81 : vector<1x16x16xbf16> to vector<16x16xbf16>
      %83 = vector.shape_cast %80 : vector<16x16xbf16> to vector<1x16x16xbf16>
      tpu.vector_store %arg6[%c0_51, %c0_52, %c16_53], %83 {strides = array<i32>} : memref<1x16x32xbf16, #tpu.memory_space<vmem>>, vector<1x16x16xbf16>,
    } else {
    }
    return
  }
  func.func @transform_0(%arg0: i32, %arg1: i32, %arg2: i32) -> (i32, i32, i32) {
    %c0_i32 = arith.constant 0 : i32
    %c0_i32_0 = arith.constant 0 : i32
    return %arg0, %arg1, %c0_i32 : i32, i32, i32
  }
  func.func @transform_1(%arg0: i32, %arg1: i32, %arg2: i32) -> (i32, i32, i32) {
    %c0_i32 = arith.constant 0 : i32
    %c0_i32_0 = arith.constant 0 : i32
    return %arg0, %arg2, %c0_i32 : i32, i32, i32
  }
  func.func @transform_2(%arg0: i32, %arg1: i32, %arg2: i32) -> (i32, i32, i32) {
    %c0_i32 = arith.constant 0 : i32
    %c0_i32_0 = arith.constant 0 : i32
    return %arg0, %arg2, %c0_i32 : i32, i32, i32
  }
  func.func @transform_3(%arg0: i32, %arg1: i32, %arg2: i32) -> (i32, i32, i32) {
    %c0_i32 = arith.constant 0 : i32
    %c0_i32_0 = arith.constant 0 : i32
    return %arg0, %arg1, %c0_i32 : i32, i32, i32
  }
}

module attributes {stable_mosaic.version = 11 : i64} {
  func.func @_attn2_out_ff_kernel(%arg0: i32, %arg1: i32, %arg2: i32, %arg3: memref<1x16x32xbf16, #tpu.memory_space<vmem>>, %arg4: memref<32x32xbf16, #tpu.memory_space<vmem>>, %arg5: memref<1x32xf32, #tpu.memory_space<vmem>>, %arg6: memref<1x16x32xf32, #tpu.memory_space<vmem>>, %arg7: memref<1x1x32xf32, #tpu.memory_space<vmem>>, %arg8: memref<1x1x32xf32, #tpu.memory_space<vmem>>, %arg9: memref<1x1x32xf32, #tpu.memory_space<vmem>>, %arg10: memref<32x128xbf16, #tpu.memory_space<vmem>>, %arg11: memref<1x128xf32, #tpu.memory_space<vmem>>, %arg12: memref<128x32xbf16, #tpu.memory_space<vmem>>, %arg13: memref<1x32xf32, #tpu.memory_space<vmem>>, %arg14: memref<1x16x32xf32, #tpu.memory_space<vmem>>, %arg15: memref<16x32xf32, #tpu.memory_space<vmem>>, %arg16: memref<16x32xbf16, #tpu.memory_space<vmem>>, %arg17: memref<16x32xf32, #tpu.memory_space<vmem>>) attributes {dimension_semantics = [#tpu.dimension_semantics<parallel>, #tpu.dimension_semantics<parallel>, #tpu.dimension_semantics<arbitrary>], iteration_bounds = array<i64: 2, 1, 1>, scalar_prefetch = 0 : i64, scratch_operands = 3 : i64, tpu.core_type = #tpu.core_type<tc>, window_params = [{transform_indices = @transform_0, window_bounds = array<i64: 1, 16, 32>}, {pipeline_mode = #tpu.pipeline_mode<synchronous>, transform_indices = @transform_1, window_bounds = array<i64: 32, 32>}, {pipeline_mode = #tpu.pipeline_mode<synchronous>, transform_indices = @transform_2, window_bounds = array<i64: 1, 32>}, {transform_indices = @transform_3, window_bounds = array<i64: 1, 16, 32>}, {transform_indices = @transform_4, window_bounds = array<i64: 1, 1, 32>}, {transform_indices = @transform_5, window_bounds = array<i64: 1, 1, 32>}, {transform_indices = @transform_6, window_bounds = array<i64: 1, 1, 32>}, {transform_indices = @transform_7, window_bounds = array<i64: 32, 128>}, {transform_indices = @transform_8, window_bounds = array<i64: 1, 128>}, {transform_indices = @transform_9, window_bounds = array<i64: 128, 32>}, {pipeline_mode = #tpu.pipeline_mode<synchronous>, transform_indices = @transform_10, window_bounds = array<i64: 1, 32>}, {transform_indices = @transform_11, window_bounds = array<i64: 1, 16, 32>}]} {
    %c0_i32 = arith.constant 0 : i32
    %0 = arith.cmpi eq, %arg2, %c0_i32 : i32
    %1 = arith.extui %0 : i1 to i32
    %c0_i32_0 = arith.constant 0 : i32
    %2 = arith.cmpi ne, %1, %c0_i32_0 : i32
    scf.if %2 {
      %c0_19 = arith.constant 0 : index
      %c0_20 = arith.constant 0 : index
      %c0_21 = arith.constant 0 : index
      %31 = vector.load %arg3[%c0_19, %c0_20, %c0_21] : memref<1x16x32xbf16, #tpu.memory_space<vmem>>, vector<1x16x32xbf16>
      %32 = vector.shape_cast %31 : vector<1x16x32xbf16> to vector<16x32xbf16>
      %c0_22 = arith.constant 0 : index
      %c0_23 = arith.constant 0 : index
      %33 = vector.load %arg4[%c0_22, %c0_23] : memref<32x32xbf16, #tpu.memory_space<vmem>>, vector<32x32xbf16>
      %cst_24 = arith.constant dense<0.000000e+00> : vector<16x32xf32>
      %34 = tpu.matmul %32, %33, %cst_24 {dimension_numbers = #tpu.dot_dimension_numbers<[1], [0], [0], [1], [0, 0, 1, 1], [], []>} : vector<16x32xbf16>, vector<32x32xbf16>, vector<16x32xf32> -> vector<16x32xf32>
      %c0_25 = arith.constant 0 : index
      %c0_26 = arith.constant 0 : index
      %35 = vector.load %arg5[%c0_25, %c0_26] : memref<1x32xf32, #tpu.memory_space<vmem>>, vector<1x32xf32>
      %36 = vector.broadcast %35 : vector<1x32xf32> to vector<16x32xf32>
      %37 = arith.addf %34, %36 : vector<16x32xf32>
      %c0_27 = arith.constant 0 : index
      %c0_28 = arith.constant 0 : index
      %c0_29 = arith.constant 0 : index
      %38 = vector.load %arg6[%c0_27, %c0_28, %c0_29] : memref<1x16x32xf32, #tpu.memory_space<vmem>>, vector<1x16x32xf32>
      %39 = vector.shape_cast %38 : vector<1x16x32xf32> to vector<16x32xf32>
      %40 = arith.addf %39, %37 : vector<16x32xf32>
      %c0_30 = arith.constant 0 : index
      %c0_31 = arith.constant 0 : index
      %41 = vector.load %arg15[%c0_30, %c0_31] : memref<16x32xf32, #tpu.memory_space<vmem>>, vector<16x32xf32>
      tpu.vector_store %arg15[%c0_30, %c0_31], %40 {strides = array<i32>} : memref<16x32xf32, #tpu.memory_space<vmem>>, vector<16x32xf32>,
      %42 = arith.mulf %40, %40 : vector<16x32xf32>
      %cst_32 = arith.constant dense<0.000000e+00> : vector<16xf32>
      %43 = vector.multi_reduction <add>, %42, %cst_32 [1] : vector<16x32xf32> to vector<16xf32>
      %44 = vector.shape_cast %43 : vector<16xf32> to vector<16x1xf32>
      %cst_33 = arith.constant 3.200000e+01 : f32
      %45 = vector.broadcast %cst_33 : f32 to vector<16x1xf32>
      %46 = arith.divf %44, %45 : vector<16x1xf32>
      %cst_34 = arith.constant 9.99999997E-7 : f32
      %47 = vector.broadcast %cst_34 : f32 to vector<16x1xf32>
      %48 = arith.addf %46, %47 : vector<16x1xf32>
      %49 = math.rsqrt %48 : vector<16x1xf32>
      %50 = vector.broadcast %49 : vector<16x1xf32> to vector<16x32xf32>
      %51 = arith.mulf %40, %50 : vector<16x32xf32>
      %c0_35 = arith.constant 0 : index
      %c0_36 = arith.constant 0 : index
      %c0_37 = arith.constant 0 : index
      %52 = vector.load %arg7[%c0_35, %c0_36, %c0_37] : memref<1x1x32xf32, #tpu.memory_space<vmem>>, vector<1x1x32xf32>
      %53 = vector.shape_cast %52 : vector<1x1x32xf32> to vector<1x32xf32>
      %cst_38 = arith.constant 1.000000e+00 : f32
      %54 = vector.broadcast %cst_38 : f32 to vector<1x32xf32>
      %55 = arith.addf %54, %53 : vector<1x32xf32>
      %56 = vector.broadcast %55 : vector<1x32xf32> to vector<16x32xf32>
      %57 = arith.mulf %51, %56 : vector<16x32xf32>
      %c0_39 = arith.constant 0 : index
      %c0_40 = arith.constant 0 : index
      %c0_41 = arith.constant 0 : index
      %58 = vector.load %arg8[%c0_39, %c0_40, %c0_41] : memref<1x1x32xf32, #tpu.memory_space<vmem>>, vector<1x1x32xf32>
      %59 = vector.shape_cast %58 : vector<1x1x32xf32> to vector<1x32xf32>
      %60 = vector.broadcast %59 : vector<1x32xf32> to vector<16x32xf32>
      %61 = arith.addf %57, %60 : vector<16x32xf32>
      %62 = arith.truncf %61 : vector<16x32xf32> to vector<16x32xbf16>
      %c0_42 = arith.constant 0 : index
      %c0_43 = arith.constant 0 : index
      %63 = vector.load %arg16[%c0_42, %c0_43] : memref<16x32xbf16, #tpu.memory_space<vmem>>, vector<16x32xbf16>
      tpu.vector_store %arg16[%c0_42, %c0_43], %62 {strides = array<i32>} : memref<16x32xbf16, #tpu.memory_space<vmem>>, vector<16x32xbf16>,
      %cst_44 = arith.constant 0.000000e+00 : f32
      %64 = vector.broadcast %cst_44 : f32 to vector<16x32xf32>
      %c0_45 = arith.constant 0 : index
      %c0_46 = arith.constant 0 : index
      %65 = vector.load %arg17[%c0_45, %c0_46] : memref<16x32xf32, #tpu.memory_space<vmem>>, vector<16x32xf32>
      tpu.vector_store %arg17[%c0_45, %c0_46], %64 {strides = array<i32>} : memref<16x32xf32, #tpu.memory_space<vmem>>, vector<16x32xf32>,
    } else {
    }
    %c0 = arith.constant 0 : index
    %c0_1 = arith.constant 0 : index
    %3 = vector.load %arg16[%c0, %c0_1] : memref<16x32xbf16, #tpu.memory_space<vmem>>, vector<16x32xbf16>
    %c0_2 = arith.constant 0 : index
    %c0_3 = arith.constant 0 : index
    %4 = vector.load %arg10[%c0_2, %c0_3] : memref<32x128xbf16, #tpu.memory_space<vmem>>, vector<32x128xbf16>
    %cst = arith.constant dense<0.000000e+00> : vector<16x128xf32>
    %5 = tpu.matmul %3, %4, %cst {dimension_numbers = #tpu.dot_dimension_numbers<[1], [0], [0], [1], [0, 0, 1, 1], [], []>} : vector<16x32xbf16>, vector<32x128xbf16>, vector<16x128xf32> -> vector<16x128xf32>
    %c0_4 = arith.constant 0 : index
    %c0_5 = arith.constant 0 : index
    %6 = vector.load %arg11[%c0_4, %c0_5] : memref<1x128xf32, #tpu.memory_space<vmem>>, vector<1x128xf32>
    %7 = vector.broadcast %6 : vector<1x128xf32> to vector<16x128xf32>
    %8 = arith.addf %5, %7 : vector<16x128xf32>
    %cst_6 = arith.constant 5.000000e-01 : f32
    %9 = vector.broadcast %cst_6 : f32 to vector<16x128xf32>
    %10 = arith.mulf %9, %8 : vector<16x128xf32>
    %cst_7 = arith.constant 4.471500e-02 : f32
    %11 = vector.broadcast %cst_7 : f32 to vector<16x128xf32>
    %12 = arith.mulf %11, %8 : vector<16x128xf32>
    %13 = arith.mulf %12, %8 : vector<16x128xf32>
    %14 = arith.mulf %13, %8 : vector<16x128xf32>
    %15 = arith.addf %8, %14 : vector<16x128xf32>
    %cst_8 = arith.constant 0.797884583 : f32
    %16 = vector.broadcast %cst_8 : f32 to vector<16x128xf32>
    %17 = arith.mulf %16, %15 : vector<16x128xf32>
    %18 = math.tanh %17 : vector<16x128xf32>
    %cst_9 = arith.constant 1.000000e+00 : f32
    %19 = vector.broadcast %cst_9 : f32 to vector<16x128xf32>
    %20 = arith.addf %19, %18 : vector<16x128xf32>
    %21 = arith.mulf %10, %20 : vector<16x128xf32>
    %c0_10 = arith.constant 0 : index
    %c0_11 = arith.constant 0 : index
    %22 = vector.load %arg17[%c0_10, %c0_11] : memref<16x32xf32, #tpu.memory_space<vmem>>, vector<16x32xf32>
    %23 = arith.truncf %21 : vector<16x128xf32> to vector<16x128xbf16>
    %c0_12 = arith.constant 0 : index
    %c0_13 = arith.constant 0 : index
    %24 = vector.load %arg12[%c0_12, %c0_13] : memref<128x32xbf16, #tpu.memory_space<vmem>>, vector<128x32xbf16>
    %cst_14 = arith.constant dense<0.000000e+00> : vector<16x32xf32>
    %25 = tpu.matmul %23, %24, %cst_14 {dimension_numbers = #tpu.dot_dimension_numbers<[1], [0], [0], [1], [0, 0, 1, 1], [], []>} : vector<16x128xbf16>, vector<128x32xbf16>, vector<16x32xf32> -> vector<16x32xf32>
    %26 = arith.addf %22, %25 : vector<16x32xf32>
    %c0_15 = arith.constant 0 : index
    %c0_16 = arith.constant 0 : index
    %27 = vector.load %arg17[%c0_15, %c0_16] : memref<16x32xf32, #tpu.memory_space<vmem>>, vector<16x32xf32>
    tpu.vector_store %arg17[%c0_15, %c0_16], %26 {strides = array<i32>} : memref<16x32xf32, #tpu.memory_space<vmem>>, vector<16x32xf32>,
    %c0_i32_17 = arith.constant 0 : i32
    %28 = arith.cmpi eq, %arg2, %c0_i32_17 : i32
    %29 = arith.extui %28 : i1 to i32
    %c0_i32_18 = arith.constant 0 : i32
    %30 = arith.cmpi ne, %29, %c0_i32_18 : i32
    scf.if %30 {
      %c0_19 = arith.constant 0 : index
      %c0_20 = arith.constant 0 : index
      %31 = vector.load %arg15[%c0_19, %c0_20] : memref<16x32xf32, #tpu.memory_space<vmem>>, vector<16x32xf32>
      %c0_21 = arith.constant 0 : index
      %c0_22 = arith.constant 0 : index
      %32 = vector.load %arg17[%c0_21, %c0_22] : memref<16x32xf32, #tpu.memory_space<vmem>>, vector<16x32xf32>
      %c0_23 = arith.constant 0 : index
      %c0_24 = arith.constant 0 : index
      %33 = vector.load %arg13[%c0_23, %c0_24] : memref<1x32xf32, #tpu.memory_space<vmem>>, vector<1x32xf32>
      %34 = vector.broadcast %33 : vector<1x32xf32> to vector<16x32xf32>
      %35 = arith.addf %32, %34 : vector<16x32xf32>
      %c0_25 = arith.constant 0 : index
      %c0_26 = arith.constant 0 : index
      %c0_27 = arith.constant 0 : index
      %36 = vector.load %arg9[%c0_25, %c0_26, %c0_27] : memref<1x1x32xf32, #tpu.memory_space<vmem>>, vector<1x1x32xf32>
      %37 = vector.shape_cast %36 : vector<1x1x32xf32> to vector<1x32xf32>
      %38 = vector.broadcast %37 : vector<1x32xf32> to vector<16x32xf32>
      %39 = arith.mulf %35, %38 : vector<16x32xf32>
      %40 = arith.addf %31, %39 : vector<16x32xf32>
      %c0_28 = arith.constant 0 : index
      %c0_29 = arith.constant 0 : index
      %c0_30 = arith.constant 0 : index
      %41 = vector.load %arg14[%c0_28, %c0_29, %c0_30] : memref<1x16x32xf32, #tpu.memory_space<vmem>>, vector<1x16x32xf32>
      %42 = vector.shape_cast %41 : vector<1x16x32xf32> to vector<16x32xf32>
      %43 = vector.shape_cast %40 : vector<16x32xf32> to vector<1x16x32xf32>
      tpu.vector_store %arg14[%c0_28, %c0_29, %c0_30], %43 {strides = array<i32>} : memref<1x16x32xf32, #tpu.memory_space<vmem>>, vector<1x16x32xf32>,
    } else {
    }
    return
  }
  func.func @transform_0(%arg0: i32, %arg1: i32, %arg2: i32) -> (i32, i32, i32) {
    %c0_i32 = arith.constant 0 : i32
    %c0_i32_0 = arith.constant 0 : i32
    return %arg0, %arg1, %c0_i32 : i32, i32, i32
  }
  func.func @transform_1(%arg0: i32, %arg1: i32, %arg2: i32) -> (i32, i32) {
    %c0_i32 = arith.constant 0 : i32
    %c0_i32_0 = arith.constant 0 : i32
    %c0_i32_1 = arith.constant 0 : i32
    return %c0_i32, %c0_i32_0 : i32, i32
  }
  func.func @transform_2(%arg0: i32, %arg1: i32, %arg2: i32) -> (i32, i32) {
    %c0_i32 = arith.constant 0 : i32
    %c0_i32_0 = arith.constant 0 : i32
    %c0_i32_1 = arith.constant 0 : i32
    return %c0_i32, %c0_i32_0 : i32, i32
  }
  func.func @transform_3(%arg0: i32, %arg1: i32, %arg2: i32) -> (i32, i32, i32) {
    %c0_i32 = arith.constant 0 : i32
    %c0_i32_0 = arith.constant 0 : i32
    return %arg0, %arg1, %c0_i32 : i32, i32, i32
  }
  func.func @transform_4(%arg0: i32, %arg1: i32, %arg2: i32) -> (i32, i32, i32) {
    %c0_i32 = arith.constant 0 : i32
    %c0_i32_0 = arith.constant 0 : i32
    %c0_i32_1 = arith.constant 0 : i32
    return %arg0, %c0_i32, %c0_i32_0 : i32, i32, i32
  }
  func.func @transform_5(%arg0: i32, %arg1: i32, %arg2: i32) -> (i32, i32, i32) {
    %c0_i32 = arith.constant 0 : i32
    %c0_i32_0 = arith.constant 0 : i32
    %c0_i32_1 = arith.constant 0 : i32
    return %arg0, %c0_i32, %c0_i32_0 : i32, i32, i32
  }
  func.func @transform_6(%arg0: i32, %arg1: i32, %arg2: i32) -> (i32, i32, i32) {
    %c0_i32 = arith.constant 0 : i32
    %c0_i32_0 = arith.constant 0 : i32
    %c0_i32_1 = arith.constant 0 : i32
    return %arg0, %c0_i32, %c0_i32_0 : i32, i32, i32
  }
  func.func @transform_7(%arg0: i32, %arg1: i32, %arg2: i32) -> (i32, i32) {
    %c0_i32 = arith.constant 0 : i32
    %c0_i32_0 = arith.constant 0 : i32
    return %c0_i32, %arg2 : i32, i32
  }
  func.func @transform_8(%arg0: i32, %arg1: i32, %arg2: i32) -> (i32, i32) {
    %c0_i32 = arith.constant 0 : i32
    %c0_i32_0 = arith.constant 0 : i32
    return %c0_i32, %arg2 : i32, i32
  }
  func.func @transform_9(%arg0: i32, %arg1: i32, %arg2: i32) -> (i32, i32) {
    %c0_i32 = arith.constant 0 : i32
    %c0_i32_0 = arith.constant 0 : i32
    return %arg2, %c0_i32 : i32, i32
  }
  func.func @transform_10(%arg0: i32, %arg1: i32, %arg2: i32) -> (i32, i32) {
    %c0_i32 = arith.constant 0 : i32
    %c0_i32_0 = arith.constant 0 : i32
    %c0_i32_1 = arith.constant 0 : i32
    return %c0_i32, %c0_i32_0 : i32, i32
  }
  func.func @transform_11(%arg0: i32, %arg1: i32, %arg2: i32) -> (i32, i32, i32) {
    %c0_i32 = arith.constant 0 : i32
    %c0_i32_0 = arith.constant 0 : i32
    return %arg0, %arg1, %c0_i32 : i32, i32, i32
  }
}

</mosaic_0001>

<llo_original>
// kernel: ltx_block_forward.9
$region0: #{ltx_block_forward.9}
  #allocation0 [shape = 'u32[]', space=smem, size = 0x4, offset = 0x4, fixed_abs, tag = 'smem constant byte address 0x4 - core index']
  #allocation1 [shape = 'u32[144,128]{1,0:T(1,128)}', space=vmem, size = 0x12000, scoped, tag = 'internal scratch']
  %s0 = inlined_call_operand.vmem [shape: f32[2,8,16], index: 0, kind: input, shape index: {}]
  %s1 = inlined_call_operand.vmem [shape: bf16[16,64], index: 1, kind: input, shape index: {}]
  %s2 = inlined_call_operand.vmem [shape: f32[1,64], index: 2, kind: input, shape index: {}]
  %s3 = inlined_call_operand.vmem [shape: f32[1,32], index: 3, kind: input, shape index: {}]
  %s4 = inlined_call_operand.vmem [shape: bf16[2,8,32], index: 4, kind: output, shape index: {0}]
  %s5 = inlined_call_operand.vmem [shape: bf16[2,8,32], index: 5, kind: output, shape index: {1}]
  %6 = xla_tuple %s4, %s5
  %s7 = sld [smem:[#allocation0]]
  $region57: #{ltx_block_forward.9} parent=0
    _
  %s9 = ssub.s32 1, %s7
  %s10 = scalar_select 0, %s9, %s7
  loop: start=0, step=1, limit=4
  $region2: #{ltx_block_forward.9} parent=0 // loop_pre_header
    _
  $region3: #{ltx_block_forward.9} parent=0 // loop_header
    %s12 = sphi 0, %s16
    %p13 = scmp.ge.s32.totalorder %s12, 4
    %s19 = sphi 0, %s31
    %s20 = sphi 0, %s27
    %s21 = sphi 0, %s19
    %s22 = sphi 0, %s20
    %s23 = sphi 0, %s21
    %s24 = sphi 0, %s22
    %s36 = sphi 0, %s38
    %s39 = sphi 0, %s36
    %s40 = sphi 0, %s39
    %s56 = sphi 0, %s40
    %s60 = sphi 0, %s60
    %s62 = sphi 0, %s60
    %s63 = sphi 0, %s62
    %s77 = sphi 0, %s63
    %s81 = sphi 0, %s81
    %s83 = sphi 0, %s81
    %s84 = sphi 0, %s83
    %s98 = sphi 0, %s84
    %s102 = sphi 0, %s102
    %s104 = sphi 0, %s102
    %s105 = sphi 0, %s104
    %s119 = sphi 0, %s105
    %s127 = sphi 0, %s129
    %s130 = sphi 0, %s127
    %s131 = sphi 0, %s130
    %s147 = sphi 0, %s131
    %s155 = sphi 0, %s157
    %s158 = sphi 0, %s155
    %s159 = sphi 0, %s158
    %s175 = sphi 0, %s159
  $region4: #{ltx_block_forward.9} parent=0 // loop_header_branch
    %15 = sbr.rel (%p13) target = $region8
  $region5: #{ltx_block_forward.9} parent=0 // loop_body
    %s17 = ssub.s32 %s12, 1
    %s18 = ssub.s32 %s12, 2
    %s25 = sadd.s32 1, %s20
    %p26 = scmp.ge.s32.totalorder %s25, 1
    %s27 = scalar_select %p26, 0, %s25
    %s28 = sadd.s32 1, %s19
    %s29 = scalar_select %p26, %s28, %s19
    %p30 = scmp.ge.s32.totalorder %s29, 2
    %s31 = scalar_select %p30, 0, %s29
    %s32 = ssub.s32 %s19, %s31
    %s33 = ssub.s32 %s20, %s27
    %s34 = sor.u32 %s32, %s33
    %p35 = scmp.eq.s32.totalorder %s34, 0
    %s37 = sadd.s32 %s36, 1
    %s38 = scalar_select %p35, %s36, %s37
    %p41 = pneg %p35
    %p42 = scmp.eq.s32.totalorder %s12, 1
    %p43 = por %p41, %p42
    %p44 = scmp.ne.s32.totalorder %s36, %s39
    %p45 = scmp.eq.s32.totalorder %s12, 0
    %p46 = por %p44, %p45
    %p47 = scmp.ne.s32.totalorder %s36, %s39
    %p48 = scmp.eq.s32.totalorder %s17, 1
    %p49 = por %p47, %p48
    %p50 = scmp.ne.s32.totalorder %s39, %s40
    %p51 = scmp.eq.s32.totalorder %s17, 0
    %p52 = por %p50, %p51
    %p53 = scmp.ne.s32.totalorder %s39, %s40
    %p54 = scmp.eq.s32.totalorder %s18, 1
    %p55 = por %p53, %p54
    %p57 = scmp.ne.s32.totalorder %s40, %s56
    %p58 = scmp.eq.s32.totalorder %s18, 0
    %p59 = por %p57, %p58
    %s61 = sadd.s32 %s60, 1
    %p64 = scmp.eq.s32.totalorder %s12, 1
    %p65 = scmp.ne.s32.totalorder %s60, %s62
    %p66 = scmp.eq.s32.totalorder %s12, 0
    %p67 = por %p65, %p66
    %p68 = scmp.ne.s32.totalorder %s60, %s62
    %p69 = scmp.eq.s32.totalorder %s17, 1
    %p70 = por %p68, %p69
    %p71 = scmp.ne.s32.totalorder %s62, %s63
    %p72 = scmp.eq.s32.totalorder %s17, 0
    %p73 = por %p71, %p72
    %p74 = scmp.ne.s32.totalorder %s62, %s63
    %p75 = scmp.eq.s32.totalorder %s18, 1
    %p76 = por %p74, %p75
    %p78 = scmp.ne.s32.totalorder %s63, %s77
    %p79 = scmp.eq.s32.totalorder %s18, 0
    %p80 = por %p78, %p79
    %s82 = sadd.s32 %s81, 1
    %p85 = scmp.eq.s32.totalorder %s12, 1
    %p86 = scmp.ne.s32.totalorder %s81, %s83
    %p87 = scmp.eq.s32.totalorder %s12, 0
    %p88 = por %p86, %p87
    %p89 = scmp.ne.s32.totalorder %s81, %s83
    %p90 = scmp.eq.s32.totalorder %s17, 1
    %p91 = por %p89, %p90
    %p92 = scmp.ne.s32.totalorder %s83, %s84
    %p93 = scmp.eq.s32.totalorder %s17, 0
    %p94 = por %p92, %p93
    %p95 = scmp.ne.s32.totalorder %s83, %s84
    %p96 = scmp.eq.s32.totalorder %s18, 1
    %p97 = por %p95, %p96
    %p99 = scmp.ne.s32.totalorder %s84, %s98
    %p100 = scmp.eq.s32.totalorder %s18, 0
    %p101 = por %p99, %p100
    %s103 = sadd.s32 %s102, 1
    %p106 = scmp.eq.s32.totalorder %s12, 1
    %p107 = scmp.ne.s32.totalorder %s102, %s104
    %p108 = scmp.eq.s32.totalorder %s12, 0
    %p109 = por %p107, %p108
    %p110 = scmp.ne.s32.totalorder %s102, %s104
    %p111 = scmp.eq.s32.totalorder %s17, 1
    %p112 = por %p110, %p111
    %p113 = scmp.ne.s32.totalorder %s104, %s105
    %p114 = scmp.eq.s32.totalorder %s17, 0
    %p115 = por %p113, %p114
    %p116 = scmp.ne.s32.totalorder %s104, %s105
    %p117 = scmp.eq.s32.totalorder %s18, 1
    %p118 = por %p116, %p117
    %p120 = scmp.ne.s32.totalorder %s105, %s119
    %p121 = scmp.eq.s32.totalorder %s18, 0
    %p122 = por %p120, %p121
    %s123 = ssub.s32 %s19, %s31
    %s124 = ssub.s32 %s20, %s27
    %s125 = sor.u32 %s123, %s124
    %p126 = scmp.eq.s32.totalorder %s125, 0
    %s128 = sadd.s32 %s127, 1
    %s129 = scalar_select %p126, %s127, %s128
    %p132 = pneg %p126
    %p133 = scmp.eq.s32.totalorder %s12, 1
    %p134 = por %p132, %p133
    %p135 = scmp.ne.s32.totalorder %s127, %s130
    %p136 = scmp.eq.s32.totalorder %s12, 0
    %p137 = por %p135, %p136
    %p138 = scmp.ne.s32.totalorder %s127, %s130
    %p139 = scmp.eq.s32.totalorder %s17, 1
    %p140 = por %p138, %p139
    %p141 = scmp.ne.s32.totalorder %s130, %s131
    %p142 = scmp.eq.s32.totalorder %s17, 0
    %p143 = por %p141, %p142
    %p144 = scmp.ne.s32.totalorder %s130, %s131
    %p145 = scmp.eq.s32.totalorder %s18, 1
    %p146 = por %p144, %p145
    %p148 = scmp.ne.s32.totalorder %s131, %s147
    %p149 = scmp.eq.s32.totalorder %s18, 0
    %p150 = por %p148, %p149
    %s151 = ssub.s32 %s19, %s31
    %s152 = ssub.s32 %s20, %s27
    %s153 = sor.u32 %s151, %s152
    %p154 = scmp.eq.s32.totalorder %s153, 0
    %s156 = sadd.s32 %s155, 1
    %s157 = scalar_select %p154, %s155, %s156
    %p160 = pneg %p154
    %p161 = scmp.eq.s32.totalorder %s12, 1
    %p162 = por %p160, %p161
    %p163 = scmp.ne.s32.totalorder %s155, %s158
    %p164 = scmp.eq.s32.totalorder %s12, 0
    %p165 = por %p163, %p164
    %p166 = scmp.ne.s32.totalorder %s155, %s158
    %p167 = scmp.eq.s32.totalorder %s17, 1
    %p168 = por %p166, %p167
    %p169 = scmp.ne.s32.totalorder %s158, %s159
    %p170 = scmp.eq.s32.totalorder %s17, 0
    %p171 = por %p169, %p170
    %p172 = scmp.ne.s32.totalorder %s158, %s159
    %p173 = scmp.eq.s32.totalorder %s18, 1
    %p174 = por %p172, %p173
    %p176 = scmp.ne.s32.totalorder %s159, %s175
    %p177 = scmp.eq.s32.totalorder %s18, 0
    %p178 = por %p176, %p177
    %p179 = scmp.le.s32.totalorder 1, %s12
    %p180 = scmp.lt.s32.totalorder %s12, 3
    %p181 = pnand %p179, %p180
    %p182 = pneg %p181
    // Predicated region
    $region9: #{ltx_block_forward.9} parent=5 // pred_check
      _
    $region10: #{ltx_block_forward.9} parent=5 // pred_check_branch
      %184 = sbr.rel (%p181) target = $region12
    $region11: #{ltx_block_forward.9} parent=5 // pred_region
      %s185 = ssub.s32 %s12, 1
      // Predicated region
      $region13: #{ltx_block_forward.9} parent=11 // pred_check
        %p186 = pneg %p73
      $region14: #{ltx_block_forward.9} parent=11 // pred_check_branch
        %188 = sbr.rel (%p186) target = $region16
      $region15: #{ltx_block_forward.9} parent=11 // pred_region
        _
      $region16: #{ltx_block_forward.9} parent=11 // pred_fallthru
        _
      // Predicated region
      $region17: #{ltx_block_forward.9} parent=11 // pred_check
        %p189 = pneg %p94
      $region18: #{ltx_block_forward.9} parent=11 // pred_check_branch
        %191 = sbr.rel (%p189) target = $region20
      $region19: #{ltx_block_forward.9} parent=11 // pred_region
        _
      $region20: #{ltx_block_forward.9} parent=11 // pred_fallthru
        _
      // Predicated region
      $region21: #{ltx_block_forward.9} parent=11 // pred_check
        %p192 = pneg %p115
      $region22: #{ltx_block_forward.9} parent=11 // pred_check_branch
        %194 = sbr.rel (%p192) target = $region24
      $region23: #{ltx_block_forward.9} parent=11 // pred_region
        _
      $region24: #{ltx_block_forward.9} parent=11 // pred_fallthru
        _
    $region12: #{ltx_block_forward.9} parent=5 // pred_fallthru
      _
    %p195 = scmp.lt.s32.totalorder %s12, 2
    // Predicated region
    $region25: #{ltx_block_forward.9} parent=5 // pred_check
      %p196 = pneg %p195
    $region26: #{ltx_block_forward.9} parent=5 // pred_check_branch
      %198 = sbr.rel (%p196) target = $region28
    $region27: #{ltx_block_forward.9} parent=5 // pred_region
      // Predicated region
      $region29: #{ltx_block_forward.9} parent=27 // pred_check
        %p199 = pneg %p46
      $region30: #{ltx_block_forward.9} parent=27 // pred_check_branch
        %201 = sbr.rel (%p199) target = $region32
      $region31: #{ltx_block_forward.9} parent=27 // pred_region
        %p202 = scmp.lt.s32.totalorder %s19, 1
        %s203 = scalar_select %p202, %s19, 1
        %p204 = scmp.lt.s32.totalorder %s20, 0
        %s205 = scalar_select %p204, %s20, 0
        %s206 = sadd.s32 %s205, %s203
        %s207 = smul.addr %s206, 8
        %s208 = scalar_lea.vmem %s0, %s207
      $region32: #{ltx_block_forward.9} parent=27 // pred_fallthru
        _
    $region28: #{ltx_block_forward.9} parent=5 // pred_fallthru
      _
    %p209 = scmp.le.s32.totalorder 1, %s12
    %p210 = scmp.lt.s32.totalorder %s12, 3
    %p211 = pnand %p209, %p210
    %p212 = pneg %p211
    // Predicated region
    $region33: #{ltx_block_forward.9} parent=5 // pred_check
      _
    $region34: #{ltx_block_forward.9} parent=5 // pred_check_branch
      %214 = sbr.rel (%p211) target = $region36
    $region35: #{ltx_block_forward.9} parent=5 // pred_region
      %s215 = ssub.s32 %s12, 1
      %p216 = scmp.lt.s32.totalorder %s21, 1
      %s217 = scalar_select %p216, %s21, 1
      %p218 = scmp.lt.s32.totalorder %s22, 0
      %s219 = scalar_select %p218, %s22, 0
      %s220 = sadd.s32 %s219, %s217
      %s221 = smul.addr %s220, 8
      %s222 = scalar_lea.vmem %s0, %s221
      %p223 = pneg %p52
      %p224 = pneg %p49
      %p225 = pneg %p73
      %p226 = pneg %p70
      %p227 = pneg %p94
      %p228 = pneg %p91
      %p229 = pneg %p115
      %p230 = pneg %p112
      %p231 = pneg %p143
      %p232 = pneg %p140
      %p233 = scmp.lt.s32.totalorder %s21, 1
      %s234 = scalar_select %p233, %s21, 1
      %p235 = scmp.lt.s32.totalorder %s22, 0
      %s236 = scalar_select %p235, %s22, 0
      %s237 = sadd.s32 %s236, %s234
      %s238 = smul.addr %s237, 4
      %s239 = scalar_lea.vmem %s4, %s238
      %p240 = pneg %p171
      %p241 = pneg %p168
      %p242 = scmp.lt.s32.totalorder %s21, 1
      %s243 = scalar_select %p242, %s21, 1
      %p244 = scmp.lt.s32.totalorder %s22, 0
      %s245 = scalar_select %p244, %s22, 0
      %s246 = sadd.s32 %s245, %s243
      %s247 = smul.addr %s246, 4
      %s248 = scalar_lea.vmem %s5, %s247
      %p249 = scmp.lt.s32.totalorder %s21, 1
      %s250 = scalar_select %p249, %s21, 1
      %p251 = scmp.lt.s32.totalorder %s22, 0
      %s252 = scalar_select %p251, %s22, 0
      %s253 = sadd.s32 %s252, %s250
      %s254 = smul.addr %s253, 8
      %s255 = scalar_lea.vmem %s0, %s254
      %p256 = scmp.lt.s32.totalorder %s21, 1
      %s257 = scalar_select %p256, %s21, 1
      %p258 = scmp.lt.s32.totalorder %s22, 0
      %s259 = scalar_select %p258, %s22, 0
      %s260 = sadd.s32 %s259, %s257
      %s261 = smul.addr %s260, 4
      %s262 = scalar_lea.vmem %s4, %s261
      %p263 = scmp.lt.s32.totalorder %s21, 1
      %s264 = scalar_select %p263, %s21, 1
      %p265 = scmp.lt.s32.totalorder %s22, 0
      %s266 = scalar_select %p265, %s22, 0
      %s267 = sadd.s32 %s266, %s264
      %s268 = smul.addr %s267, 4
      %s269 = scalar_lea.vmem %s5, %s268
      %v271 = vld [vmem:[%s255] sm:$0xff]
      %v272 = vpack.c.bf16 %v271, %v271
      %v273 = vld [vmem:[%s1] sm:$0xf]
      %v274 = vld [vmem:[%s1 + $0x4] sm:$0xf]
      %v275 = vld [vmem:[%s2] sm:$0x1]
      %v277 = vlaneseq
      %v278 = vshrl.u32 %v277, 7
      %v279 = vsub.s32 0, %v278
      %v280 = vrot.slane %v275, %v279
      %v284 = vunpack.c.l.b16 %v273
      %v285 = vunpack.c.l.b16 %v274
      %v286 = vpack.c.b16 %v285, %v284
      %vm288 = vcmask 130048
      %v290 = vsel %vm288, %v272, 0
      %292 = vmatprep.subr.bf16.mxu0 0
      %293 = vmatpush1.bf16.msra.mxu0 0
      %294 = vmatprep.subr.bf16.mxu0 0
      %295 = vmatpush1.bf16.msra.mxu0 0
      %296 = vmatprep.subr.bf16.mxu0 0
      %297 = vmatpush1.bf16.msra.mxu0 0
      %298 = vmatprep.subr.bf16.mxu0 0
      %299 = vmatpush1.bf16.msra.mxu0 0
      %300 = vmatprep.subr.bf16.mxu0 0
      %301 = vmatpush1.bf16.msra.mxu0 0
      %302 = vmatprep.subr.bf16.mxu0 0
      %303 = vmatpush1.bf16.msra.mxu0 0
      %304 = vmatprep.subr.bf16.mxu0 0
      %305 = vmatpush1.bf16.msra.mxu0 0
      %306 = vmatprep.subr.bf16.mxu0 0
      %307 = vmatpush1.bf16.msra.mxu0 %v286
      %308 = vmatprep.subr.bf16.mxu0 0
      %309 = vmatpush2.bf16.msra.mxu0 0
      %310 = vmatprep.subr.bf16.mxu0 0
      %311 = vmatpush2.bf16.msra.mxu0 0
      %312 = vmatprep.subr.bf16.mxu0 0
      %313 = vmatpush2.bf16.msra.mxu0 0
      %314 = vmatprep.subr.bf16.mxu0 0
      %315 = vmatpush2.bf16.msra.mxu0 0
      %316 = vmatprep.subr.bf16.mxu0 0
      %317 = vmatpush2.bf16.msra.mxu0 0
      %318 = vmatprep.subr.bf16.mxu0 0
      %319 = vmatpush2.bf16.msra.mxu0 0
      %320 = vmatprep.subr.bf16.mxu0 0
      %321 = vmatpush2.bf16.msra.mxu0 0
      %322 = vmatprep.subr.bf16.mxu0 0
      %323 = vmatpush2.bf16.msra.mxu0 0
      %324 = vmatprep.mubr.bf16.mxu0 0
      %325 = vmatmul.mubr.bf16.gmra.mxu0 %v290
      %v326 = vpop.f32.mrf.mxu0
      %v327 = vadd.f32 %v280, %v326
      %v328 = vpop.f32.mrf.mxu0
      %v329 = vpop.f32.mrf.mxu0
      %v330 = vpop.f32.mrf.mxu0
      %331 = vdwg.mxu0
      %v332 = vmul.f32 %v327, %v327
      %vm333 = vcmask 261120
      %v334 = vsel %vm333, %v332, 0.0
      %335 = vadd.xlane.f32.xlu0 %v334
      %v336 = vpop.xlane.xlu0 %335
      %v337 = vrcp.pop 32.0
      %v338 = vmul.f32 %v336, %v337
      %v339 = vadd.f32 %v338, 1e-05
      %v340 = vrsqrt.pop %v339
      %v341 = vmul.f32 %v327, %v340
      %v342 = vld [vmem:[%s3] sm:$0x1]
      %v344 = vlaneseq
      %v345 = vshrl.u32 %v344, 7
      %v346 = vsub.s32 0, %v345
      %v347 = vrot.slane %v342, %v346
      %v349 = vmul.f32 %v341, %v347
      %v350 = vpack.c.bf16 %v349, %v349
      %vm351 = vcmask 257024
      %352 = vst.msk [vmem:[%s262] sm:$0xf] %vm351, %v350
      %v353 = vpack.c.bf16 %v327, %v327
      %v355 = vunpack.c.l.b16 %v353
      %v356 = vpack.c.b16 %v355, %v355
      %357 = vrot.lane.b32.xlu0 %v356, 96
      %v358 = vpop.permute.xlu0 %357
      %360 = vst.msk [vmem:[%s269] sm:$0xf] %vm351, %v358
      %p361 = scmp.lt.s32.totalorder %s21, 1
      %s362 = scalar_select %p361, %s21, 1
      %p363 = scmp.lt.s32.totalorder %s22, 0
      %s364 = scalar_select %p363, %s22, 0
      %s365 = sadd.s32 %s364, %s362
      %s366 = smul.addr %s365, 4
      %s367 = scalar_lea.vmem %s4, %s366
      %p368 = scmp.lt.s32.totalorder %s21, 1
      %s369 = scalar_select %p368, %s21, 1
      %p370 = scmp.lt.s32.totalorder %s22, 0
      %s371 = scalar_select %p370, %s22, 0
      %s372 = sadd.s32 %s371, %s369
      %s373 = smul.addr %s372, 4
      %s374 = scalar_lea.vmem %s5, %s373
      // Predicated region
      $region37: #{ltx_block_forward.9} parent=35 // pred_check
        %p375 = pneg %p140
      $region38: #{ltx_block_forward.9} parent=35 // pred_check_branch
        %377 = sbr.rel (%p375) target = $region40
      $region39: #{ltx_block_forward.9} parent=35 // pred_region
        _
      $region40: #{ltx_block_forward.9} parent=35 // pred_fallthru
        _
      // Predicated region
      $region41: #{ltx_block_forward.9} parent=35 // pred_check
        %p378 = pneg %p168
      $region42: #{ltx_block_forward.9} parent=35 // pred_check_branch
        %380 = sbr.rel (%p378) target = $region44
      $region43: #{ltx_block_forward.9} parent=35 // pred_region
        _
      $region44: #{ltx_block_forward.9} parent=35 // pred_fallthru
        _
    $region36: #{ltx_block_forward.9} parent=5 // pred_fallthru
      _
    %p381 = scmp.le.s32.totalorder 2, %s12
    // Predicated region
    $region45: #{ltx_block_forward.9} parent=5 // pred_check
      %p382 = pneg %p381
    $region46: #{ltx_block_forward.9} parent=5 // pred_check_branch
      %384 = sbr.rel (%p382) target = $region48
    $region47: #{ltx_block_forward.9} parent=5 // pred_region
      %s385 = ssub.s32 %s12, 2
      // Predicated region
      $region49: #{ltx_block_forward.9} parent=47 // pred_check
        %p386 = pneg %p146
      $region50: #{ltx_block_forward.9} parent=47 // pred_check_branch
        %388 = sbr.rel (%p386) target = $region52
      $region51: #{ltx_block_forward.9} parent=47 // pred_region
        %p389 = scmp.lt.s32.totalorder %s23, 1
        %s390 = scalar_select %p389, %s23, 1
        %p391 = scmp.lt.s32.totalorder %s24, 0
        %s392 = scalar_select %p391, %s24, 0
        %s393 = sadd.s32 %s392, %s390
        %s394 = smul.addr %s393, 4
        %s395 = scalar_lea.vmem %s4, %s394
      $region52: #{ltx_block_forward.9} parent=47 // pred_fallthru
        _
      // Predicated region
      $region53: #{ltx_block_forward.9} parent=47 // pred_check
        %p396 = pneg %p174
      $region54: #{ltx_block_forward.9} parent=47 // pred_check_branch
        %398 = sbr.rel (%p396) target = $region56
      $region55: #{ltx_block_forward.9} parent=47 // pred_region
        %p399 = scmp.lt.s32.totalorder %s23, 1
        %s400 = scalar_select %p399, %s23, 1
        %p401 = scmp.lt.s32.totalorder %s24, 0
        %s402 = scalar_select %p401, %s24, 0
        %s403 = sadd.s32 %s402, %s400
        %s404 = smul.addr %s403, 4
        %s405 = scalar_lea.vmem %s5, %s404
      $region56: #{ltx_block_forward.9} parent=47 // pred_fallthru
        _
    $region48: #{ltx_block_forward.9} parent=5 // pred_fallthru
      _
  $region6: #{ltx_block_forward.9} parent=0 // loop_footer
    %s16 = sadd.s32 1, %s12
  $region7: #{ltx_block_forward.9} parent=0 // loop_footer_branch
    %11 = sbr.rel target = $region3
  $region8: #{ltx_block_forward.9} parent=0 // loop_exit
    _

// kernel: ltx_block_forward.8
$region0: #{ltx_block_forward.8}
  #allocation0 [shape = 'u32[]', space=smem, size = 0x4, offset = 0x4, fixed_abs, tag = 'smem constant byte address 0x4 - core index']
  #allocation1 [shape = 'u32[144,128]{1,0:T(1,128)}', space=vmem, size = 0x12000, scoped, tag = 'internal scratch']
  %s0 = inlined_call_operand.vmem [shape: bf16[2,16,32], index: 0, kind: input, shape index: {}]
  %s1 = inlined_call_operand.vmem [shape: bf16[32,32], index: 1, kind: input, shape index: {}]
  %s2 = inlined_call_operand.vmem [shape: f32[1,32], index: 2, kind: input, shape index: {}]
  %s3 = inlined_call_operand.vmem [shape: f32[2,1,32], index: 3, kind: input, shape index: {}]
  %s4 = inlined_call_operand.vmem [shape: f32[2,16,32], index: 4, kind: input, shape index: {}]
  %s5 = inlined_call_operand.vmem [shape: bf16[32,32], index: 5, kind: input, shape index: {}]
  %s6 = inlined_call_operand.vmem [shape: f32[1,32], index: 6, kind: input, shape index: {}]
  %s7 = inlined_call_operand.vmem [shape: f32[1,32], index: 7, kind: input, shape index: {}]
  %s8 = inlined_call_operand.vmem [shape: f32[2,16,32], index: 8, kind: output, shape index: {0}]
  %s9 = inlined_call_operand.vmem [shape: bf16[2,16,32], index: 9, kind: output, shape index: {1}]
  %10 = xla_tuple %s8, %s9
  %s11 = sld [smem:[#allocation0]]
  $region73: #{ltx_block_forward.8} parent=0
    _
  %s13 = ssub.s32 1, %s11
  %s14 = scalar_select 0, %s13, %s11
  loop: start=0, step=1, limit=4
  $region2: #{ltx_block_forward.8} parent=0 // loop_pre_header
    _
  $region3: #{ltx_block_forward.8} parent=0 // loop_header
    %s16 = sphi 0, %s20
    %p17 = scmp.ge.s32.totalorder %s16, 4
    %s23 = sphi 0, %s35
    %s24 = sphi 0, %s31
    %s25 = sphi 0, %s23
    %s26 = sphi 0, %s24
    %s27 = sphi 0, %s25
    %s28 = sphi 0, %s26
    %s40 = sphi 0, %s42
    %s43 = sphi 0, %s40
    %s44 = sphi 0, %s43
    %s60 = sphi 0, %s44
    %s64 = sphi 0, %s64
    %s66 = sphi 0, %s64
    %s67 = sphi 0, %s66
    %s81 = sphi 0, %s67
    %s85 = sphi 0, %s85
    %s87 = sphi 0, %s85
    %s88 = sphi 0, %s87
    %s102 = sphi 0, %s88
    %s108 = sphi 0, %s110
    %s111 = sphi 0, %s108
    %s112 = sphi 0, %s111
    %s128 = sphi 0, %s112
    %s136 = sphi 0, %s138
    %s139 = sphi 0, %s136
    %s140 = sphi 0, %s139
    %s156 = sphi 0, %s140
    %s160 = sphi 0, %s160
    %s162 = sphi 0, %s160
    %s163 = sphi 0, %s162
    %s177 = sphi 0, %s163
    %s181 = sphi 0, %s181
    %s183 = sphi 0, %s181
    %s184 = sphi 0, %s183
    %s198 = sphi 0, %s184
    %s202 = sphi 0, %s202
    %s204 = sphi 0, %s202
    %s205 = sphi 0, %s204
    %s219 = sphi 0, %s205
    %s227 = sphi 0, %s229
    %s230 = sphi 0, %s227
    %s231 = sphi 0, %s230
    %s247 = sphi 0, %s231
    %s255 = sphi 0, %s257
    %s258 = sphi 0, %s255
    %s259 = sphi 0, %s258
    %s275 = sphi 0, %s259
  $region4: #{ltx_block_forward.8} parent=0 // loop_header_branch
    %19 = sbr.rel (%p17) target = $region8
  $region5: #{ltx_block_forward.8} parent=0 // loop_body
    %s21 = ssub.s32 %s16, 1
    %s22 = ssub.s32 %s16, 2
    %s29 = sadd.s32 1, %s24
    %p30 = scmp.ge.s32.totalorder %s29, 1
    %s31 = scalar_select %p30, 0, %s29
    %s32 = sadd.s32 1, %s23
    %s33 = scalar_select %p30, %s32, %s23
    %p34 = scmp.ge.s32.totalorder %s33, 2
    %s35 = scalar_select %p34, 0, %s33
    %s36 = ssub.s32 %s23, %s35
    %s37 = ssub.s32 %s24, %s31
    %s38 = sor.u32 %s36, %s37
    %p39 = scmp.eq.s32.totalorder %s38, 0
    %s41 = sadd.s32 %s40, 1
    %s42 = scalar_select %p39, %s40, %s41
    %p45 = pneg %p39
    %p46 = scmp.eq.s32.totalorder %s16, 1
    %p47 = por %p45, %p46
    %p48 = scmp.ne.s32.totalorder %s40, %s43
    %p49 = scmp.eq.s32.totalorder %s16, 0
    %p50 = por %p48, %p49
    %p51 = scmp.ne.s32.totalorder %s40, %s43
    %p52 = scmp.eq.s32.totalorder %s21, 1
    %p53 = por %p51, %p52
    %p54 = scmp.ne.s32.totalorder %s43, %s44
    %p55 = scmp.eq.s32.totalorder %s21, 0
    %p56 = por %p54, %p55
    %p57 = scmp.ne.s32.totalorder %s43, %s44
    %p58 = scmp.eq.s32.totalorder %s22, 1
    %p59 = por %p57, %p58
    %p61 = scmp.ne.s32.totalorder %s44, %s60
    %p62 = scmp.eq.s32.totalorder %s22, 0
    %p63 = por %p61, %p62
    %s65 = sadd.s32 %s64, 1
    %p68 = scmp.eq.s32.totalorder %s16, 1
    %p69 = scmp.ne.s32.totalorder %s64, %s66
    %p70 = scmp.eq.s32.totalorder %s16, 0
    %p71 = por %p69, %p70
    %p72 = scmp.ne.s32.totalorder %s64, %s66
    %p73 = scmp.eq.s32.totalorder %s21, 1
    %p74 = por %p72, %p73
    %p75 = scmp.ne.s32.totalorder %s66, %s67
    %p76 = scmp.eq.s32.totalorder %s21, 0
    %p77 = por %p75, %p76
    %p78 = scmp.ne.s32.totalorder %s66, %s67
    %p79 = scmp.eq.s32.totalorder %s22, 1
    %p80 = por %p78, %p79
    %p82 = scmp.ne.s32.totalorder %s67, %s81
    %p83 = scmp.eq.s32.totalorder %s22, 0
    %p84 = por %p82, %p83
    %s86 = sadd.s32 %s85, 1
    %p89 = scmp.eq.s32.totalorder %s16, 1
    %p90 = scmp.ne.s32.totalorder %s85, %s87
    %p91 = scmp.eq.s32.totalorder %s16, 0
    %p92 = por %p90, %p91
    %p93 = scmp.ne.s32.totalorder %s85, %s87
    %p94 = scmp.eq.s32.totalorder %s21, 1
    %p95 = por %p93, %p94
    %p96 = scmp.ne.s32.totalorder %s87, %s88
    %p97 = scmp.eq.s32.totalorder %s21, 0
    %p98 = por %p96, %p97
    %p99 = scmp.ne.s32.totalorder %s87, %s88
    %p100 = scmp.eq.s32.totalorder %s22, 1
    %p101 = por %p99, %p100
    %p103 = scmp.ne.s32.totalorder %s88, %s102
    %p104 = scmp.eq.s32.totalorder %s22, 0
    %p105 = por %p103, %p104
    %s106 = ssub.s32 %s23, %s35
    %p107 = scmp.eq.s32.totalorder %s106, 0
    %s109 = sadd.s32 %s108, 1
    %s110 = scalar_select %p107, %s108, %s109
    %p113 = pneg %p107
    %p114 = scmp.eq.s32.totalorder %s16, 1
    %p115 = por %p113, %p114
    %p116 = scmp.ne.s32.totalorder %s108, %s111
    %p117 = scmp.eq.s32.totalorder %s16, 0
    %p118 = por %p116, %p117
    %p119 = scmp.ne.s32.totalorder %s108, %s111
    %p120 = scmp.eq.s32.totalorder %s21, 1
    %p121 = por %p119, %p120
    %p122 = scmp.ne.s32.totalorder %s111, %s112
    %p123 = scmp.eq.s32.totalorder %s21, 0
    %p124 = por %p122, %p123
    %p125 = scmp.ne.s32.totalorder %s111, %s112
    %p126 = scmp.eq.s32.totalorder %s22, 1
    %p127 = por %p125, %p126
    %p129 = scmp.ne.s32.totalorder %s112, %s128
    %p130 = scmp.eq.s32.totalorder %s22, 0
    %p131 = por %p129, %p130
    %s132 = ssub.s32 %s23, %s35
    %s133 = ssub.s32 %s24, %s31
    %s134 = sor.u32 %s132, %s133
    %p135 = scmp.eq.s32.totalorder %s134, 0
    %s137 = sadd.s32 %s136, 1
    %s138 = scalar_select %p135, %s136, %s137
    %p141 = pneg %p135
    %p142 = scmp.eq.s32.totalorder %s16, 1
    %p143 = por %p141, %p142
    %p144 = scmp.ne.s32.totalorder %s136, %s139
    %p145 = scmp.eq.s32.totalorder %s16, 0
    %p146 = por %p144, %p145
    %p147 = scmp.ne.s32.totalorder %s136, %s139
    %p148 = scmp.eq.s32.totalorder %s21, 1
    %p149 = por %p147, %p148
    %p150 = scmp.ne.s32.totalorder %s139, %s140
    %p151 = scmp.eq.s32.totalorder %s21, 0
    %p152 = por %p150, %p151
    %p153 = scmp.ne.s32.totalorder %s139, %s140
    %p154 = scmp.eq.s32.totalorder %s22, 1
    %p155 = por %p153, %p154
    %p157 = scmp.ne.s32.totalorder %s140, %s156
    %p158 = scmp.eq.s32.totalorder %s22, 0
    %p159 = por %p157, %p158
    %s161 = sadd.s32 %s160, 1
    %p164 = scmp.eq.s32.totalorder %s16, 1
    %p165 = scmp.ne.s32.totalorder %s160, %s162
    %p166 = scmp.eq.s32.totalorder %s16, 0
    %p167 = por %p165, %p166
    %p168 = scmp.ne.s32.totalorder %s160, %s162
    %p169 = scmp.eq.s32.totalorder %s21, 1
    %p170 = por %p168, %p169
    %p171 = scmp.ne.s32.totalorder %s162, %s163
    %p172 = scmp.eq.s32.totalorder %s21, 0
    %p173 = por %p171, %p172
    %p174 = scmp.ne.s32.totalorder %s162, %s163
    %p175 = scmp.eq.s32.totalorder %s22, 1
    %p176 = por %p174, %p175
    %p178 = scmp.ne.s32.totalorder %s163, %s177
    %p179 = scmp.eq.s32.totalorder %s22, 0
    %p180 = por %p178, %p179
    %s182 = sadd.s32 %s181, 1
    %p185 = scmp.eq.s32.totalorder %s16, 1
    %p186 = scmp.ne.s32.totalorder %s181, %s183
    %p187 = scmp.eq.s32.totalorder %s16, 0
    %p188 = por %p186, %p187
    %p189 = scmp.ne.s32.totalorder %s181, %s183
    %p190 = scmp.eq.s32.totalorder %s21, 1
    %p191 = por %p189, %p190
    %p192 = scmp.ne.s32.totalorder %s183, %s184
    %p193 = scmp.eq.s32.totalorder %s21, 0
    %p194 = por %p192, %p193
    %p195 = scmp.ne.s32.totalorder %s183, %s184
    %p196 = scmp.eq.s32.totalorder %s22, 1
    %p197 = por %p195, %p196
    %p199 = scmp.ne.s32.totalorder %s184, %s198
    %p200 = scmp.eq.s32.totalorder %s22, 0
    %p201 = por %p199, %p200
    %s203 = sadd.s32 %s202, 1
    %p206 = scmp.eq.s32.totalorder %s16, 1
    %p207 = scmp.ne.s32.totalorder %s202, %s204
    %p208 = scmp.eq.s32.totalorder %s16, 0
    %p209 = por %p207, %p208
    %p210 = scmp.ne.s32.totalorder %s202, %s204
    %p211 = scmp.eq.s32.totalorder %s21, 1
    %p212 = por %p210, %p211
    %p213 = scmp.ne.s32.totalorder %s204, %s205
    %p214 = scmp.eq.s32.totalorder %s21, 0
    %p215 = por %p213, %p214
    %p216 = scmp.ne.s32.totalorder %s204, %s205
    %p217 = scmp.eq.s32.totalorder %s22, 1
    %p218 = por %p216, %p217
    %p220 = scmp.ne.s32.totalorder %s205, %s219
    %p221 = scmp.eq.s32.totalorder %s22, 0
    %p222 = por %p220, %p221
    %s223 = ssub.s32 %s23, %s35
    %s224 = ssub.s32 %s24, %s31
    %s225 = sor.u32 %s223, %s224
    %p226 = scmp.eq.s32.totalorder %s225, 0
    %s228 = sadd.s32 %s227, 1
    %s229 = scalar_select %p226, %s227, %s228
    %p232 = pneg %p226
    %p233 = scmp.eq.s32.totalorder %s16, 1
    %p234 = por %p232, %p233
    %p235 = scmp.ne.s32.totalorder %s227, %s230
    %p236 = scmp.eq.s32.totalorder %s16, 0
    %p237 = por %p235, %p236
    %p238 = scmp.ne.s32.totalorder %s227, %s230
    %p239 = scmp.eq.s32.totalorder %s21, 1
    %p240 = por %p238, %p239
    %p241 = scmp.ne.s32.totalorder %s230, %s231
    %p242 = scmp.eq.s32.totalorder %s21, 0
    %p243 = por %p241, %p242
    %p244 = scmp.ne.s32.totalorder %s230, %s231
    %p245 = scmp.eq.s32.totalorder %s22, 1
    %p246 = por %p244, %p245
    %p248 = scmp.ne.s32.totalorder %s231, %s247
    %p249 = scmp.eq.s32.totalorder %s22, 0
    %p250 = por %p248, %p249
    %s251 = ssub.s32 %s23, %s35
    %s252 = ssub.s32 %s24, %s31
    %s253 = sor.u32 %s251, %s252
    %p254 = scmp.eq.s32.totalorder %s253, 0
    %s256 = sadd.s32 %s255, 1
    %s257 = scalar_select %p254, %s255, %s256
    %p260 = pneg %p254
    %p261 = scmp.eq.s32.totalorder %s16, 1
    %p262 = por %p260, %p261
    %p263 = scmp.ne.s32.totalorder %s255, %s258
    %p264 = scmp.eq.s32.totalorder %s16, 0
    %p265 = por %p263, %p264
    %p266 = scmp.ne.s32.totalorder %s255, %s258
    %p267 = scmp.eq.s32.totalorder %s21, 1
    %p268 = por %p266, %p267
    %p269 = scmp.ne.s32.totalorder %s258, %s259
    %p270 = scmp.eq.s32.totalorder %s21, 0
    %p271 = por %p269, %p270
    %p272 = scmp.ne.s32.totalorder %s258, %s259
    %p273 = scmp.eq.s32.totalorder %s22, 1
    %p274 = por %p272, %p273
    %p276 = scmp.ne.s32.totalorder %s259, %s275
    %p277 = scmp.eq.s32.totalorder %s22, 0
    %p278 = por %p276, %p277
    %p279 = scmp.le.s32.totalorder 1, %s16
    %p280 = scmp.lt.s32.totalorder %s16, 3
    %p281 = pnand %p279, %p280
    %p282 = pneg %p281
    // Predicated region
    $region9: #{ltx_block_forward.8} parent=5 // pred_check
      _
    $region10: #{ltx_block_forward.8} parent=5 // pred_check_branch
      %284 = sbr.rel (%p281) target = $region12
    $region11: #{ltx_block_forward.8} parent=5 // pred_region
      %s285 = ssub.s32 %s16, 1
      // Predicated region
      $region13: #{ltx_block_forward.8} parent=11 // pred_check
        %p286 = pneg %p77
      $region14: #{ltx_block_forward.8} parent=11 // pred_check_branch
        %288 = sbr.rel (%p286) target = $region16
      $region15: #{ltx_block_forward.8} parent=11 // pred_region
        _
      $region16: #{ltx_block_forward.8} parent=11 // pred_fallthru
        _
      // Predicated region
      $region17: #{ltx_block_forward.8} parent=11 // pred_check
        %p289 = pneg %p98
      $region18: #{ltx_block_forward.8} parent=11 // pred_check_branch
        %291 = sbr.rel (%p289) target = $region20
      $region19: #{ltx_block_forward.8} parent=11 // pred_region
        _
      $region20: #{ltx_block_forward.8} parent=11 // pred_fallthru
        _
      // Predicated region
      $region21: #{ltx_block_forward.8} parent=11 // pred_check
        %p292 = pneg %p173
      $region22: #{ltx_block_forward.8} parent=11 // pred_check_branch
        %294 = sbr.rel (%p292) target = $region24
      $region23: #{ltx_block_forward.8} parent=11 // pred_region
        _
      $region24: #{ltx_block_forward.8} parent=11 // pred_fallthru
        _
      // Predicated region
      $region25: #{ltx_block_forward.8} parent=11 // pred_check
        %p295 = pneg %p194
      $region26: #{ltx_block_forward.8} parent=11 // pred_check_branch
        %297 = sbr.rel (%p295) target = $region28
      $region27: #{ltx_block_forward.8} parent=11 // pred_region
        _
      $region28: #{ltx_block_forward.8} parent=11 // pred_fallthru
        _
      // Predicated region
      $region29: #{ltx_block_forward.8} parent=11 // pred_check
        %p298 = pneg %p215
      $region30: #{ltx_block_forward.8} parent=11 // pred_check_branch
        %300 = sbr.rel (%p298) target = $region32
      $region31: #{ltx_block_forward.8} parent=11 // pred_region
        _
      $region32: #{ltx_block_forward.8} parent=11 // pred_fallthru
        _
    $region12: #{ltx_block_forward.8} parent=5 // pred_fallthru
      _
    %p301 = scmp.lt.s32.totalorder %s16, 2
    // Predicated region
    $region33: #{ltx_block_forward.8} parent=5 // pred_check
      %p302 = pneg %p301
    $region34: #{ltx_block_forward.8} parent=5 // pred_check_branch
      %304 = sbr.rel (%p302) target = $region36
    $region35: #{ltx_block_forward.8} parent=5 // pred_region
      // Predicated region
      $region37: #{ltx_block_forward.8} parent=35 // pred_check
        %p305 = pneg %p50
      $region38: #{ltx_block_forward.8} parent=35 // pred_check_branch
        %307 = sbr.rel (%p305) target = $region40
      $region39: #{ltx_block_forward.8} parent=35 // pred_region
        %s308 = smul.u32 2, %s24
        %p309 = scmp.lt.s32.totalorder %s23, 1
        %s310 = scalar_select %p309, %s23, 1
        %p311 = scmp.lt.s32.totalorder %s308, 1
        %s312 = scalar_select %p311, %s308, 1
        %s313 = smul.addr %s310, 2
        %s314 = sadd.s32 %s312, %s313
        %s315 = smul.addr %s314, 4
        %s316 = scalar_lea.vmem %s0, %s315
        %s317 = smul.u32 2, %s24
      $region40: #{ltx_block_forward.8} parent=35 // pred_fallthru
        _
      // Predicated region
      $region41: #{ltx_block_forward.8} parent=35 // pred_check
        %p318 = pneg %p118
      $region42: #{ltx_block_forward.8} parent=35 // pred_check_branch
        %320 = sbr.rel (%p318) target = $region44
      $region43: #{ltx_block_forward.8} parent=35 // pred_region
        %p321 = scmp.lt.s32.totalorder %s23, 1
        %s322 = scalar_select %p321, %s23, 1
        %s323 = scalar_lea.vmem %s3, %s322
      $region44: #{ltx_block_forward.8} parent=35 // pred_fallthru
        _
      // Predicated region
      $region45: #{ltx_block_forward.8} parent=35 // pred_check
        %p324 = pneg %p146
      $region46: #{ltx_block_forward.8} parent=35 // pred_check_branch
        %326 = sbr.rel (%p324) target = $region48
      $region47: #{ltx_block_forward.8} parent=35 // pred_region
        %s327 = smul.u32 2, %s24
        %p328 = scmp.lt.s32.totalorder %s23, 1
        %s329 = scalar_select %p328, %s23, 1
        %p330 = scmp.lt.s32.totalorder %s327, 1
        %s331 = scalar_select %p330, %s327, 1
        %s332 = smul.addr %s329, 2
        %s333 = sadd.s32 %s331, %s332
        %s334 = smul.addr %s333, 8
        %s335 = scalar_lea.vmem %s4, %s334
        %s336 = smul.u32 2, %s24
      $region48: #{ltx_block_forward.8} parent=35 // pred_fallthru
        _
    $region36: #{ltx_block_forward.8} parent=5 // pred_fallthru
      _
    %p337 = scmp.le.s32.totalorder 1, %s16
    %p338 = scmp.lt.s32.totalorder %s16, 3
    %p339 = pnand %p337, %p338
    %p340 = pneg %p339
    // Predicated region
    $region49: #{ltx_block_forward.8} parent=5 // pred_check
      _
    $region50: #{ltx_block_forward.8} parent=5 // pred_check_branch
      %342 = sbr.rel (%p339) target = $region52
    $region51: #{ltx_block_forward.8} parent=5 // pred_region
      %s343 = ssub.s32 %s16, 1
      %s344 = smul.u32 2, %s26
      %p345 = scmp.lt.s32.totalorder %s25, 1
      %s346 = scalar_select %p345, %s25, 1
      %p347 = scmp.lt.s32.totalorder %s344, 1
      %s348 = scalar_select %p347, %s344, 1
      %s349 = smul.addr %s346, 2
      %s350 = sadd.s32 %s348, %s349
      %s351 = smul.addr %s350, 4
      %s352 = scalar_lea.vmem %s0, %s351
      %p353 = pneg %p56
      %p354 = pneg %p53
      %p355 = pneg %p77
      %p356 = pneg %p74
      %p357 = pneg %p98
      %p358 = pneg %p95
      %p359 = scmp.lt.s32.totalorder %s25, 1
      %s360 = scalar_select %p359, %s25, 1
      %s361 = scalar_lea.vmem %s3, %s360
      %p362 = pneg %p124
      %p363 = pneg %p121
      %s364 = smul.u32 2, %s26
      %p365 = scmp.lt.s32.totalorder %s25, 1
      %s366 = scalar_select %p365, %s25, 1
      %p367 = scmp.lt.s32.totalorder %s364, 1
      %s368 = scalar_select %p367, %s364, 1
      %s369 = smul.addr %s366, 2
      %s370 = sadd.s32 %s368, %s369
      %s371 = smul.addr %s370, 8
      %s372 = scalar_lea.vmem %s4, %s371
      %p373 = pneg %p152
      %p374 = pneg %p149
      %p375 = pneg %p173
      %p376 = pneg %p170
      %p377 = pneg %p194
      %p378 = pneg %p191
      %p379 = pneg %p215
      %p380 = pneg %p212
      %p381 = pneg %p243
      %p382 = pneg %p240
      %s383 = smul.u32 2, %s26
      %p384 = scmp.lt.s32.totalorder %s25, 1
      %s385 = scalar_select %p384, %s25, 1
      %p386 = scmp.lt.s32.totalorder %s383, 1
      %s387 = scalar_select %p386, %s383, 1
      %s388 = smul.addr %s385, 2
      %s389 = sadd.s32 %s387, %s388
      %s390 = smul.addr %s389, 8
      %s391 = scalar_lea.vmem %s8, %s390
      %p392 = pneg %p271
      %p393 = pneg %p268
      %s394 = smul.u32 2, %s26
      %p395 = scmp.lt.s32.totalorder %s25, 1
      %s396 = scalar_select %p395, %s25, 1
      %p397 = scmp.lt.s32.totalorder %s394, 1
      %s398 = scalar_select %p397, %s394, 1
      %s399 = smul.addr %s396, 2
      %s400 = sadd.s32 %s398, %s399
      %s401 = smul.addr %s400, 4
      %s402 = scalar_lea.vmem %s9, %s401
      %s403 = smul.u32 2, %s26
      %p404 = scmp.lt.s32.totalorder %s25, 1
      %s405 = scalar_select %p404, %s25, 1
      %p406 = scmp.lt.s32.totalorder %s403, 1
      %s407 = scalar_select %p406, %s403, 1
      %s408 = smul.addr %s405, 2
      %s409 = sadd.s32 %s407, %s408
      %s410 = smul.addr %s409, 4
      %s411 = scalar_lea.vmem %s0, %s410
      %s412 = smul.u32 2, %s26
      %p413 = scmp.lt.s32.totalorder %s25, 1
      %s414 = scalar_select %p413, %s25, 1
      %s415 = scalar_lea.vmem %s3, %s414
      %s416 = smul.u32 2, %s26
      %p417 = scmp.lt.s32.totalorder %s25, 1
      %s418 = scalar_select %p417, %s25, 1
      %p419 = scmp.lt.s32.totalorder %s416, 1
      %s420 = scalar_select %p419, %s416, 1
      %s421 = smul.addr %s418, 2
      %s422 = sadd.s32 %s420, %s421
      %s423 = smul.addr %s422, 8
      %s424 = scalar_lea.vmem %s4, %s423
      %s425 = smul.u32 2, %s26
      %s426 = smul.u32 2, %s26
      %p427 = scmp.lt.s32.totalorder %s25, 1
      %s428 = scalar_select %p427, %s25, 1
      %p429 = scmp.lt.s32.totalorder %s426, 1
      %s430 = scalar_select %p429, %s426, 1
      %s431 = smul.addr %s428, 2
      %s432 = sadd.s32 %s430, %s431
      %s433 = smul.addr %s432, 8
      %s434 = scalar_lea.vmem %s8, %s433
      %s435 = smul.u32 2, %s26
      %s436 = smul.u32 2, %s26
      %p437 = scmp.lt.s32.totalorder %s25, 1
      %s438 = scalar_select %p437, %s25, 1
      %p439 = scmp.lt.s32.totalorder %s436, 1
      %s440 = scalar_select %p439, %s436, 1
      %s441 = smul.addr %s438, 2
      %s442 = sadd.s32 %s440, %s441
      %s443 = smul.addr %s442, 4
      %s444 = scalar_lea.vmem %s9, %s443
      %s445 = smul.u32 2, %s26
      %v447 = vld [vmem:[%s411] sm:$0xf]
      %v448 = vld [vmem:[%s411 + $0x4] sm:$0xf]
      %v449 = vld [vmem:[%s1] sm:$0xf]
      %v450 = vld [vmem:[%s1 + $0x4] sm:$0xf]
      %v451 = vld [vmem:[%s1 + $0x8] sm:$0xf]
      %v452 = vld [vmem:[%s1 + $0xc] sm:$0xf]
      %v453 = vld [vmem:[%s2] sm:$0x1]
      %v455 = vlaneseq
      %v456 = vshrl.u32 %v455, 7
      %v457 = vsub.s32 0, %v456
      %v458 = vrot.slane %v453, %v457
      %v462 = vunpack.c.l.b16 %v447
      %v463 = vunpack.c.l.b16 %v448
      %v464 = vpack.c.b16 %v463, %v462
      %v469 = vunpack.c.l.b16 %v449
      %v470 = vunpack.c.l.b16 %v450
      %v471 = vunpack.c.l.b16 %v451
      %v472 = vunpack.c.l.b16 %v452
      %v473 = vpack.c.b16 %v470, %v469
      %v474 = vpack.c.b16 %v472, %v471
      %vm477 = vcmask 261120
      %v479 = vsel %vm477, %v464, 0
      %481 = vmatprep.subr.bf16.mxu0 0
      %482 = vmatpush1.bf16.msra.mxu0 0
      %483 = vmatprep.subr.bf16.mxu0 0
      %484 = vmatpush1.bf16.msra.mxu0 0
      %485 = vmatprep.subr.bf16.mxu0 0
      %486 = vmatpush1.bf16.msra.mxu0 0
      %487 = vmatprep.subr.bf16.mxu0 0
      %488 = vmatpush1.bf16.msra.mxu0 0
      %489 = vmatprep.subr.bf16.mxu0 0
      %490 = vmatpush1.bf16.msra.mxu0 0
      %491 = vmatprep.subr.bf16.mxu0 0
      %492 = vmatpush1.bf16.msra.mxu0 0
      %493 = vmatprep.subr.bf16.mxu0 0
      %494 = vmatpush1.bf16.msra.mxu0 %v474
      %495 = vmatprep.subr.bf16.mxu0 0
      %496 = vmatpush1.bf16.msra.mxu0 %v473
      %497 = vmatprep.subr.bf16.mxu0 0
      %498 = vmatpush2.bf16.msra.mxu0 0
      %499 = vmatprep.subr.bf16.mxu0 0
      %500 = vmatpush2.bf16.msra.mxu0 0
      %501 = vmatprep.subr.bf16.mxu0 0
      %502 = vmatpush2.bf16.msra.mxu0 0
      %503 = vmatprep.subr.bf16.mxu0 0
      %504 = vmatpush2.bf16.msra.mxu0 0
      %505 = vmatprep.subr.bf16.mxu0 0
      %506 = vmatpush2.bf16.msra.mxu0 0
      %507 = vmatprep.subr.bf16.mxu0 0
      %508 = vmatpush2.bf16.msra.mxu0 0
      %509 = vmatprep.subr.bf16.mxu0 0
      %510 = vmatpush2.bf16.msra.mxu0 0
      %511 = vmatprep.subr.bf16.mxu0 0
      %512 = vmatpush2.bf16.msra.mxu0 0
      %513 = vmatprep.mubr.bf16.mxu0 0
      %514 = vmatmul.mubr.bf16.gmra.mxu0 %v479
      %v515 = vpop.f32.mrf.mxu0
      %v516 = vadd.f32 %v458, %v515
      %v517 = vpop.f32.mrf.mxu0
      %v518 = vpop.f32.mrf.mxu0
      %v519 = vadd.f32 %v458, %v518
      %v520 = vpop.f32.mrf.mxu0
      %521 = vdwg.mxu0
      %v522 = vld [vmem:[%s424] sm:$0xff]
      %v523 = vld [vmem:[%s424 + $0x8] sm:$0xff]
      %v524 = vld [vmem:[%s415] sm:$0x1]
      %v526 = vlaneseq
      %v527 = vshrl.u32 %v526, 7
      %v528 = vsub.s32 0, %v527
      %v529 = vrot.slane %v524, %v528
      %v531 = vmul.f32 %v516, %v529
      %v532 = vmul.f32 %v519, %v529
      %v533 = vadd.f32 %v522, %v531
      %v534 = vadd.f32 %v523, %v532
      %535 = vst.msk [vmem:[%s434] sm:$0xff] %vm477, %v533
      %536 = vst.msk [vmem:[%s434 + $0x8] sm:$0xff] %vm477, %v534
      %v537 = vpack.c.bf16 %v534, %v533
      %v538 = vld [vmem:[%s5] sm:$0xf]
      %v539 = vld [vmem:[%s5 + $0x4] sm:$0xf]
      %v540 = vld [vmem:[%s5 + $0x8] sm:$0xf]
      %v541 = vld [vmem:[%s5 + $0xc] sm:$0xf]
      %v542 = vld [vmem:[%s6] sm:$0x1]
      %v544 = vlaneseq
      %v545 = vshrl.u32 %v544, 7
      %v546 = vsub.s32 0, %v545
      %v547 = vrot.slane %v542, %v546
      %v553 = vunpack.c.l.b16 %v538
      %v554 = vunpack.c.l.b16 %v539
      %v555 = vunpack.c.l.b16 %v540
      %v556 = vunpack.c.l.b16 %v541
      %v557 = vpack.c.b16 %v554, %v553
      %v558 = vpack.c.b16 %v556, %v555
      %v562 = vsel %vm477, %v537, 0
      %564 = vmatprep.subr.bf16.mxu0 0
      %565 = vmatpush1.bf16.msra.mxu0 0
      %566 = vmatprep.subr.bf16.mxu0 0
      %567 = vmatpush1.bf16.msra.mxu0 0
      %568 = vmatprep.subr.bf16.mxu0 0
      %569 = vmatpush1.bf16.msra.mxu0 0
      %570 = vmatprep.subr.bf16.mxu0 0
      %571 = vmatpush1.bf16.msra.mxu0 0
      %572 = vmatprep.subr.bf16.mxu0 0
      %573 = vmatpush1.bf16.msra.mxu0 0
      %574 = vmatprep.subr.bf16.mxu0 0
      %575 = vmatpush1.bf16.msra.mxu0 0
      %576 = vmatprep.subr.bf16.mxu0 0
      %577 = vmatpush1.bf16.msra.mxu0 %v558
      %578 = vmatprep.subr.bf16.mxu0 0
      %579 = vmatpush1.bf16.msra.mxu0 %v557
      %580 = vmatprep.subr.bf16.mxu0 0
      %581 = vmatpush2.bf16.msra.mxu0 0
      %582 = vmatprep.subr.bf16.mxu0 0
      %583 = vmatpush2.bf16.msra.mxu0 0
      %584 = vmatprep.subr.bf16.mxu0 0
      %585 = vmatpush2.bf16.msra.mxu0 0
      %586 = vmatprep.subr.bf16.mxu0 0
      %587 = vmatpush2.bf16.msra.mxu0 0
      %588 = vmatprep.subr.bf16.mxu0 0
      %589 = vmatpush2.bf16.msra.mxu0 0
      %590 = vmatprep.subr.bf16.mxu0 0
      %591 = vmatpush2.bf16.msra.mxu0 0
      %592 = vmatprep.subr.bf16.mxu0 0
      %593 = vmatpush2.bf16.msra.mxu0 0
      %594 = vmatprep.subr.bf16.mxu0 0
      %595 = vmatpush2.bf16.msra.mxu0 0
      %596 = vmatprep.mubr.bf16.mxu0 0
      %597 = vmatmul.mubr.bf16.gmra.mxu0 %v562
      %v598 = vpop.f32.mrf.mxu0
      %v599 = vadd.f32 %v547, %v598
      %v600 = vpop.f32.mrf.mxu0
      %v601 = vpop.f32.mrf.mxu0
      %v602 = vadd.f32 %v547, %v601
      %v603 = vpop.f32.mrf.mxu0
      %604 = vdwg.mxu0
      %v605 = vmul.f32 %v599, %v599
      %v606 = vmul.f32 %v602, %v602
      %v607 = vsel %vm477, %v605, 0.0
      %608 = vadd.xlane.f32.xlu0 %v607
      %v609 = vpop.xlane.xlu0 %608
      %v610 = vsel %vm477, %v606, 0.0
      %611 = vadd.xlane.f32.xlu0 %v610
      %v612 = vpop.xlane.xlu0 %611
      %v613 = vrcp.pop 32.0
      %v614 = vmul.f32 %v609, %v613
      %v615 = vmul.f32 %v612, %v613
      %v616 = vadd.f32 %v614, 1e-05
      %v617 = vadd.f32 %v615, 1e-05
      %v618 = vrsqrt.pop %v616
      %v619 = vrsqrt.pop %v617
      %v620 = vmul.f32 %v599, %v618
      %v621 = vmul.f32 %v602, %v619
      %v622 = vld [vmem:[%s7] sm:$0x1]
      %v624 = vlaneseq
      %v625 = vshrl.u32 %v624, 7
      %v626 = vsub.s32 0, %v625
      %v627 = vrot.slane %v622, %v626
      %v629 = vmul.f32 %v620, %v627
      %v630 = vmul.f32 %v621, %v627
      %v631 = vpack.c.bf16 %v630, %v629
      %v633 = vunpack.c.l.b16 %v631
      %v634 = vunpack.c.h.b16 %v631
      %v635 = vpack.c.b16 %v633, %v633
      %v636 = vpack.c.b16 %v634, %v634
      %vm639 = vcmask 257024
      %640 = vst.msk [vmem:[%s444] sm:$0xf] %vm639, %v635
      %641 = vst.msk [vmem:[%s444 + $0x4] sm:$0xf] %vm639, %v636
      %s642 = smul.u32 2, %s26
      %p643 = scmp.lt.s32.totalorder %s25, 1
      %s644 = scalar_select %p643, %s25, 1
      %p645 = scmp.lt.s32.totalorder %s642, 1
      %s646 = scalar_select %p645, %s642, 1
      %s647 = smul.addr %s644, 2
      %s648 = sadd.s32 %s646, %s647
      %s649 = smul.addr %s648, 8
      %s650 = scalar_lea.vmem %s8, %s649
      %s651 = smul.u32 2, %s26
      %p652 = scmp.lt.s32.totalorder %s25, 1
      %s653 = scalar_select %p652, %s25, 1
      %p654 = scmp.lt.s32.totalorder %s651, 1
      %s655 = scalar_select %p654, %s651, 1
      %s656 = smul.addr %s653, 2
      %s657 = sadd.s32 %s655, %s656
      %s658 = smul.addr %s657, 4
      %s659 = scalar_lea.vmem %s9, %s658
      // Predicated region
      $region53: #{ltx_block_forward.8} parent=51 // pred_check
        %p660 = pneg %p240
      $region54: #{ltx_block_forward.8} parent=51 // pred_check_branch
        %662 = sbr.rel (%p660) target = $region56
      $region55: #{ltx_block_forward.8} parent=51 // pred_region
        %s663 = smul.u32 2, %s26
      $region56: #{ltx_block_forward.8} parent=51 // pred_fallthru
        _
      // Predicated region
      $region57: #{ltx_block_forward.8} parent=51 // pred_check
        %p664 = pneg %p268
      $region58: #{ltx_block_forward.8} parent=51 // pred_check_branch
        %666 = sbr.rel (%p664) target = $region60
      $region59: #{ltx_block_forward.8} parent=51 // pred_region
        %s667 = smul.u32 2, %s26
      $region60: #{ltx_block_forward.8} parent=51 // pred_fallthru
        _
    $region52: #{ltx_block_forward.8} parent=5 // pred_fallthru
      _
    %p668 = scmp.le.s32.totalorder 2, %s16
    // Predicated region
    $region61: #{ltx_block_forward.8} parent=5 // pred_check
      %p669 = pneg %p668
    $region62: #{ltx_block_forward.8} parent=5 // pred_check_branch
      %671 = sbr.rel (%p669) target = $region64
    $region63: #{ltx_block_forward.8} parent=5 // pred_region
      %s672 = ssub.s32 %s16, 2
      // Predicated region
      $region65: #{ltx_block_forward.8} parent=63 // pred_check
        %p673 = pneg %p246
      $region66: #{ltx_block_forward.8} parent=63 // pred_check_branch
        %675 = sbr.rel (%p673) target = $region68
      $region67: #{ltx_block_forward.8} parent=63 // pred_region
        %s676 = smul.u32 2, %s28
        %p677 = scmp.lt.s32.totalorder %s27, 1
        %s678 = scalar_select %p677, %s27, 1
        %p679 = scmp.lt.s32.totalorder %s676, 1
        %s680 = scalar_select %p679, %s676, 1
        %s681 = smul.addr %s678, 2
        %s682 = sadd.s32 %s680, %s681
        %s683 = smul.addr %s682, 8
        %s684 = scalar_lea.vmem %s8, %s683
      $region68: #{ltx_block_forward.8} parent=63 // pred_fallthru
        _
      // Predicated region
      $region69: #{ltx_block_forward.8} parent=63 // pred_check
        %p685 = pneg %p274
      $region70: #{ltx_block_forward.8} parent=63 // pred_check_branch
        %687 = sbr.rel (%p685) target = $region72
      $region71: #{ltx_block_forward.8} parent=63 // pred_region
        %s688 = smul.u32 2, %s28
        %p689 = scmp.lt.s32.totalorder %s27, 1
        %s690 = scalar_select %p689, %s27, 1
        %p691 = scmp.lt.s32.totalorder %s688, 1
        %s692 = scalar_select %p691, %s688, 1
        %s693 = smul.addr %s690, 2
        %s694 = sadd.s32 %s692, %s693
        %s695 = smul.addr %s694, 4
        %s696 = scalar_lea.vmem %s9, %s695
      $region72: #{ltx_block_forward.8} parent=63 // pred_fallthru
        _
    $region64: #{ltx_block_forward.8} parent=5 // pred_fallthru
      _
  $region6: #{ltx_block_forward.8} parent=0 // loop_footer
    %s20 = sadd.s32 1, %s16
  $region7: #{ltx_block_forward.8} parent=0 // loop_footer_branch
    %15 = sbr.rel target = $region3
  $region8: #{ltx_block_forward.8} parent=0 // loop_exit
    _

// kernel: ltx_block_forward.6
$region0: #{ltx_block_forward.6}
  #allocation0 [shape = 'u32[]', space=smem, size = 0x4, offset = 0x4, fixed_abs, tag = 'smem constant byte address 0x4 - core index']
  #allocation1 [shape = 'u32[144,128]{1,0:T(1,128)}', space=vmem, size = 0x12000, scoped, tag = 'internal scratch']
  %s0 = inlined_call_operand.vmem [shape: f32[2,16,32], index: 0, kind: input, shape index: {}]
  %s1 = inlined_call_operand.vmem [shape: f32[2,1,32], index: 1, kind: input, shape index: {}]
  %s2 = inlined_call_operand.vmem [shape: f32[2,1,32], index: 2, kind: input, shape index: {}]
  %s3 = inlined_call_operand.vmem [shape: bf16[32,96], index: 3, kind: input, shape index: {}]
  %s4 = inlined_call_operand.vmem [shape: f32[1,96], index: 4, kind: input, shape index: {}]
  %s5 = inlined_call_operand.vmem [shape: f32[1,32], index: 5, kind: input, shape index: {}]
  %s6 = inlined_call_operand.vmem [shape: f32[1,32], index: 6, kind: input, shape index: {}]
  %s7 = inlined_call_operand.vmem [shape: f32[16,32], index: 7, kind: input, shape index: {}]
  %s8 = inlined_call_operand.vmem [shape: f32[16,32], index: 8, kind: input, shape index: {}]
  %s9 = inlined_call_operand.vmem [shape: bf16[2,16,32], index: 9, kind: output, shape index: {0}]
  %s10 = inlined_call_operand.vmem [shape: bf16[2,16,32], index: 10, kind: output, shape index: {1}]
  %s11 = inlined_call_operand.vmem [shape: bf16[2,16,32], index: 11, kind: output, shape index: {2}]
  %12 = xla_tuple %s9, %s10, %s11
  %s13 = sld [smem:[#allocation0]]
  $region85: #{ltx_block_forward.6} parent=0
    _
  %s15 = ssub.s32 1, %s13
  %s16 = scalar_select 0, %s15, %s13
  loop: start=0, step=1, limit=4
  $region2: #{ltx_block_forward.6} parent=0 // loop_pre_header
    _
  $region3: #{ltx_block_forward.6} parent=0 // loop_header
    %s18 = sphi 0, %s22
    %p19 = scmp.ge.s32.totalorder %s18, 4
    %s25 = sphi 0, %s37
    %s26 = sphi 0, %s33
    %s27 = sphi 0, %s25
    %s28 = sphi 0, %s26
    %s29 = sphi 0, %s27
    %s30 = sphi 0, %s28
    %s42 = sphi 0, %s44
    %s45 = sphi 0, %s42
    %s46 = sphi 0, %s45
    %s62 = sphi 0, %s46
    %s68 = sphi 0, %s70
    %s71 = sphi 0, %s68
    %s72 = sphi 0, %s71
    %s88 = sphi 0, %s72
    %s94 = sphi 0, %s96
    %s97 = sphi 0, %s94
    %s98 = sphi 0, %s97
    %s114 = sphi 0, %s98
    %s118 = sphi 0, %s118
    %s120 = sphi 0, %s118
    %s121 = sphi 0, %s120
    %s135 = sphi 0, %s121
    %s139 = sphi 0, %s139
    %s141 = sphi 0, %s139
    %s142 = sphi 0, %s141
    %s156 = sphi 0, %s142
    %s160 = sphi 0, %s160
    %s162 = sphi 0, %s160
    %s163 = sphi 0, %s162
    %s177 = sphi 0, %s163
    %s181 = sphi 0, %s181
    %s183 = sphi 0, %s181
    %s184 = sphi 0, %s183
    %s198 = sphi 0, %s184
    %s204 = sphi 0, %s206
    %s207 = sphi 0, %s204
    %s208 = sphi 0, %s207
    %s224 = sphi 0, %s208
    %s230 = sphi 0, %s232
    %s233 = sphi 0, %s230
    %s234 = sphi 0, %s233
    %s250 = sphi 0, %s234
    %s258 = sphi 0, %s260
    %s261 = sphi 0, %s258
    %s262 = sphi 0, %s261
    %s278 = sphi 0, %s262
    %s286 = sphi 0, %s288
    %s289 = sphi 0, %s286
    %s290 = sphi 0, %s289
    %s306 = sphi 0, %s290
    %s314 = sphi 0, %s316
    %s317 = sphi 0, %s314
    %s318 = sphi 0, %s317
    %s334 = sphi 0, %s318
  $region4: #{ltx_block_forward.6} parent=0 // loop_header_branch
    %21 = sbr.rel (%p19) target = $region8
  $region5: #{ltx_block_forward.6} parent=0 // loop_body
    %s23 = ssub.s32 %s18, 1
    %s24 = ssub.s32 %s18, 2
    %s31 = sadd.s32 1, %s26
    %p32 = scmp.ge.s32.totalorder %s31, 1
    %s33 = scalar_select %p32, 0, %s31
    %s34 = sadd.s32 1, %s25
    %s35 = scalar_select %p32, %s34, %s25
    %p36 = scmp.ge.s32.totalorder %s35, 2
    %s37 = scalar_select %p36, 0, %s35
    %s38 = ssub.s32 %s25, %s37
    %s39 = ssub.s32 %s26, %s33
    %s40 = sor.u32 %s38, %s39
    %p41 = scmp.eq.s32.totalorder %s40, 0
    %s43 = sadd.s32 %s42, 1
    %s44 = scalar_select %p41, %s42, %s43
    %p47 = pneg %p41
    %p48 = scmp.eq.s32.totalorder %s18, 1
    %p49 = por %p47, %p48
    %p50 = scmp.ne.s32.totalorder %s42, %s45
    %p51 = scmp.eq.s32.totalorder %s18, 0
    %p52 = por %p50, %p51
    %p53 = scmp.ne.s32.totalorder %s42, %s45
    %p54 = scmp.eq.s32.totalorder %s23, 1
    %p55 = por %p53, %p54
    %p56 = scmp.ne.s32.totalorder %s45, %s46
    %p57 = scmp.eq.s32.totalorder %s23, 0
    %p58 = por %p56, %p57
    %p59 = scmp.ne.s32.totalorder %s45, %s46
    %p60 = scmp.eq.s32.totalorder %s24, 1
    %p61 = por %p59, %p60
    %p63 = scmp.ne.s32.totalorder %s46, %s62
    %p64 = scmp.eq.s32.totalorder %s24, 0
    %p65 = por %p63, %p64
    %s66 = ssub.s32 %s25, %s37
    %p67 = scmp.eq.s32.totalorder %s66, 0
    %s69 = sadd.s32 %s68, 1
    %s70 = scalar_select %p67, %s68, %s69
    %p73 = pneg %p67
    %p74 = scmp.eq.s32.totalorder %s18, 1
    %p75 = por %p73, %p74
    %p76 = scmp.ne.s32.totalorder %s68, %s71
    %p77 = scmp.eq.s32.totalorder %s18, 0
    %p78 = por %p76, %p77
    %p79 = scmp.ne.s32.totalorder %s68, %s71
    %p80 = scmp.eq.s32.totalorder %s23, 1
    %p81 = por %p79, %p80
    %p82 = scmp.ne.s32.totalorder %s71, %s72
    %p83 = scmp.eq.s32.totalorder %s23, 0
    %p84 = por %p82, %p83
    %p85 = scmp.ne.s32.totalorder %s71, %s72
    %p86 = scmp.eq.s32.totalorder %s24, 1
    %p87 = por %p85, %p86
    %p89 = scmp.ne.s32.totalorder %s72, %s88
    %p90 = scmp.eq.s32.totalorder %s24, 0
    %p91 = por %p89, %p90
    %s92 = ssub.s32 %s25, %s37
    %p93 = scmp.eq.s32.totalorder %s92, 0
    %s95 = sadd.s32 %s94, 1
    %s96 = scalar_select %p93, %s94, %s95
    %p99 = pneg %p93
    %p100 = scmp.eq.s32.totalorder %s18, 1
    %p101 = por %p99, %p100
    %p102 = scmp.ne.s32.totalorder %s94, %s97
    %p103 = scmp.eq.s32.totalorder %s18, 0
    %p104 = por %p102, %p103
    %p105 = scmp.ne.s32.totalorder %s94, %s97
    %p106 = scmp.eq.s32.totalorder %s23, 1
    %p107 = por %p105, %p106
    %p108 = scmp.ne.s32.totalorder %s97, %s98
    %p109 = scmp.eq.s32.totalorder %s23, 0
    %p110 = por %p108, %p109
    %p111 = scmp.ne.s32.totalorder %s97, %s98
    %p112 = scmp.eq.s32.totalorder %s24, 1
    %p113 = por %p111, %p112
    %p115 = scmp.ne.s32.totalorder %s98, %s114
    %p116 = scmp.eq.s32.totalorder %s24, 0
    %p117 = por %p115, %p116
    %s119 = sadd.s32 %s118, 1
    %p122 = scmp.eq.s32.totalorder %s18, 1
    %p123 = scmp.ne.s32.totalorder %s118, %s120
    %p124 = scmp.eq.s32.totalorder %s18, 0
    %p125 = por %p123, %p124
    %p126 = scmp.ne.s32.totalorder %s118, %s120
    %p127 = scmp.eq.s32.totalorder %s23, 1
    %p128 = por %p126, %p127
    %p129 = scmp.ne.s32.totalorder %s120, %s121
    %p130 = scmp.eq.s32.totalorder %s23, 0
    %p131 = por %p129, %p130
    %p132 = scmp.ne.s32.totalorder %s120, %s121
    %p133 = scmp.eq.s32.totalorder %s24, 1
    %p134 = por %p132, %p133
    %p136 = scmp.ne.s32.totalorder %s121, %s135
    %p137 = scmp.eq.s32.totalorder %s24, 0
    %p138 = por %p136, %p137
    %s140 = sadd.s32 %s139, 1
    %p143 = scmp.eq.s32.totalorder %s18, 1
    %p144 = scmp.ne.s32.totalorder %s139, %s141
    %p145 = scmp.eq.s32.totalorder %s18, 0
    %p146 = por %p144, %p145
    %p147 = scmp.ne.s32.totalorder %s139, %s141
    %p148 = scmp.eq.s32.totalorder %s23, 1
    %p149 = por %p147, %p148
    %p150 = scmp.ne.s32.totalorder %s141, %s142
    %p151 = scmp.eq.s32.totalorder %s23, 0
    %p152 = por %p150, %p151
    %p153 = scmp.ne.s32.totalorder %s141, %s142
    %p154 = scmp.eq.s32.totalorder %s24, 1
    %p155 = por %p153, %p154
    %p157 = scmp.ne.s32.totalorder %s142, %s156
    %p158 = scmp.eq.s32.totalorder %s24, 0
    %p159 = por %p157, %p158
    %s161 = sadd.s32 %s160, 1
    %p164 = scmp.eq.s32.totalorder %s18, 1
    %p165 = scmp.ne.s32.totalorder %s160, %s162
    %p166 = scmp.eq.s32.totalorder %s18, 0
    %p167 = por %p165, %p166
    %p168 = scmp.ne.s32.totalorder %s160, %s162
    %p169 = scmp.eq.s32.totalorder %s23, 1
    %p170 = por %p168, %p169
    %p171 = scmp.ne.s32.totalorder %s162, %s163
    %p172 = scmp.eq.s32.totalorder %s23, 0
    %p173 = por %p171, %p172
    %p174 = scmp.ne.s32.totalorder %s162, %s163
    %p175 = scmp.eq.s32.totalorder %s24, 1
    %p176 = por %p174, %p175
    %p178 = scmp.ne.s32.totalorder %s163, %s177
    %p179 = scmp.eq.s32.totalorder %s24, 0
    %p180 = por %p178, %p179
    %s182 = sadd.s32 %s181, 1
    %p185 = scmp.eq.s32.totalorder %s18, 1
    %p186 = scmp.ne.s32.totalorder %s181, %s183
    %p187 = scmp.eq.s32.totalorder %s18, 0
    %p188 = por %p186, %p187
    %p189 = scmp.ne.s32.totalorder %s181, %s183
    %p190 = scmp.eq.s32.totalorder %s23, 1
    %p191 = por %p189, %p190
    %p192 = scmp.ne.s32.totalorder %s183, %s184
    %p193 = scmp.eq.s32.totalorder %s23, 0
    %p194 = por %p192, %p193
    %p195 = scmp.ne.s32.totalorder %s183, %s184
    %p196 = scmp.eq.s32.totalorder %s24, 1
    %p197 = por %p195, %p196
    %p199 = scmp.ne.s32.totalorder %s184, %s198
    %p200 = scmp.eq.s32.totalorder %s24, 0
    %p201 = por %p199, %p200
    %s202 = ssub.s32 %s26, %s33
    %p203 = scmp.eq.s32.totalorder %s202, 0
    %s205 = sadd.s32 %s204, 1
    %s206 = scalar_select %p203, %s204, %s205
    %p209 = pneg %p203
    %p210 = scmp.eq.s32.totalorder %s18, 1
    %p211 = por %p209, %p210
    %p212 = scmp.ne.s32.totalorder %s204, %s207
    %p213 = scmp.eq.s32.totalorder %s18, 0
    %p214 = por %p212, %p213
    %p215 = scmp.ne.s32.totalorder %s204, %s207
    %p216 = scmp.eq.s32.totalorder %s23, 1
    %p217 = por %p215, %p216
    %p218 = scmp.ne.s32.totalorder %s207, %s208
    %p219 = scmp.eq.s32.totalorder %s23, 0
    %p220 = por %p218, %p219
    %p221 = scmp.ne.s32.totalorder %s207, %s208
    %p222 = scmp.eq.s32.totalorder %s24, 1
    %p223 = por %p221, %p222
    %p225 = scmp.ne.s32.totalorder %s208, %s224
    %p226 = scmp.eq.s32.totalorder %s24, 0
    %p227 = por %p225, %p226
    %s228 = ssub.s32 %s26, %s33
    %p229 = scmp.eq.s32.totalorder %s228, 0
    %s231 = sadd.s32 %s230, 1
    %s232 = scalar_select %p229, %s230, %s231
    %p235 = pneg %p229
    %p236 = scmp.eq.s32.totalorder %s18, 1
    %p237 = por %p235, %p236
    %p238 = scmp.ne.s32.totalorder %s230, %s233
    %p239 = scmp.eq.s32.totalorder %s18, 0
    %p240 = por %p238, %p239
    %p241 = scmp.ne.s32.totalorder %s230, %s233
    %p242 = scmp.eq.s32.totalorder %s23, 1
    %p243 = por %p241, %p242
    %p244 = scmp.ne.s32.totalorder %s233, %s234
    %p245 = scmp.eq.s32.totalorder %s23, 0
    %p246 = por %p244, %p245
    %p247 = scmp.ne.s32.totalorder %s233, %s234
    %p248 = scmp.eq.s32.totalorder %s24, 1
    %p249 = por %p247, %p248
    %p251 = scmp.ne.s32.totalorder %s234, %s250
    %p252 = scmp.eq.s32.totalorder %s24, 0
    %p253 = por %p251, %p252
    %s254 = ssub.s32 %s25, %s37
    %s255 = ssub.s32 %s26, %s33
    %s256 = sor.u32 %s254, %s255
    %p257 = scmp.eq.s32.totalorder %s256, 0
    %s259 = sadd.s32 %s258, 1
    %s260 = scalar_select %p257, %s258, %s259
    %p263 = pneg %p257
    %p264 = scmp.eq.s32.totalorder %s18, 1
    %p265 = por %p263, %p264
    %p266 = scmp.ne.s32.totalorder %s258, %s261
    %p267 = scmp.eq.s32.totalorder %s18, 0
    %p268 = por %p266, %p267
    %p269 = scmp.ne.s32.totalorder %s258, %s261
    %p270 = scmp.eq.s32.totalorder %s23, 1
    %p271 = por %p269, %p270
    %p272 = scmp.ne.s32.totalorder %s261, %s262
    %p273 = scmp.eq.s32.totalorder %s23, 0
    %p274 = por %p272, %p273
    %p275 = scmp.ne.s32.totalorder %s261, %s262
    %p276 = scmp.eq.s32.totalorder %s24, 1
    %p277 = por %p275, %p276
    %p279 = scmp.ne.s32.totalorder %s262, %s278
    %p280 = scmp.eq.s32.totalorder %s24, 0
    %p281 = por %p279, %p280
    %s282 = ssub.s32 %s25, %s37
    %s283 = ssub.s32 %s26, %s33
    %s284 = sor.u32 %s282, %s283
    %p285 = scmp.eq.s32.totalorder %s284, 0
    %s287 = sadd.s32 %s286, 1
    %s288 = scalar_select %p285, %s286, %s287
    %p291 = pneg %p285
    %p292 = scmp.eq.s32.totalorder %s18, 1
    %p293 = por %p291, %p292
    %p294 = scmp.ne.s32.totalorder %s286, %s289
    %p295 = scmp.eq.s32.totalorder %s18, 0
    %p296 = por %p294, %p295
    %p297 = scmp.ne.s32.totalorder %s286, %s289
    %p298 = scmp.eq.s32.totalorder %s23, 1
    %p299 = por %p297, %p298
    %p300 = scmp.ne.s32.totalorder %s289, %s290
    %p301 = scmp.eq.s32.totalorder %s23, 0
    %p302 = por %p300, %p301
    %p303 = scmp.ne.s32.totalorder %s289, %s290
    %p304 = scmp.eq.s32.totalorder %s24, 1
    %p305 = por %p303, %p304
    %p307 = scmp.ne.s32.totalorder %s290, %s306
    %p308 = scmp.eq.s32.totalorder %s24, 0
    %p309 = por %p307, %p308
    %s310 = ssub.s32 %s25, %s37
    %s311 = ssub.s32 %s26, %s33
    %s312 = sor.u32 %s310, %s311
    %p313 = scmp.eq.s32.totalorder %s312, 0
    %s315 = sadd.s32 %s314, 1
    %s316 = scalar_select %p313, %s314, %s315
    %p319 = pneg %p313
    %p320 = scmp.eq.s32.totalorder %s18, 1
    %p321 = por %p319, %p320
    %p322 = scmp.ne.s32.totalorder %s314, %s317
    %p323 = scmp.eq.s32.totalorder %s18, 0
    %p324 = por %p322, %p323
    %p325 = scmp.ne.s32.totalorder %s314, %s317
    %p326 = scmp.eq.s32.totalorder %s23, 1
    %p327 = por %p325, %p326
    %p328 = scmp.ne.s32.totalorder %s317, %s318
    %p329 = scmp.eq.s32.totalorder %s23, 0
    %p330 = por %p328, %p329
    %p331 = scmp.ne.s32.totalorder %s317, %s318
    %p332 = scmp.eq.s32.totalorder %s24, 1
    %p333 = por %p331, %p332
    %p335 = scmp.ne.s32.totalorder %s318, %s334
    %p336 = scmp.eq.s32.totalorder %s24, 0
    %p337 = por %p335, %p336
    %p338 = scmp.le.s32.totalorder 1, %s18
    %p339 = scmp.lt.s32.totalorder %s18, 3
    %p340 = pnand %p338, %p339
    %p341 = pneg %p340
    // Predicated region
    $region9: #{ltx_block_forward.6} parent=5 // pred_check
      _
    $region10: #{ltx_block_forward.6} parent=5 // pred_check_branch
      %343 = sbr.rel (%p340) target = $region12
    $region11: #{ltx_block_forward.6} parent=5 // pred_region
      %s344 = ssub.s32 %s18, 1
      // Predicated region
      $region13: #{ltx_block_forward.6} parent=11 // pred_check
        %p345 = pneg %p131
      $region14: #{ltx_block_forward.6} parent=11 // pred_check_branch
        %347 = sbr.rel (%p345) target = $region16
      $region15: #{ltx_block_forward.6} parent=11 // pred_region
        _
      $region16: #{ltx_block_forward.6} parent=11 // pred_fallthru
        _
      // Predicated region
      $region17: #{ltx_block_forward.6} parent=11 // pred_check
        %p348 = pneg %p152
      $region18: #{ltx_block_forward.6} parent=11 // pred_check_branch
        %350 = sbr.rel (%p348) target = $region20
      $region19: #{ltx_block_forward.6} parent=11 // pred_region
        _
      $region20: #{ltx_block_forward.6} parent=11 // pred_fallthru
        _
      // Predicated region
      $region21: #{ltx_block_forward.6} parent=11 // pred_check
        %p351 = pneg %p173
      $region22: #{ltx_block_forward.6} parent=11 // pred_check_branch
        %353 = sbr.rel (%p351) target = $region24
      $region23: #{ltx_block_forward.6} parent=11 // pred_region
        _
      $region24: #{ltx_block_forward.6} parent=11 // pred_fallthru
        _
      // Predicated region
      $region25: #{ltx_block_forward.6} parent=11 // pred_check
        %p354 = pneg %p194
      $region26: #{ltx_block_forward.6} parent=11 // pred_check_branch
        %356 = sbr.rel (%p354) target = $region28
      $region27: #{ltx_block_forward.6} parent=11 // pred_region
        _
      $region28: #{ltx_block_forward.6} parent=11 // pred_fallthru
        _
      // Predicated region
      $region29: #{ltx_block_forward.6} parent=11 // pred_check
        %p357 = pneg %p220
      $region30: #{ltx_block_forward.6} parent=11 // pred_check_branch
        %359 = sbr.rel (%p357) target = $region32
      $region31: #{ltx_block_forward.6} parent=11 // pred_region
        %s360 = smul.u32 2, %s28
        %p361 = scmp.lt.s32.totalorder %s360, 1
        %s362 = scalar_select %p361, %s360, 1
        %s363 = smul.addr %s362, 8
        %s364 = scalar_lea.vmem %s7, %s363
        %s365 = smul.u32 2, %s28
      $region32: #{ltx_block_forward.6} parent=11 // pred_fallthru
        _
      // Predicated region
      $region33: #{ltx_block_forward.6} parent=11 // pred_check
        %p366 = pneg %p246
      $region34: #{ltx_block_forward.6} parent=11 // pred_check_branch
        %368 = sbr.rel (%p366) target = $region36
      $region35: #{ltx_block_forward.6} parent=11 // pred_region
        %s369 = smul.u32 2, %s28
        %p370 = scmp.lt.s32.totalorder %s369, 1
        %s371 = scalar_select %p370, %s369, 1
        %s372 = smul.addr %s371, 8
        %s373 = scalar_lea.vmem %s8, %s372
        %s374 = smul.u32 2, %s28
      $region36: #{ltx_block_forward.6} parent=11 // pred_fallthru
        _
    $region12: #{ltx_block_forward.6} parent=5 // pred_fallthru
      _
    %p375 = scmp.lt.s32.totalorder %s18, 2
    // Predicated region
    $region37: #{ltx_block_forward.6} parent=5 // pred_check
      %p376 = pneg %p375
    $region38: #{ltx_block_forward.6} parent=5 // pred_check_branch
      %378 = sbr.rel (%p376) target = $region40
    $region39: #{ltx_block_forward.6} parent=5 // pred_region
      // Predicated region
      $region41: #{ltx_block_forward.6} parent=39 // pred_check
        %p379 = pneg %p52
      $region42: #{ltx_block_forward.6} parent=39 // pred_check_branch
        %381 = sbr.rel (%p379) target = $region44
      $region43: #{ltx_block_forward.6} parent=39 // pred_region
        %s382 = smul.u32 2, %s26
        %p383 = scmp.lt.s32.totalorder %s25, 1
        %s384 = scalar_select %p383, %s25, 1
        %p385 = scmp.lt.s32.totalorder %s382, 1
        %s386 = scalar_select %p385, %s382, 1
        %s387 = smul.addr %s384, 2
        %s388 = sadd.s32 %s386, %s387
        %s389 = smul.addr %s388, 8
        %s390 = scalar_lea.vmem %s0, %s389
        %s391 = smul.u32 2, %s26
      $region44: #{ltx_block_forward.6} parent=39 // pred_fallthru
        _
      // Predicated region
      $region45: #{ltx_block_forward.6} parent=39 // pred_check
        %p392 = pneg %p78
      $region46: #{ltx_block_forward.6} parent=39 // pred_check_branch
        %394 = sbr.rel (%p392) target = $region48
      $region47: #{ltx_block_forward.6} parent=39 // pred_region
        %p395 = scmp.lt.s32.totalorder %s25, 1
        %s396 = scalar_select %p395, %s25, 1
        %s397 = scalar_lea.vmem %s1, %s396
      $region48: #{ltx_block_forward.6} parent=39 // pred_fallthru
        _
      // Predicated region
      $region49: #{ltx_block_forward.6} parent=39 // pred_check
        %p398 = pneg %p104
      $region50: #{ltx_block_forward.6} parent=39 // pred_check_branch
        %400 = sbr.rel (%p398) target = $region52
      $region51: #{ltx_block_forward.6} parent=39 // pred_region
        %p401 = scmp.lt.s32.totalorder %s25, 1
        %s402 = scalar_select %p401, %s25, 1
        %s403 = scalar_lea.vmem %s2, %s402
      $region52: #{ltx_block_forward.6} parent=39 // pred_fallthru
        _
    $region40: #{ltx_block_forward.6} parent=5 // pred_fallthru
      _
    %p404 = scmp.le.s32.totalorder 1, %s18
    %p405 = scmp.lt.s32.totalorder %s18, 3
    %p406 = pnand %p404, %p405
    %p407 = pneg %p406
    // Predicated region
    $region53: #{ltx_block_forward.6} parent=5 // pred_check
      _
    $region54: #{ltx_block_forward.6} parent=5 // pred_check_branch
      %409 = sbr.rel (%p406) target = $region56
    $region55: #{ltx_block_forward.6} parent=5 // pred_region
      %s410 = ssub.s32 %s18, 1
      %s411 = smul.u32 2, %s28
      %p412 = scmp.lt.s32.totalorder %s27, 1
      %s413 = scalar_select %p412, %s27, 1
      %p414 = scmp.lt.s32.totalorder %s411, 1
      %s415 = scalar_select %p414, %s411, 1
      %s416 = smul.addr %s413, 2
      %s417 = sadd.s32 %s415, %s416
      %s418 = smul.addr %s417, 8
      %s419 = scalar_lea.vmem %s0, %s418
      %p420 = pneg %p58
      %p421 = pneg %p55
      %p422 = scmp.lt.s32.totalorder %s27, 1
      %s423 = scalar_select %p422, %s27, 1
      %s424 = scalar_lea.vmem %s1, %s423
      %p425 = pneg %p84
      %p426 = pneg %p81
      %p427 = scmp.lt.s32.totalorder %s27, 1
      %s428 = scalar_select %p427, %s27, 1
      %s429 = scalar_lea.vmem %s2, %s428
      %p430 = pneg %p110
      %p431 = pneg %p107
      %p432 = pneg %p131
      %p433 = pneg %p128
      %p434 = pneg %p152
      %p435 = pneg %p149
      %p436 = pneg %p173
      %p437 = pneg %p170
      %p438 = pneg %p194
      %p439 = pneg %p191
      %s440 = smul.u32 2, %s28
      %p441 = scmp.lt.s32.totalorder %s440, 1
      %s442 = scalar_select %p441, %s440, 1
      %s443 = smul.addr %s442, 8
      %s444 = scalar_lea.vmem %s7, %s443
      %p445 = pneg %p220
      %p446 = pneg %p217
      %s447 = smul.u32 2, %s28
      %p448 = scmp.lt.s32.totalorder %s447, 1
      %s449 = scalar_select %p448, %s447, 1
      %s450 = smul.addr %s449, 8
      %s451 = scalar_lea.vmem %s8, %s450
      %p452 = pneg %p246
      %p453 = pneg %p243
      %p454 = pneg %p274
      %p455 = pneg %p271
      %s456 = smul.u32 2, %s28
      %p457 = scmp.lt.s32.totalorder %s27, 1
      %s458 = scalar_select %p457, %s27, 1
      %p459 = scmp.lt.s32.totalorder %s456, 1
      %s460 = scalar_select %p459, %s456, 1
      %s461 = smul.addr %s458, 2
      %s462 = sadd.s32 %s460, %s461
      %s463 = smul.addr %s462, 4
      %s464 = scalar_lea.vmem %s9, %s463
      %p465 = pneg %p302
      %p466 = pneg %p299
      %s467 = smul.u32 2, %s28
      %p468 = scmp.lt.s32.totalorder %s27, 1
      %s469 = scalar_select %p468, %s27, 1
      %p470 = scmp.lt.s32.totalorder %s467, 1
      %s471 = scalar_select %p470, %s467, 1
      %s472 = smul.addr %s469, 2
      %s473 = sadd.s32 %s471, %s472
      %s474 = smul.addr %s473, 4
      %s475 = scalar_lea.vmem %s10, %s474
      %p476 = pneg %p330
      %p477 = pneg %p327
      %s478 = smul.u32 2, %s28
      %p479 = scmp.lt.s32.totalorder %s27, 1
      %s480 = scalar_select %p479, %s27, 1
      %p481 = scmp.lt.s32.totalorder %s478, 1
      %s482 = scalar_select %p481, %s478, 1
      %s483 = smul.addr %s480, 2
      %s484 = sadd.s32 %s482, %s483
      %s485 = smul.addr %s484, 4
      %s486 = scalar_lea.vmem %s11, %s485
      %s487 = smul.u32 2, %s28
      %p488 = scmp.lt.s32.totalorder %s27, 1
      %s489 = scalar_select %p488, %s27, 1
      %p490 = scmp.lt.s32.totalorder %s487, 1
      %s491 = scalar_select %p490, %s487, 1
      %s492 = smul.addr %s489, 2
      %s493 = sadd.s32 %s491, %s492
      %s494 = smul.addr %s493, 8
      %s495 = scalar_lea.vmem %s0, %s494
      %s496 = smul.u32 2, %s28
      %p497 = scmp.lt.s32.totalorder %s27, 1
      %s498 = scalar_select %p497, %s27, 1
      %s499 = scalar_lea.vmem %s1, %s498
      %p500 = scmp.lt.s32.totalorder %s27, 1
      %s501 = scalar_select %p500, %s27, 1
      %s502 = scalar_lea.vmem %s2, %s501
      %s503 = smul.u32 2, %s28
      %p504 = scmp.lt.s32.totalorder %s503, 1
      %s505 = scalar_select %p504, %s503, 1
      %s506 = smul.addr %s505, 8
      %s507 = scalar_lea.vmem %s7, %s506
      %s508 = smul.u32 2, %s28
      %s509 = smul.u32 2, %s28
      %p510 = scmp.lt.s32.totalorder %s509, 1
      %s511 = scalar_select %p510, %s509, 1
      %s512 = smul.addr %s511, 8
      %s513 = scalar_lea.vmem %s8, %s512
      %s514 = smul.u32 2, %s28
      %s515 = smul.u32 2, %s28
      %p516 = scmp.lt.s32.totalorder %s27, 1
      %s517 = scalar_select %p516, %s27, 1
      %p518 = scmp.lt.s32.totalorder %s515, 1
      %s519 = scalar_select %p518, %s515, 1
      %s520 = smul.addr %s517, 2
      %s521 = sadd.s32 %s519, %s520
      %s522 = smul.addr %s521, 4
      %s523 = scalar_lea.vmem %s9, %s522
      %s524 = smul.u32 2, %s28
      %s525 = smul.u32 2, %s28
      %p526 = scmp.lt.s32.totalorder %s27, 1
      %s527 = scalar_select %p526, %s27, 1
      %p528 = scmp.lt.s32.totalorder %s525, 1
      %s529 = scalar_select %p528, %s525, 1
      %s530 = smul.addr %s527, 2
      %s531 = sadd.s32 %s529, %s530
      %s532 = smul.addr %s531, 4
      %s533 = scalar_lea.vmem %s10, %s532
      %s534 = smul.u32 2, %s28
      %s535 = smul.u32 2, %s28
      %p536 = scmp.lt.s32.totalorder %s27, 1
      %s537 = scalar_select %p536, %s27, 1
      %p538 = scmp.lt.s32.totalorder %s535, 1
      %s539 = scalar_select %p538, %s535, 1
      %s540 = smul.addr %s537, 2
      %s541 = sadd.s32 %s539, %s540
      %s542 = smul.addr %s541, 4
      %s543 = scalar_lea.vmem %s11, %s542
      %s544 = smul.u32 2, %s28
      %v546 = vld [vmem:[%s495] sm:$0xff]
      %v547 = vld [vmem:[%s495 + $0x8] sm:$0xff]
      %v548 = vmul.f32 %v546, %v546
      %v549 = vmul.f32 %v547, %v547
      %vm550 = vcmask 261120
      %v551 = vsel %vm550, %v548, 0.0
      %552 = vadd.xlane.f32.xlu0 %v551
      %v553 = vpop.xlane.xlu0 %552
      %v554 = vsel %vm550, %v549, 0.0
      %555 = vadd.xlane.f32.xlu0 %v554
      %v556 = vpop.xlane.xlu0 %555
      %v557 = vrcp.pop 32.0
      %v558 = vmul.f32 %v553, %v557
      %v559 = vmul.f32 %v556, %v557
      %v560 = vadd.f32 %v558, 1e-06
      %v561 = vadd.f32 %v559, 1e-06
      %v562 = vrsqrt.pop %v560
      %v563 = vrsqrt.pop %v561
      %v564 = vmul.f32 %v546, %v562
      %v565 = vmul.f32 %v547, %v563
      %v566 = vld [vmem:[%s499] sm:$0x1]
      %v567 = vadd.f32 %v566, 1.0
      %v569 = vlaneseq
      %v570 = vshrl.u32 %v569, 7
      %v571 = vsub.s32 0, %v570
      %v572 = vrot.slane %v567, %v571
      %v574 = vmul.f32 %v564, %v572
      %v575 = vmul.f32 %v565, %v572
      %v576 = vld [vmem:[%s502] sm:$0x1]
      %v578 = vlaneseq
      %v579 = vshrl.u32 %v578, 7
      %v580 = vsub.s32 0, %v579
      %v581 = vrot.slane %v576, %v580
      %v583 = vadd.f32 %v574, %v581
      %v584 = vadd.f32 %v575, %v581
      %v585 = vpack.c.bf16 %v584, %v583
      %v586 = vld [vmem:[%s3] sm:$0xf]
      %v587 = vld [vmem:[%s3 + $0x4] sm:$0xf]
      %v588 = vld [vmem:[%s3 + $0x8] sm:$0xf]
      %v589 = vld [vmem:[%s3 + $0xc] sm:$0xf]
      %v590 = vld [vmem:[%s4] sm:$0x1]
      %v592 = vlaneseq
      %v593 = vshrl.u32 %v592, 7
      %v594 = vsub.s32 0, %v593
      %v595 = vrot.slane %v590, %v594
      %v601 = vunpack.c.l.b16 %v586
      %v602 = vunpack.c.l.b16 %v587
      %v603 = vunpack.c.l.b16 %v588
      %v604 = vunpack.c.l.b16 %v589
      %v605 = vpack.c.b16 %v602, %v601
      %v606 = vpack.c.b16 %v604, %v603
      %v610 = vsel %vm550, %v585, 0
      %612 = vmatprep.subr.bf16.mxu0 0
      %613 = vmatpush1.bf16.msra.mxu0 0
      %614 = vmatprep.subr.bf16.mxu0 0
      %615 = vmatpush1.bf16.msra.mxu0 0
      %616 = vmatprep.subr.bf16.mxu0 0
      %617 = vmatpush1.bf16.msra.mxu0 0
      %618 = vmatprep.subr.bf16.mxu0 0
      %619 = vmatpush1.bf16.msra.mxu0 0
      %620 = vmatprep.subr.bf16.mxu0 0
      %621 = vmatpush1.bf16.msra.mxu0 0
      %622 = vmatprep.subr.bf16.mxu0 0
      %623 = vmatpush1.bf16.msra.mxu0 0
      %624 = vmatprep.subr.bf16.mxu0 0
      %625 = vmatpush1.bf16.msra.mxu0 %v606
      %626 = vmatprep.subr.bf16.mxu0 0
      %627 = vmatpush1.bf16.msra.mxu0 %v605
      %628 = vmatprep.subr.bf16.mxu0 0
      %629 = vmatpush2.bf16.msra.mxu0 0
      %630 = vmatprep.subr.bf16.mxu0 0
      %631 = vmatpush2.bf16.msra.mxu0 0
      %632 = vmatprep.subr.bf16.mxu0 0
      %633 = vmatpush2.bf16.msra.mxu0 0
      %634 = vmatprep.subr.bf16.mxu0 0
      %635 = vmatpush2.bf16.msra.mxu0 0
      %636 = vmatprep.subr.bf16.mxu0 0
      %637 = vmatpush2.bf16.msra.mxu0 0
      %638 = vmatprep.subr.bf16.mxu0 0
      %639 = vmatpush2.bf16.msra.mxu0 0
      %640 = vmatprep.subr.bf16.mxu0 0
      %641 = vmatpush2.bf16.msra.mxu0 0
      %642 = vmatprep.subr.bf16.mxu0 0
      %643 = vmatpush2.bf16.msra.mxu0 0
      %644 = vmatprep.mubr.bf16.mxu0 0
      %645 = vmatmul.mubr.bf16.gmra.mxu0 %v610
      %v646 = vpop.f32.mrf.mxu0
      %v647 = vadd.f32 %v595, %v646
      %v648 = vpop.f32.mrf.mxu0
      %v649 = vpop.f32.mrf.mxu0
      %v650 = vadd.f32 %v595, %v649
      %v651 = vpop.f32.mrf.mxu0
      %652 = vdwg.mxu0
      %v653 = vmul.f32 %v647, %v647
      %v654 = vmul.f32 %v650, %v650
      %v655 = vsel %vm550, %v653, 0.0
      %656 = vadd.xlane.f32.xlu0 %v655
      %v657 = vpop.xlane.xlu0 %656
      %v658 = vsel %vm550, %v654, 0.0
      %659 = vadd.xlane.f32.xlu0 %v658
      %v660 = vpop.xlane.xlu0 %659
      %v661 = vmul.f32 %v657, %v557
      %v662 = vmul.f32 %v660, %v557
      %v663 = vadd.f32 %v661, 1e-05
      %v664 = vadd.f32 %v662, 1e-05
      %v665 = vrsqrt.pop %v663
      %v666 = vrsqrt.pop %v664
      %v667 = vmul.f32 %v647, %v665
      %v668 = vmul.f32 %v650, %v666
      %v669 = vld [vmem:[%s5] sm:$0x1]
      %v671 = vlaneseq
      %v672 = vshrl.u32 %v671, 7
      %v673 = vsub.s32 0, %v672
      %v674 = vrot.slane %v669, %v673
      %v676 = vmul.f32 %v667, %v674
      %v677 = vmul.f32 %v668, %v674
      %680 = vrot.lane.b32.xlu0 %v653, 96
      %v681 = vpop.permute.xlu0 %680
      %682 = vrot.lane.b32.xlu0 %v654, 96
      %v683 = vpop.permute.xlu0 %682
      %v686 = vsel %vm550, %v681, 0.0
      %687 = vadd.xlane.f32.xlu0 %v686
      %v688 = vpop.xlane.xlu0 %687
      %v689 = vsel %vm550, %v683, 0.0
      %690 = vadd.xlane.f32.xlu0 %v689
      %v691 = vpop.xlane.xlu0 %690
      %v692 = vmul.f32 %v688, %v557
      %v693 = vmul.f32 %v691, %v557
      %v694 = vadd.f32 %v692, 1e-05
      %v695 = vadd.f32 %v693, 1e-05
      %v696 = vrsqrt.pop %v694
      %v697 = vrsqrt.pop %v695
      %v698 = vmul.f32 %v647, %v696
      %v699 = vmul.f32 %v650, %v697
      %v700 = vld [vmem:[%s6] sm:$0x1]
      %v702 = vlaneseq
      %v703 = vshrl.u32 %v702, 7
      %v704 = vsub.s32 0, %v703
      %v705 = vrot.slane %v700, %v704
      %706 = vrot.lane.b32.xlu0 %v705, 32
      %v707 = vpop.permute.xlu0 %706
      %v709 = vmul.f32 %v698, %v707
      %v710 = vmul.f32 %v699, %v707
      %v711 = vld [vmem:[%s507] sm:$0xff]
      %v712 = vld [vmem:[%s507 + $0x8] sm:$0xff]
      %v713 = vld [vmem:[%s513] sm:$0xff]
      %v714 = vld [vmem:[%s513 + $0x8] sm:$0xff]
      %v715 = vmul.f32 %v676, %v711
      %v716 = vmul.f32 %v677, %v712
      %v717 = vlaneseq
      %v718 = vshrl.u32 %v717, 7
      %v719 = vadd.s32 %v718, 8
      %v720 = vadd.s32 %v718, 16
      %v721 = vadd.s32 %v718, 24
      %v722 = vlaneseq
      %v723 = vand.u32 %v722, 127
      %v724 = vxor.u32 %v718, 1
      %v725 = vxor.u32 %v719, 1
      %v726 = vxor.u32 %v720, 1
      %v727 = vxor.u32 %v721, 1
      %vm728 = vcmp.eq.s32.totalorder %v724, %v723
      %vm729 = vcmp.eq.s32.totalorder %v725, %v723
      %vm730 = vcmp.eq.s32.totalorder %v726, %v723
      %vm731 = vcmp.eq.s32.totalorder %v727, %v723
      %v732 = vsel %vm728, 1, 0
      %v733 = vsel %vm729, 1, 0
      %v734 = vsel %vm730, 1, 0
      %v735 = vsel %vm731, 1, 0
      %v736 = vcvt.s32.f32 %v732
      %v737 = vcvt.s32.f32 %v733
      %v738 = vcvt.s32.f32 %v734
      %v739 = vcvt.s32.f32 %v735
      %v741 = vsel %vm550, %v676, 0
      %v744 = vsel %vm550, %v677, 0
      %746 = vmatprep.subr.mxu0 0.0
      %747 = vmatpush1.msra.mxu0 0.0
      %748 = vmatprep.subr.mxu0 0.0
      %749 = vmatpush1.msra.mxu0 0.0
      %750 = vmatprep.subr.mxu0 0.0
      %751 = vmatpush1.msra.mxu0 0.0
      %752 = vmatprep.subr.mxu0 0.0
      %753 = vmatpush1.msra.mxu0 0.0
      %754 = vmatprep.subr.mxu0 0.0
      %755 = vmatpush1.msra.mxu0 0.0
      %756 = vmatprep.subr.mxu0 0.0
      %757 = vmatpush1.msra.mxu0 0.0
      %758 = vmatprep.subr.mxu0 0.0
      %759 = vmatpush1.msra.mxu0 0.0
      %760 = vmatprep.subr.mxu0 0.0
      %761 = vmatpush1.msra.mxu0 0.0
      %762 = vmatprep.subr.mxu0 0.0
      %763 = vmatpush1.msra.mxu0 0.0
      %764 = vmatprep.subr.mxu0 0.0
      %765 = vmatpush1.msra.mxu0 0.0
      %766 = vmatprep.subr.mxu0 0.0
      %767 = vmatpush1.msra.mxu0 0.0
      %768 = vmatprep.subr.mxu0 0.0
      %769 = vmatpush1.msra.mxu0 0.0
      %770 = vmatprep.subr.mxu0 0.0
      %771 = vmatpush1.msra.mxu0 %v739
      %772 = vmatprep.subr.mxu0 0.0
      %773 = vmatpush1.msra.mxu0 %v738
      %774 = vmatprep.subr.mxu0 0.0
      %775 = vmatpush1.msra.mxu0 %v737
      %776 = vmatprep.subr.mxu0 0.0
      %777 = vmatpush1.msra.mxu0 %v736
      %778 = vmatprep.subr.mxu0 0.0
      %779 = vmatpush2.msra.mxu0 0.0
      %780 = vmatprep.subr.mxu0 0.0
      %781 = vmatpush2.msra.mxu0 0.0
      %782 = vmatprep.subr.mxu0 0.0
      %783 = vmatpush2.msra.mxu0 0.0
      %784 = vmatprep.subr.mxu0 0.0
      %785 = vmatpush2.msra.mxu0 0.0
      %786 = vmatprep.subr.mxu0 0.0
      %787 = vmatpush2.msra.mxu0 0.0
      %788 = vmatprep.subr.mxu0 0.0
      %789 = vmatpush2.msra.mxu0 0.0
      %790 = vmatprep.subr.mxu0 0.0
      %791 = vmatpush2.msra.mxu0 0.0
      %792 = vmatprep.subr.mxu0 0.0
      %793 = vmatpush2.msra.mxu0 0.0
      %794 = vmatprep.subr.mxu0 0.0
      %795 = vmatpush2.msra.mxu0 0.0
      %796 = vmatprep.subr.mxu0 0.0
      %797 = vmatpush2.msra.mxu0 0.0
      %798 = vmatprep.subr.mxu0 0.0
      %799 = vmatpush2.msra.mxu0 0.0
      %800 = vmatprep.subr.mxu0 0.0
      %801 = vmatpush2.msra.mxu0 0.0
      %802 = vmatprep.subr.mxu0 0.0
      %803 = vmatpush2.msra.mxu0 0.0
      %804 = vmatprep.subr.mxu0 0.0
      %805 = vmatpush2.msra.mxu0 0.0
      %806 = vmatprep.subr.mxu0 0.0
      %807 = vmatpush2.msra.mxu0 0.0
      %808 = vmatprep.subr.mxu0 0.0
      %809 = vmatpush2.msra.mxu0 0.0
      %810 = vmatprep.mubr.f32.mxu0 0.0
      %811 = vmatmul.mubr.f32.gmra.mxu0 %v741
      %v812 = vpop.f32.mrf.mxu0
      %v813 = vadd.f32 0.0, %v812
      %v814 = vpop.f32.mrf.mxu0
      %815 = vmatprep.mubr.f32.mxu0 0.0
      %816 = vmatmul.mubr.f32.gmra.mxu0 %v744
      %v817 = vpop.f32.mrf.mxu0
      %v818 = vadd.f32 0.0, %v817
      %v819 = vpop.f32.mrf.mxu0
      %820 = vdwg.mxu0
      %v821 = vmul.f32 %v813, %v713
      %v822 = vmul.f32 %v818, %v714
      %v823 = vadd.f32 %v715, %v821
      %v824 = vadd.f32 %v716, %v822
      %827 = vrot.lane.b32.xlu0 %v711, 32
      %v828 = vpop.permute.xlu0 %827
      %829 = vrot.lane.b32.xlu0 %v712, 32
      %v830 = vpop.permute.xlu0 %829
      %v833 = vmul.f32 %v709, %v828
      %v834 = vmul.f32 %v710, %v830
      %837 = vrot.lane.b32.xlu0 %v709, 96
      %v838 = vpop.permute.xlu0 %837
      %839 = vrot.lane.b32.xlu0 %v710, 96
      %v840 = vpop.permute.xlu0 %839
      %v841 = vsel %vm550, %v838, 0
      %v843 = vsel %vm550, %v840, 0
      %845 = vmatprep.subr.mxu0 0.0
      %846 = vmatpush1.msra.mxu0 0.0
      %847 = vmatprep.subr.mxu0 0.0
      %848 = vmatpush1.msra.mxu0 0.0
      %849 = vmatprep.subr.mxu0 0.0
      %850 = vmatpush1.msra.mxu0 0.0
      %851 = vmatprep.subr.mxu0 0.0
      %852 = vmatpush1.msra.mxu0 0.0
      %853 = vmatprep.subr.mxu0 0.0
      %854 = vmatpush1.msra.mxu0 0.0
      %855 = vmatprep.subr.mxu0 0.0
      %856 = vmatpush1.msra.mxu0 0.0
      %857 = vmatprep.subr.mxu0 0.0
      %858 = vmatpush1.msra.mxu0 0.0
      %859 = vmatprep.subr.mxu0 0.0
      %860 = vmatpush1.msra.mxu0 0.0
      %861 = vmatprep.subr.mxu0 0.0
      %862 = vmatpush1.msra.mxu0 0.0
      %863 = vmatprep.subr.mxu0 0.0
      %864 = vmatpush1.msra.mxu0 0.0
      %865 = vmatprep.subr.mxu0 0.0
      %866 = vmatpush1.msra.mxu0 0.0
      %867 = vmatprep.subr.mxu0 0.0
      %868 = vmatpush1.msra.mxu0 0.0
      %869 = vmatprep.subr.mxu0 0.0
      %870 = vmatpush1.msra.mxu0 %v739
      %871 = vmatprep.subr.mxu0 0.0
      %872 = vmatpush1.msra.mxu0 %v738
      %873 = vmatprep.subr.mxu0 0.0
      %874 = vmatpush1.msra.mxu0 %v737
      %875 = vmatprep.subr.mxu0 0.0
      %876 = vmatpush1.msra.mxu0 %v736
      %877 = vmatprep.subr.mxu0 0.0
      %878 = vmatpush2.msra.mxu0 0.0
      %879 = vmatprep.subr.mxu0 0.0
      %880 = vmatpush2.msra.mxu0 0.0
      %881 = vmatprep.subr.mxu0 0.0
      %882 = vmatpush2.msra.mxu0 0.0
      %883 = vmatprep.subr.mxu0 0.0
      %884 = vmatpush2.msra.mxu0 0.0
      %885 = vmatprep.subr.mxu0 0.0
      %886 = vmatpush2.msra.mxu0 0.0
      %887 = vmatprep.subr.mxu0 0.0
      %888 = vmatpush2.msra.mxu0 0.0
      %889 = vmatprep.subr.mxu0 0.0
      %890 = vmatpush2.msra.mxu0 0.0
      %891 = vmatprep.subr.mxu0 0.0
      %892 = vmatpush2.msra.mxu0 0.0
      %893 = vmatprep.subr.mxu0 0.0
      %894 = vmatpush2.msra.mxu0 0.0
      %895 = vmatprep.subr.mxu0 0.0
      %896 = vmatpush2.msra.mxu0 0.0
      %897 = vmatprep.subr.mxu0 0.0
      %898 = vmatpush2.msra.mxu0 0.0
      %899 = vmatprep.subr.mxu0 0.0
      %900 = vmatpush2.msra.mxu0 0.0
      %901 = vmatprep.subr.mxu0 0.0
      %902 = vmatpush2.msra.mxu0 0.0
      %903 = vmatprep.subr.mxu0 0.0
      %904 = vmatpush2.msra.mxu0 0.0
      %905 = vmatprep.subr.mxu0 0.0
      %906 = vmatpush2.msra.mxu0 0.0
      %907 = vmatprep.subr.mxu0 0.0
      %908 = vmatpush2.msra.mxu0 0.0
      %909 = vmatprep.mubr.f32.mxu0 0.0
      %910 = vmatmul.mubr.f32.gmra.mxu0 %v841
      %v911 = vpop.f32.mrf.mxu0
      %v912 = vadd.f32 0.0, %v911
      %v913 = vpop.f32.mrf.mxu0
      %914 = vmatprep.mubr.f32.mxu0 0.0
      %915 = vmatmul.mubr.f32.gmra.mxu0 %v843
      %v916 = vpop.f32.mrf.mxu0
      %v917 = vadd.f32 0.0, %v916
      %v918 = vpop.f32.mrf.mxu0
      %919 = vdwg.mxu0
      %v920 = vmul.f32 %v912, %v713
      %v921 = vmul.f32 %v917, %v714
      %924 = vrot.lane.b32.xlu0 %v920, 32
      %v925 = vpop.permute.xlu0 %924
      %926 = vrot.lane.b32.xlu0 %v921, 32
      %v927 = vpop.permute.xlu0 %926
      %v930 = vadd.f32 %v833, %v925
      %v931 = vadd.f32 %v834, %v927
      %v932 = vpack.c.bf16 %v824, %v823
      %v934 = vunpack.c.l.b16 %v932
      %v935 = vunpack.c.h.b16 %v932
      %v936 = vpack.c.b16 %v934, %v934
      %v937 = vpack.c.b16 %v935, %v935
      %vm940 = vcmask 257024
      %941 = vst.msk [vmem:[%s523] sm:$0xf] %vm940, %v936
      %942 = vst.msk [vmem:[%s523 + $0x4] sm:$0xf] %vm940, %v937
      %v943 = vpack.c.bf16 %v931, %v930
      %v945 = vunpack.c.l.b16 %v943
      %v946 = vunpack.c.h.b16 %v943
      %v947 = vpack.c.b16 %v945, %v945
      %v948 = vpack.c.b16 %v946, %v946
      %949 = vrot.lane.b32.xlu0 %v947, 96
      %v950 = vpop.permute.xlu0 %949
      %951 = vrot.lane.b32.xlu0 %v948, 96
      %v952 = vpop.permute.xlu0 %951
      %955 = vst.msk [vmem:[%s533] sm:$0xf] %vm940, %v950
      %956 = vst.msk [vmem:[%s533 + $0x4] sm:$0xf] %vm940, %v952
      %v957 = vpack.c.bf16 %v650, %v647
      %v959 = vunpack.c.l.b16 %v957
      %v960 = vunpack.c.h.b16 %v957
      %v961 = vpack.c.b16 %v959, %v959
      %v962 = vpack.c.b16 %v960, %v960
      %963 = vrot.lane.b32.xlu0 %v961, 64
      %v964 = vpop.permute.xlu0 %963
      %965 = vrot.lane.b32.xlu0 %v962, 64
      %v966 = vpop.permute.xlu0 %965
      %969 = vst.msk [vmem:[%s543] sm:$0xf] %vm940, %v964
      %970 = vst.msk [vmem:[%s543 + $0x4] sm:$0xf] %vm940, %v966
      %s971 = smul.u32 2, %s28
      %p972 = scmp.lt.s32.totalorder %s27, 1
      %s973 = scalar_select %p972, %s27, 1
      %p974 = scmp.lt.s32.totalorder %s971, 1
      %s975 = scalar_select %p974, %s971, 1
      %s976 = smul.addr %s973, 2
      %s977 = sadd.s32 %s975, %s976
      %s978 = smul.addr %s977, 4
      %s979 = scalar_lea.vmem %s9, %s978
      %s980 = smul.u32 2, %s28
      %p981 = scmp.lt.s32.totalorder %s27, 1
      %s982 = scalar_select %p981, %s27, 1
      %p983 = scmp.lt.s32.totalorder %s980, 1
      %s984 = scalar_select %p983, %s980, 1
      %s985 = smul.addr %s982, 2
      %s986 = sadd.s32 %s984, %s985
      %s987 = smul.addr %s986, 4
      %s988 = scalar_lea.vmem %s10, %s987
      %s989 = smul.u32 2, %s28
      %p990 = scmp.lt.s32.totalorder %s27, 1
      %s991 = scalar_select %p990, %s27, 1
      %p992 = scmp.lt.s32.totalorder %s989, 1
      %s993 = scalar_select %p992, %s989, 1
      %s994 = smul.addr %s991, 2
      %s995 = sadd.s32 %s993, %s994
      %s996 = smul.addr %s995, 4
      %s997 = scalar_lea.vmem %s11, %s996
      // Predicated region
      $region57: #{ltx_block_forward.6} parent=55 // pred_check
        %p998 = pneg %p271
      $region58: #{ltx_block_forward.6} parent=55 // pred_check_branch
        %1000 = sbr.rel (%p998) target = $region60
      $region59: #{ltx_block_forward.6} parent=55 // pred_region
        %s1001 = smul.u32 2, %s28
      $region60: #{ltx_block_forward.6} parent=55 // pred_fallthru
        _
      // Predicated region
      $region61: #{ltx_block_forward.6} parent=55 // pred_check
        %p1002 = pneg %p299
      $region62: #{ltx_block_forward.6} parent=55 // pred_check_branch
        %1004 = sbr.rel (%p1002) target = $region64
      $region63: #{ltx_block_forward.6} parent=55 // pred_region
        %s1005 = smul.u32 2, %s28
      $region64: #{ltx_block_forward.6} parent=55 // pred_fallthru
        _
      // Predicated region
      $region65: #{ltx_block_forward.6} parent=55 // pred_check
        %p1006 = pneg %p327
      $region66: #{ltx_block_forward.6} parent=55 // pred_check_branch
        %1008 = sbr.rel (%p1006) target = $region68
      $region67: #{ltx_block_forward.6} parent=55 // pred_region
        %s1009 = smul.u32 2, %s28
      $region68: #{ltx_block_forward.6} parent=55 // pred_fallthru
        _
    $region56: #{ltx_block_forward.6} parent=5 // pred_fallthru
      _
    %p1010 = scmp.le.s32.totalorder 2, %s18
    // Predicated region
    $region69: #{ltx_block_forward.6} parent=5 // pred_check
      %p1011 = pneg %p1010
    $region70: #{ltx_block_forward.6} parent=5 // pred_check_branch
      %1013 = sbr.rel (%p1011) target = $region72
    $region71: #{ltx_block_forward.6} parent=5 // pred_region
      %s1014 = ssub.s32 %s18, 2
      // Predicated region
      $region73: #{ltx_block_forward.6} parent=71 // pred_check
        %p1015 = pneg %p277
      $region74: #{ltx_block_forward.6} parent=71 // pred_check_branch
        %1017 = sbr.rel (%p1015) target = $region76
      $region75: #{ltx_block_forward.6} parent=71 // pred_region
        %s1018 = smul.u32 2, %s30
        %p1019 = scmp.lt.s32.totalorder %s29, 1
        %s1020 = scalar_select %p1019, %s29, 1
        %p1021 = scmp.lt.s32.totalorder %s1018, 1
        %s1022 = scalar_select %p1021, %s1018, 1
        %s1023 = smul.addr %s1020, 2
        %s1024 = sadd.s32 %s1022, %s1023
        %s1025 = smul.addr %s1024, 4
        %s1026 = scalar_lea.vmem %s9, %s1025
      $region76: #{ltx_block_forward.6} parent=71 // pred_fallthru
        _
      // Predicated region
      $region77: #{ltx_block_forward.6} parent=71 // pred_check
        %p1027 = pneg %p305
      $region78: #{ltx_block_forward.6} parent=71 // pred_check_branch
        %1029 = sbr.rel (%p1027) target = $region80
      $region79: #{ltx_block_forward.6} parent=71 // pred_region
        %s1030 = smul.u32 2, %s30
        %p1031 = scmp.lt.s32.totalorder %s29, 1
        %s1032 = scalar_select %p1031, %s29, 1
        %p1033 = scmp.lt.s32.totalorder %s1030, 1
        %s1034 = scalar_select %p1033, %s1030, 1
        %s1035 = smul.addr %s1032, 2
        %s1036 = sadd.s32 %s1034, %s1035
        %s1037 = smul.addr %s1036, 4
        %s1038 = scalar_lea.vmem %s10, %s1037
      $region80: #{ltx_block_forward.6} parent=71 // pred_fallthru
        _
      // Predicated region
      $region81: #{ltx_block_forward.6} parent=71 // pred_check
        %p1039 = pneg %p333
      $region82: #{ltx_block_forward.6} parent=71 // pred_check_branch
        %1041 = sbr.rel (%p1039) target = $region84
      $region83: #{ltx_block_forward.6} parent=71 // pred_region
        %s1042 = smul.u32 2, %s30
        %p1043 = scmp.lt.s32.totalorder %s29, 1
        %s1044 = scalar_select %p1043, %s29, 1
        %p1045 = scmp.lt.s32.totalorder %s1042, 1
        %s1046 = scalar_select %p1045, %s1042, 1
        %s1047 = smul.addr %s1044, 2
        %s1048 = sadd.s32 %s1046, %s1047
        %s1049 = smul.addr %s1048, 4
        %s1050 = scalar_lea.vmem %s11, %s1049
      $region84: #{ltx_block_forward.6} parent=71 // pred_fallthru
        _
    $region72: #{ltx_block_forward.6} parent=5 // pred_fallthru
      _
  $region6: #{ltx_block_forward.6} parent=0 // loop_footer
    %s22 = sadd.s32 1, %s18
  $region7: #{ltx_block_forward.6} parent=0 // loop_footer_branch
    %17 = sbr.rel target = $region3
  $region8: #{ltx_block_forward.6} parent=0 // loop_exit
    _

// kernel: ltx_block_forward.7
$region0: #{ltx_block_forward.7}
  #allocation0 [shape = 'u32[]', space=smem, size = 0x4, offset = 0x4, fixed_abs, tag = 'smem constant byte address 0x4 - core index']
  #allocation1 [shape = 'u32[144,128]{1,0:T(1,128)}', space=vmem, size = 0x12000, scoped, tag = 'internal scratch']
  #allocation2 [shape = 'f32[16,2]{1,0:T(8,128)}', space=vmem, size = 0x2000, scoped, tag = 'scratch operand']
  #allocation3 [shape = 'f32[16,2]{1,0:T(8,128)}', space=vmem, size = 0x2000, scoped, tag = 'scratch operand']
  #allocation4 [shape = 'f32[16,32]{1,0:T(8,128)}', space=vmem, size = 0x2000, scoped, tag = 'scratch operand']
  %s0 = inlined_call_operand.vmem [shape: bf16[2,16,32], index: 0, kind: input, shape index: {}]
  %s1 = inlined_call_operand.vmem [shape: bf16[2,16,32], index: 1, kind: input, shape index: {}]
  %s2 = inlined_call_operand.vmem [shape: bf16[2,16,32], index: 2, kind: input, shape index: {}]
  %s3 = inlined_call_operand.vmem [shape: bf16[2,16,32], index: 3, kind: output, shape index: {}]
  %s4 = sld [smem:[#allocation0]]
  $region53: #{ltx_block_forward.7} parent=0
    _
  %s6 = ssub.s32 1, %s4
  %s7 = scalar_select 0, %s6, %s4
  loop: start=0, step=1, limit=4
  $region2: #{ltx_block_forward.7} parent=0 // loop_pre_header
    _
  $region3: #{ltx_block_forward.7} parent=0 // loop_header
    %s9 = sphi 0, %s13
    %p10 = scmp.ge.s32.totalorder %s9, 4
    %s16 = sphi 0, %s35
    %s17 = sphi 0, %s31
    %s18 = sphi 0, %s27
    %s19 = sphi 0, %s16
    %s20 = sphi 0, %s17
    %s21 = sphi 0, %s18
    %s22 = sphi 0, %s19
    %s23 = sphi 0, %s20
    %s24 = sphi 0, %s21
    %s40 = sphi 0, %s42
    %s43 = sphi 0, %s40
    %s44 = sphi 0, %s43
    %s60 = sphi 0, %s44
    %s68 = sphi 0, %s70
    %s71 = sphi 0, %s68
    %s72 = sphi 0, %s71
    %s88 = sphi 0, %s72
    %s96 = sphi 0, %s98
    %s99 = sphi 0, %s96
    %s100 = sphi 0, %s99
    %s116 = sphi 0, %s100
    %s124 = sphi 0, %s126
    %s127 = sphi 0, %s124
    %s128 = sphi 0, %s127
    %s144 = sphi 0, %s128
  $region4: #{ltx_block_forward.7} parent=0 // loop_header_branch
    %12 = sbr.rel (%p10) target = $region8
  $region5: #{ltx_block_forward.7} parent=0 // loop_body
    %s14 = ssub.s32 %s9, 1
    %s15 = ssub.s32 %s9, 2
    %s25 = sadd.s32 1, %s18
    %p26 = scmp.ge.s32.totalorder %s25, 1
    %s27 = scalar_select %p26, 0, %s25
    %s28 = sadd.s32 1, %s17
    %s29 = scalar_select %p26, %s28, %s17
    %p30 = scmp.ge.s32.totalorder %s29, 1
    %s31 = scalar_select %p30, 0, %s29
    %s32 = sadd.s32 1, %s16
    %s33 = scalar_select %p30, %s32, %s16
    %p34 = scmp.ge.s32.totalorder %s33, 2
    %s35 = scalar_select %p34, 0, %s33
    %s36 = ssub.s32 %s16, %s35
    %s37 = ssub.s32 %s17, %s31
    %s38 = sor.u32 %s36, %s37
    %p39 = scmp.eq.s32.totalorder %s38, 0
    %s41 = sadd.s32 %s40, 1
    %s42 = scalar_select %p39, %s40, %s41
    %p45 = pneg %p39
    %p46 = scmp.eq.s32.totalorder %s9, 1
    %p47 = por %p45, %p46
    %p48 = scmp.ne.s32.totalorder %s40, %s43
    %p49 = scmp.eq.s32.totalorder %s9, 0
    %p50 = por %p48, %p49
    %p51 = scmp.ne.s32.totalorder %s40, %s43
    %p52 = scmp.eq.s32.totalorder %s14, 1
    %p53 = por %p51, %p52
    %p54 = scmp.ne.s32.totalorder %s43, %s44
    %p55 = scmp.eq.s32.totalorder %s14, 0
    %p56 = por %p54, %p55
    %p57 = scmp.ne.s32.totalorder %s43, %s44
    %p58 = scmp.eq.s32.totalorder %s15, 1
    %p59 = por %p57, %p58
    %p61 = scmp.ne.s32.totalorder %s44, %s60
    %p62 = scmp.eq.s32.totalorder %s15, 0
    %p63 = por %p61, %p62
    %s64 = ssub.s32 %s16, %s35
    %s65 = ssub.s32 %s18, %s27
    %s66 = sor.u32 %s64, %s65
    %p67 = scmp.eq.s32.totalorder %s66, 0
    %s69 = sadd.s32 %s68, 1
    %s70 = scalar_select %p67, %s68, %s69
    %p73 = pneg %p67
    %p74 = scmp.eq.s32.totalorder %s9, 1
    %p75 = por %p73, %p74
    %p76 = scmp.ne.s32.totalorder %s68, %s71
    %p77 = scmp.eq.s32.totalorder %s9, 0
    %p78 = por %p76, %p77
    %p79 = scmp.ne.s32.totalorder %s68, %s71
    %p80 = scmp.eq.s32.totalorder %s14, 1
    %p81 = por %p79, %p80
    %p82 = scmp.ne.s32.totalorder %s71, %s72
    %p83 = scmp.eq.s32.totalorder %s14, 0
    %p84 = por %p82, %p83
    %p85 = scmp.ne.s32.totalorder %s71, %s72
    %p86 = scmp.eq.s32.totalorder %s15, 1
    %p87 = por %p85, %p86
    %p89 = scmp.ne.s32.totalorder %s72, %s88
    %p90 = scmp.eq.s32.totalorder %s15, 0
    %p91 = por %p89, %p90
    %s92 = ssub.s32 %s16, %s35
    %s93 = ssub.s32 %s18, %s27
    %s94 = sor.u32 %s92, %s93
    %p95 = scmp.eq.s32.totalorder %s94, 0
    %s97 = sadd.s32 %s96, 1
    %s98 = scalar_select %p95, %s96, %s97
    %p101 = pneg %p95
    %p102 = scmp.eq.s32.totalorder %s9, 1
    %p103 = por %p101, %p102
    %p104 = scmp.ne.s32.totalorder %s96, %s99
    %p105 = scmp.eq.s32.totalorder %s9, 0
    %p106 = por %p104, %p105
    %p107 = scmp.ne.s32.totalorder %s96, %s99
    %p108 = scmp.eq.s32.totalorder %s14, 1
    %p109 = por %p107, %p108
    %p110 = scmp.ne.s32.totalorder %s99, %s100
    %p111 = scmp.eq.s32.totalorder %s14, 0
    %p112 = por %p110, %p111
    %p113 = scmp.ne.s32.totalorder %s99, %s100
    %p114 = scmp.eq.s32.totalorder %s15, 1
    %p115 = por %p113, %p114
    %p117 = scmp.ne.s32.totalorder %s100, %s116
    %p118 = scmp.eq.s32.totalorder %s15, 0
    %p119 = por %p117, %p118
    %s120 = ssub.s32 %s16, %s35
    %s121 = ssub.s32 %s17, %s31
    %s122 = sor.u32 %s120, %s121
    %p123 = scmp.eq.s32.totalorder %s122, 0
    %s125 = sadd.s32 %s124, 1
    %s126 = scalar_select %p123, %s124, %s125
    %p129 = pneg %p123
    %p130 = scmp.eq.s32.totalorder %s9, 1
    %p131 = por %p129, %p130
    %p132 = scmp.ne.s32.totalorder %s124, %s127
    %p133 = scmp.eq.s32.totalorder %s9, 0
    %p134 = por %p132, %p133
    %p135 = scmp.ne.s32.totalorder %s124, %s127
    %p136 = scmp.eq.s32.totalorder %s14, 1
    %p137 = por %p135, %p136
    %p138 = scmp.ne.s32.totalorder %s127, %s128
    %p139 = scmp.eq.s32.totalorder %s14, 0
    %p140 = por %p138, %p139
    %p141 = scmp.ne.s32.totalorder %s127, %s128
    %p142 = scmp.eq.s32.totalorder %s15, 1
    %p143 = por %p141, %p142
    %p145 = scmp.ne.s32.totalorder %s128, %s144
    %p146 = scmp.eq.s32.totalorder %s15, 0
    %p147 = por %p145, %p146
    %p148 = scmp.le.s32.totalorder 1, %s9
    %p149 = scmp.lt.s32.totalorder %s9, 3
    %p150 = pnand %p148, %p149
    %p151 = pneg %p150
    // Predicated region
    $region9: #{ltx_block_forward.7} parent=5 // pred_check
      _
    $region10: #{ltx_block_forward.7} parent=5 // pred_check_branch
      %153 = sbr.rel (%p150) target = $region12
    $region11: #{ltx_block_forward.7} parent=5 // pred_region
      %s154 = ssub.s32 %s9, 1
    $region12: #{ltx_block_forward.7} parent=5 // pred_fallthru
      _
    %p155 = scmp.lt.s32.totalorder %s9, 2
    // Predicated region
    $region13: #{ltx_block_forward.7} parent=5 // pred_check
      %p156 = pneg %p155
    $region14: #{ltx_block_forward.7} parent=5 // pred_check_branch
      %158 = sbr.rel (%p156) target = $region16
    $region15: #{ltx_block_forward.7} parent=5 // pred_region
      // Predicated region
      $region17: #{ltx_block_forward.7} parent=15 // pred_check
        %p159 = pneg %p50
      $region18: #{ltx_block_forward.7} parent=15 // pred_check_branch
        %161 = sbr.rel (%p159) target = $region20
      $region19: #{ltx_block_forward.7} parent=15 // pred_region
        %s162 = smul.u32 2, %s17
        %p163 = scmp.lt.s32.totalorder %s16, 1
        %s164 = scalar_select %p163, %s16, 1
        %p165 = scmp.lt.s32.totalorder %s162, 1
        %s166 = scalar_select %p165, %s162, 1
        %s167 = smul.addr %s164, 2
        %s168 = sadd.s32 %s166, %s167
        %s169 = smul.addr %s168, 4
        %s170 = scalar_lea.vmem %s0, %s169
        %s171 = smul.u32 2, %s17
      $region20: #{ltx_block_forward.7} parent=15 // pred_fallthru
        _
      // Predicated region
      $region21: #{ltx_block_forward.7} parent=15 // pred_check
        %p172 = pneg %p78
      $region22: #{ltx_block_forward.7} parent=15 // pred_check_branch
        %174 = sbr.rel (%p172) target = $region24
      $region23: #{ltx_block_forward.7} parent=15 // pred_region
        %s175 = smul.u32 2, %s18
        %p176 = scmp.lt.s32.totalorder %s16, 1
        %s177 = scalar_select %p176, %s16, 1
        %p178 = scmp.lt.s32.totalorder %s175, 1
        %s179 = scalar_select %p178, %s175, 1
        %s180 = smul.addr %s177, 2
        %s181 = sadd.s32 %s179, %s180
        %s182 = smul.addr %s181, 4
        %s183 = scalar_lea.vmem %s1, %s182
        %s184 = smul.u32 2, %s18
      $region24: #{ltx_block_forward.7} parent=15 // pred_fallthru
        _
      // Predicated region
      $region25: #{ltx_block_forward.7} parent=15 // pred_check
        %p185 = pneg %p106
      $region26: #{ltx_block_forward.7} parent=15 // pred_check_branch
        %187 = sbr.rel (%p185) target = $region28
      $region27: #{ltx_block_forward.7} parent=15 // pred_region
        %s188 = smul.u32 2, %s18
        %p189 = scmp.lt.s32.totalorder %s16, 1
        %s190 = scalar_select %p189, %s16, 1
        %p191 = scmp.lt.s32.totalorder %s188, 1
        %s192 = scalar_select %p191, %s188, 1
        %s193 = smul.addr %s190, 2
        %s194 = sadd.s32 %s192, %s193
        %s195 = smul.addr %s194, 4
        %s196 = scalar_lea.vmem %s2, %s195
        %s197 = smul.u32 2, %s18
      $region28: #{ltx_block_forward.7} parent=15 // pred_fallthru
        _
    $region16: #{ltx_block_forward.7} parent=5 // pred_fallthru
      _
    %p198 = scmp.le.s32.totalorder 1, %s9
    %p199 = scmp.lt.s32.totalorder %s9, 3
    %p200 = pnand %p198, %p199
    %p201 = pneg %p200
    // Predicated region
    $region29: #{ltx_block_forward.7} parent=5 // pred_check
      _
    $region30: #{ltx_block_forward.7} parent=5 // pred_check_branch
      %203 = sbr.rel (%p200) target = $region32
    $region31: #{ltx_block_forward.7} parent=5 // pred_region
      %s204 = ssub.s32 %s9, 1
      %s205 = smul.u32 2, %s20
      %p206 = scmp.lt.s32.totalorder %s19, 1
      %s207 = scalar_select %p206, %s19, 1
      %p208 = scmp.lt.s32.totalorder %s205, 1
      %s209 = scalar_select %p208, %s205, 1
      %s210 = smul.addr %s207, 2
      %s211 = sadd.s32 %s209, %s210
      %s212 = smul.addr %s211, 4
      %s213 = scalar_lea.vmem %s0, %s212
      %p214 = pneg %p56
      %p215 = pneg %p53
      %s216 = smul.u32 2, %s21
      %p217 = scmp.lt.s32.totalorder %s19, 1
      %s218 = scalar_select %p217, %s19, 1
      %p219 = scmp.lt.s32.totalorder %s216, 1
      %s220 = scalar_select %p219, %s216, 1
      %s221 = smul.addr %s218, 2
      %s222 = sadd.s32 %s220, %s221
      %s223 = smul.addr %s222, 4
      %s224 = scalar_lea.vmem %s1, %s223
      %p225 = pneg %p84
      %p226 = pneg %p81
      %s227 = smul.u32 2, %s21
      %p228 = scmp.lt.s32.totalorder %s19, 1
      %s229 = scalar_select %p228, %s19, 1
      %p230 = scmp.lt.s32.totalorder %s227, 1
      %s231 = scalar_select %p230, %s227, 1
      %s232 = smul.addr %s229, 2
      %s233 = sadd.s32 %s231, %s232
      %s234 = smul.addr %s233, 4
      %s235 = scalar_lea.vmem %s2, %s234
      %p236 = pneg %p112
      %p237 = pneg %p109
      %p238 = pneg %p140
      %p239 = pneg %p137
      %s240 = smul.u32 2, %s20
      %p241 = scmp.lt.s32.totalorder %s19, 1
      %s242 = scalar_select %p241, %s19, 1
      %p243 = scmp.lt.s32.totalorder %s240, 1
      %s244 = scalar_select %p243, %s240, 1
      %s245 = smul.addr %s242, 2
      %s246 = sadd.s32 %s244, %s245
      %s247 = smul.addr %s246, 4
      %s248 = scalar_lea.vmem %s3, %s247
      %s249 = smul.u32 2, %s20
      %p250 = scmp.lt.s32.totalorder %s19, 1
      %s251 = scalar_select %p250, %s19, 1
      %p252 = scmp.lt.s32.totalorder %s249, 1
      %s253 = scalar_select %p252, %s249, 1
      %s254 = smul.addr %s251, 2
      %s255 = sadd.s32 %s253, %s254
      %s256 = smul.addr %s255, 4
      %s257 = scalar_lea.vmem %s0, %s256
      %s258 = smul.u32 2, %s20
      %s259 = smul.u32 2, %s21
      %p260 = scmp.lt.s32.totalorder %s19, 1
      %s261 = scalar_select %p260, %s19, 1
      %p262 = scmp.lt.s32.totalorder %s259, 1
      %s263 = scalar_select %p262, %s259, 1
      %s264 = smul.addr %s261, 2
      %s265 = sadd.s32 %s263, %s264
      %s266 = smul.addr %s265, 4
      %s267 = scalar_lea.vmem %s1, %s266
      %s268 = smul.u32 2, %s21
      %s269 = smul.u32 2, %s21
      %p270 = scmp.lt.s32.totalorder %s19, 1
      %s271 = scalar_select %p270, %s19, 1
      %p272 = scmp.lt.s32.totalorder %s269, 1
      %s273 = scalar_select %p272, %s269, 1
      %s274 = smul.addr %s271, 2
      %s275 = sadd.s32 %s273, %s274
      %s276 = smul.addr %s275, 4
      %s277 = scalar_lea.vmem %s2, %s276
      %s278 = smul.u32 2, %s21
      %s279 = smul.u32 2, %s20
      %p280 = scmp.lt.s32.totalorder %s19, 1
      %s281 = scalar_select %p280, %s19, 1
      %p282 = scmp.lt.s32.totalorder %s279, 1
      %s283 = scalar_select %p282, %s279, 1
      %s284 = smul.addr %s281, 2
      %s285 = sadd.s32 %s283, %s284
      %s286 = smul.addr %s285, 4
      %s287 = scalar_lea.vmem %s3, %s286
      %s288 = smul.u32 2, %s20
      %p290 = scmp.eq.s32.totalorder %s21, 0
      // Predicated region
      $region33: #{ltx_block_forward.7} parent=31 // pred_check
        %p291 = pneg %p290
      $region34: #{ltx_block_forward.7} parent=31 // pred_check_branch
        %293 = sbr.rel (%p291) target = $region36
      $region35: #{ltx_block_forward.7} parent=31 // pred_region
        %vm294 = vcmask 15360
        %295 = vst.msk [vmem:[#allocation2] sm:$0xff] %vm294, -inf
        %296 = vst.msk [vmem:[#allocation2 + $0x8] sm:$0xff] %vm294, -inf
        %297 = vst.msk [vmem:[#allocation3] sm:$0xff] %vm294, 0.0
        %298 = vst.msk [vmem:[#allocation3 + $0x8] sm:$0xff] %vm294, 0.0
        %vm299 = vcmask 261120
        %300 = vst.msk [vmem:[#allocation4] sm:$0xff] %vm299, 0.0
        %301 = vst.msk [vmem:[#allocation4 + $0x8] sm:$0xff] %vm299, 0.0
      $region36: #{ltx_block_forward.7} parent=31 // pred_fallthru
        _
      %v302 = vld [vmem:[%s257] sm:$0xf]
      %v303 = vld [vmem:[%s257 + $0x4] sm:$0xf]
      %v304 = vld [vmem:[%s267] sm:$0xf]
      %v305 = vld [vmem:[%s267 + $0x4] sm:$0xf]
      %v306 = vld [vmem:[%s277] sm:$0xf]
      %v307 = vld [vmem:[%s277 + $0x4] sm:$0xf]
      %v310 = vunpack.c.l.b16 %v302
      %v311 = vunpack.c.l.b16 %v303
      %v312 = vpack.c.b16 %v311, %v310
      %v315 = vunpack.c.l.b16 %v304
      %v316 = vunpack.c.l.b16 %v305
      %v317 = vpack.c.b16 %v316, %v315
      %vm318 = vcmask 130048
      %v320 = vsel %vm318, %v312, 0
      %v323 = vsel %vm318, %v317, 0
      %325 = vmatprep.subr.bf16.mxu0 0
      %326 = vmatpush1.bf16.xpose.msra.mxu0 0
      %327 = vmatprep.subr.bf16.mxu0 0
      %328 = vmatpush1.bf16.xpose.msra.mxu0 0
      %329 = vmatprep.subr.bf16.mxu0 0
      %330 = vmatpush1.bf16.xpose.msra.mxu0 0
      %331 = vmatprep.subr.bf16.mxu0 0
      %332 = vmatpush1.bf16.xpose.msra.mxu0 0
      %333 = vmatprep.subr.bf16.mxu0 0
      %334 = vmatpush1.bf16.xpose.msra.mxu0 0
      %335 = vmatprep.subr.bf16.mxu0 0
      %336 = vmatpush1.bf16.xpose.msra.mxu0 0
      %337 = vmatprep.subr.bf16.mxu0 0
      %338 = vmatpush1.bf16.xpose.msra.mxu0 0
      %339 = vmatprep.subr.bf16.mxu0 0
      %340 = vmatpush1.bf16.xpose.msra.mxu0 %v323
      %341 = vmatprep.subr.bf16.mxu0 0
      %342 = vmatpush2.bf16.xpose.msra.mxu0 0
      %343 = vmatprep.subr.bf16.mxu0 0
      %344 = vmatpush2.bf16.xpose.msra.mxu0 0
      %345 = vmatprep.subr.bf16.mxu0 0
      %346 = vmatpush2.bf16.xpose.msra.mxu0 0
      %347 = vmatprep.subr.bf16.mxu0 0
      %348 = vmatpush2.bf16.xpose.msra.mxu0 0
      %349 = vmatprep.subr.bf16.mxu0 0
      %350 = vmatpush2.bf16.xpose.msra.mxu0 0
      %351 = vmatprep.subr.bf16.mxu0 0
      %352 = vmatpush2.bf16.xpose.msra.mxu0 0
      %353 = vmatprep.subr.bf16.mxu0 0
      %354 = vmatpush2.bf16.xpose.msra.mxu0 0
      %355 = vmatprep.subr.bf16.mxu0 0
      %356 = vmatpush2.bf16.xpose.msra.mxu0 0
      %357 = vmatprep.mubr.bf16.mxu0 0
      %358 = vmatmul.mubr.bf16.gmra.mxu0 %v320
      %v359 = vpop.f32.mrf.mxu0
      %v360 = vadd.f32 0.0, %v359
      %v361 = vpop.f32.mrf.mxu0
      %v362 = vpop.f32.mrf.mxu0
      %v363 = vadd.f32 0.0, %v362
      %v364 = vpop.f32.mrf.mxu0
      %365 = vdwg.mxu0
      %v366 = vld [vmem:[#allocation2] sm:$0xff]
      %v367 = vld [vmem:[#allocation2 + $0x8] sm:$0xff]
      %v368 = vsel %vm318, %v360, -inf
      %369 = vmax.xlane.f32.xlu0 %v368
      %v370 = vpop.xlane.xlu0 %369
      %v371 = vsel %vm318, %v363, -inf
      %372 = vmax.xlane.f32.xlu0 %v371
      %v373 = vpop.xlane.xlu0 %372
      %v374 = vmax.f32 %v366, %v370
      %v375 = vmax.f32 %v367, %v373
      %v376 = vsub.f32 %v366, %v374
      %v377 = vsub.f32 %v367, %v375
      %v378 = vmul.f32 %v376, 1.442695
      %v379 = vpow.pop %v378
      %v380 = vmul.f32 %v377, 1.442695
      %v381 = vpow.pop %v380
      %383 = vset.pattern.permute.xlu0 0
      %384 = vperm.xlu0 %383, %v374
      %v385 = vpop.permute.xlu0 %384
      %388 = vset.pattern.permute.xlu0 0
      %389 = vperm.xlu0 %388, %v375
      %v390 = vpop.permute.xlu0 %389
      %v392 = vsub.f32 %v360, %v385
      %v393 = vsub.f32 %v363, %v390
      %v394 = vmul.f32 %v392, 1.442695
      %v395 = vpow.pop %v394
      %v396 = vmul.f32 %v393, 1.442695
      %v397 = vpow.pop %v396
      %v398 = vld [vmem:[#allocation3] sm:$0xff]
      %v399 = vld [vmem:[#allocation3 + $0x8] sm:$0xff]
      %v400 = vmul.f32 %v379, %v398
      %v401 = vmul.f32 %v381, %v399
      %v402 = vsel %vm318, %v395, 0.0
      %403 = vadd.xlane.f32.xlu0 %v402
      %v404 = vpop.xlane.xlu0 %403
      %v405 = vsel %vm318, %v397, 0.0
      %406 = vadd.xlane.f32.xlu0 %v405
      %v407 = vpop.xlane.xlu0 %406
      %v408 = vadd.f32 %v400, %v404
      %v409 = vadd.f32 %v401, %v407
      %vm410 = vcmask 7168
      %411 = vst.msk [vmem:[#allocation3] sm:$0xff] %vm410, %v408
      %412 = vst.msk [vmem:[#allocation3 + $0x8] sm:$0xff] %vm410, %v409
      %v413 = vld [vmem:[#allocation4] sm:$0xff]
      %v414 = vld [vmem:[#allocation4 + $0x8] sm:$0xff]
      %416 = vset.pattern.permute.xlu0 0
      %417 = vperm.xlu0 %416, %v379
      %v418 = vpop.permute.xlu0 %417
      %421 = vset.pattern.permute.xlu0 0
      %422 = vperm.xlu0 %421, %v381
      %v423 = vpop.permute.xlu0 %422
      %v425 = vmul.f32 %v418, %v413
      %v426 = vmul.f32 %v423, %v414
      %v427 = vpack.c.bf16 %v397, %v395
      %v430 = vunpack.c.l.b16 %v306
      %v431 = vunpack.c.l.b16 %v307
      %v432 = vpack.c.b16 %v431, %v430
      %v435 = vsel %vm318, %v427, 0
      %437 = vmatprep.subr.bf16.mxu0 0
      %438 = vmatpush1.bf16.msra.mxu0 0
      %439 = vmatprep.subr.bf16.mxu0 0
      %440 = vmatpush1.bf16.msra.mxu0 0
      %441 = vmatprep.subr.bf16.mxu0 0
      %442 = vmatpush1.bf16.msra.mxu0 0
      %443 = vmatprep.subr.bf16.mxu0 0
      %444 = vmatpush1.bf16.msra.mxu0 0
      %445 = vmatprep.subr.bf16.mxu0 0
      %446 = vmatpush1.bf16.msra.mxu0 0
      %447 = vmatprep.subr.bf16.mxu0 0
      %448 = vmatpush1.bf16.msra.mxu0 0
      %449 = vmatprep.subr.bf16.mxu0 0
      %450 = vmatpush1.bf16.msra.mxu0 0
      %451 = vmatprep.subr.bf16.mxu0 0
      %452 = vmatpush1.bf16.msra.mxu0 %v432
      %453 = vmatprep.subr.bf16.mxu0 0
      %454 = vmatpush2.bf16.msra.mxu0 0
      %455 = vmatprep.subr.bf16.mxu0 0
      %456 = vmatpush2.bf16.msra.mxu0 0
      %457 = vmatprep.subr.bf16.mxu0 0
      %458 = vmatpush2.bf16.msra.mxu0 0
      %459 = vmatprep.subr.bf16.mxu0 0
      %460 = vmatpush2.bf16.msra.mxu0 0
      %461 = vmatprep.subr.bf16.mxu0 0
      %462 = vmatpush2.bf16.msra.mxu0 0
      %463 = vmatprep.subr.bf16.mxu0 0
      %464 = vmatpush2.bf16.msra.mxu0 0
      %465 = vmatprep.subr.bf16.mxu0 0
      %466 = vmatpush2.bf16.msra.mxu0 0
      %467 = vmatprep.subr.bf16.mxu0 0
      %468 = vmatpush2.bf16.msra.mxu0 0
      %469 = vmatprep.mubr.bf16.mxu0 0
      %470 = vmatmul.mubr.bf16.gmra.mxu0 %v435
      %v471 = vpop.f32.mrf.mxu0
      %v472 = vadd.f32 0.0, %v471
      %v473 = vpop.f32.mrf.mxu0
      %v474 = vpop.f32.mrf.mxu0
      %v475 = vadd.f32 0.0, %v474
      %v476 = vpop.f32.mrf.mxu0
      %477 = vdwg.mxu0
      %v478 = vadd.f32 %v425, %v472
      %v479 = vadd.f32 %v426, %v475
      %480 = vst.msk [vmem:[#allocation4] sm:$0xff] %vm318, %v478
      %481 = vst.msk [vmem:[#allocation4 + $0x8] sm:$0xff] %vm318, %v479
      %482 = vst.msk [vmem:[#allocation2] sm:$0xff] %vm410, %v374
      %483 = vst.msk [vmem:[#allocation2 + $0x8] sm:$0xff] %vm410, %v375
      %484 = vrot.lane.b32.xlu0 %v312, 112
      %v485 = vpop.permute.xlu0 %484
      %486 = vrot.lane.b32.xlu0 %v317, 112
      %v487 = vpop.permute.xlu0 %486
      %v489 = vsel %vm318, %v485, 0
      %v492 = vsel %vm318, %v487, 0
      %494 = vmatprep.subr.bf16.mxu0 0
      %495 = vmatpush1.bf16.xpose.msra.mxu0 0
      %496 = vmatprep.subr.bf16.mxu0 0
      %497 = vmatpush1.bf16.xpose.msra.mxu0 0
      %498 = vmatprep.subr.bf16.mxu0 0
      %499 = vmatpush1.bf16.xpose.msra.mxu0 0
      %500 = vmatprep.subr.bf16.mxu0 0
      %501 = vmatpush1.bf16.xpose.msra.mxu0 0
      %502 = vmatprep.subr.bf16.mxu0 0
      %503 = vmatpush1.bf16.xpose.msra.mxu0 0
      %504 = vmatprep.subr.bf16.mxu0 0
      %505 = vmatpush1.bf16.xpose.msra.mxu0 0
      %506 = vmatprep.subr.bf16.mxu0 0
      %507 = vmatpush1.bf16.xpose.msra.mxu0 0
      %508 = vmatprep.subr.bf16.mxu0 0
      %509 = vmatpush1.bf16.xpose.msra.mxu0 %v492
      %510 = vmatprep.subr.bf16.mxu0 0
      %511 = vmatpush2.bf16.xpose.msra.mxu0 0
      %512 = vmatprep.subr.bf16.mxu0 0
      %513 = vmatpush2.bf16.xpose.msra.mxu0 0
      %514 = vmatprep.subr.bf16.mxu0 0
      %515 = vmatpush2.bf16.xpose.msra.mxu0 0
      %516 = vmatprep.subr.bf16.mxu0 0
      %517 = vmatpush2.bf16.xpose.msra.mxu0 0
      %518 = vmatprep.subr.bf16.mxu0 0
      %519 = vmatpush2.bf16.xpose.msra.mxu0 0
      %520 = vmatprep.subr.bf16.mxu0 0
      %521 = vmatpush2.bf16.xpose.msra.mxu0 0
      %522 = vmatprep.subr.bf16.mxu0 0
      %523 = vmatpush2.bf16.xpose.msra.mxu0 0
      %524 = vmatprep.subr.bf16.mxu0 0
      %525 = vmatpush2.bf16.xpose.msra.mxu0 0
      %526 = vmatprep.mubr.bf16.mxu0 0
      %527 = vmatmul.mubr.bf16.gmra.mxu0 %v489
      %v528 = vpop.f32.mrf.mxu0
      %v529 = vadd.f32 0.0, %v528
      %v530 = vpop.f32.mrf.mxu0
      %v531 = vpop.f32.mrf.mxu0
      %v532 = vadd.f32 0.0, %v531
      %v533 = vpop.f32.mrf.mxu0
      %534 = vdwg.mxu0
      %v535 = vld [vmem:[#allocation2] sm:$0xff]
      %v536 = vld [vmem:[#allocation2 + $0x8] sm:$0xff]
      %v537 = vsel %vm318, %v529, -inf
      %538 = vmax.xlane.f32.xlu0 %v537
      %v539 = vpop.xlane.xlu0 %538
      %v540 = vsel %vm318, %v532, -inf
      %541 = vmax.xlane.f32.xlu0 %v540
      %v542 = vpop.xlane.xlu0 %541
      %v543 = vmax.f32 %v535, %v539
      %v544 = vmax.f32 %v536, %v542
      %v545 = vsub.f32 %v535, %v543
      %v546 = vsub.f32 %v536, %v544
      %v547 = vmul.f32 %v545, 1.442695
      %v548 = vpow.pop %v547
      %v549 = vmul.f32 %v546, 1.442695
      %v550 = vpow.pop %v549
      %552 = vset.pattern.permute.xlu0 1
      %553 = vperm.xlu0 %552, %v543
      %v554 = vpop.permute.xlu0 %553
      %557 = vset.pattern.permute.xlu0 1
      %558 = vperm.xlu0 %557, %v544
      %v559 = vpop.permute.xlu0 %558
      %v561 = vsub.f32 %v529, %v554
      %v562 = vsub.f32 %v532, %v559
      %v563 = vmul.f32 %v561, 1.442695
      %v564 = vpow.pop %v563
      %v565 = vmul.f32 %v562, 1.442695
      %v566 = vpow.pop %v565
      %v567 = vld [vmem:[#allocation3] sm:$0xff]
      %v568 = vld [vmem:[#allocation3 + $0x8] sm:$0xff]
      %v569 = vmul.f32 %v548, %v567
      %v570 = vmul.f32 %v550, %v568
      %v571 = vsel %vm318, %v564, 0.0
      %572 = vadd.xlane.f32.xlu0 %v571
      %v573 = vpop.xlane.xlu0 %572
      %v574 = vsel %vm318, %v566, 0.0
      %575 = vadd.xlane.f32.xlu0 %v574
      %v576 = vpop.xlane.xlu0 %575
      %v577 = vadd.f32 %v569, %v573
      %v578 = vadd.f32 %v570, %v576
      %vm579 = vcmask 15368
      %580 = vst.msk [vmem:[#allocation3] sm:$0xff] %vm579, %v577
      %581 = vst.msk [vmem:[#allocation3 + $0x8] sm:$0xff] %vm579, %v578
      %v582 = vld [vmem:[#allocation4] sm:$0xff]
      %v583 = vld [vmem:[#allocation4 + $0x8] sm:$0xff]
      %585 = vset.pattern.permute.xlu0 1
      %586 = vperm.xlu0 %585, %v548
      %v587 = vpop.permute.xlu0 %586
      %590 = vset.pattern.permute.xlu0 1
      %591 = vperm.xlu0 %590, %v550
      %v592 = vpop.permute.xlu0 %591
      %v594 = vmul.f32 %v587, %v582
      %v595 = vmul.f32 %v592, %v583
      %v596 = vpack.c.bf16 %v566, %v564
      %597 = vrot.lane.b32.xlu0 %v432, 112
      %v598 = vpop.permute.xlu0 %597
      %v601 = vsel %vm318, %v596, 0
      %603 = vmatprep.subr.bf16.mxu0 0
      %604 = vmatpush1.bf16.msra.mxu0 0
      %605 = vmatprep.subr.bf16.mxu0 0
      %606 = vmatpush1.bf16.msra.mxu0 0
      %607 = vmatprep.subr.bf16.mxu0 0
      %608 = vmatpush1.bf16.msra.mxu0 0
      %609 = vmatprep.subr.bf16.mxu0 0
      %610 = vmatpush1.bf16.msra.mxu0 0
      %611 = vmatprep.subr.bf16.mxu0 0
      %612 = vmatpush1.bf16.msra.mxu0 0
      %613 = vmatprep.subr.bf16.mxu0 0
      %614 = vmatpush1.bf16.msra.mxu0 0
      %615 = vmatprep.subr.bf16.mxu0 0
      %616 = vmatpush1.bf16.msra.mxu0 0
      %617 = vmatprep.subr.bf16.mxu0 0
      %618 = vmatpush1.bf16.msra.mxu0 %v598
      %619 = vmatprep.subr.bf16.mxu0 0
      %620 = vmatpush2.bf16.msra.mxu0 0
      %621 = vmatprep.subr.bf16.mxu0 0
      %622 = vmatpush2.bf16.msra.mxu0 0
      %623 = vmatprep.subr.bf16.mxu0 0
      %624 = vmatpush2.bf16.msra.mxu0 0
      %625 = vmatprep.subr.bf16.mxu0 0
      %626 = vmatpush2.bf16.msra.mxu0 0
      %627 = vmatprep.subr.bf16.mxu0 0
      %628 = vmatpush2.bf16.msra.mxu0 0
      %629 = vmatprep.subr.bf16.mxu0 0
      %630 = vmatpush2.bf16.msra.mxu0 0
      %631 = vmatprep.subr.bf16.mxu0 0
      %632 = vmatpush2.bf16.msra.mxu0 0
      %633 = vmatprep.subr.bf16.mxu0 0
      %634 = vmatpush2.bf16.msra.mxu0 0
      %635 = vmatprep.mubr.bf16.mxu0 0
      %636 = vmatmul.mubr.bf16.gmra.mxu0 %v601
      %v637 = vpop.f32.mrf.mxu0
      %v638 = vadd.f32 0.0, %v637
      %v639 = vpop.f32.mrf.mxu0
      %v640 = vpop.f32.mrf.mxu0
      %v641 = vadd.f32 0.0, %v640
      %v642 = vpop.f32.mrf.mxu0
      %643 = vdwg.mxu0
      %646 = vrot.lane.b32.xlu0 %v638, 16
      %v647 = vpop.permute.xlu0 %646
      %648 = vrot.lane.b32.xlu0 %v641, 16
      %v649 = vpop.permute.xlu0 %648
      %v652 = vadd.f32 %v594, %v647
      %v653 = vadd.f32 %v595, %v649
      %vm654 = vcmask 261248
      %655 = vst.msk [vmem:[#allocation4] sm:$0xff] %vm654, %v652
      %656 = vst.msk [vmem:[#allocation4 + $0x8] sm:$0xff] %vm654, %v653
      %657 = vst.msk [vmem:[#allocation2] sm:$0xff] %vm579, %v543
      %658 = vst.msk [vmem:[#allocation2 + $0x8] sm:$0xff] %vm579, %v544
      // Predicated region
      $region37: #{ltx_block_forward.7} parent=31 // pred_check
        %p659 = pneg %p290
      $region38: #{ltx_block_forward.7} parent=31 // pred_check_branch
        %661 = sbr.rel (%p659) target = $region40
      $region39: #{ltx_block_forward.7} parent=31 // pred_region
        %v662 = vld [vmem:[#allocation3] sm:$0xff]
        %v663 = vld [vmem:[#allocation3 + $0x8] sm:$0xff]
        %v664 = vrcp.pop %v662
        %v665 = vrcp.pop %v663
        %v666 = vld [vmem:[#allocation4] sm:$0xff]
        %v667 = vld [vmem:[#allocation4 + $0x8] sm:$0xff]
        %669 = vset.pattern.permute.xlu0 0
        %670 = vperm.xlu0 %669, %v664
        %v671 = vpop.permute.xlu0 %670
        %674 = vset.pattern.permute.xlu0 0
        %675 = vperm.xlu0 %674, %v665
        %v676 = vpop.permute.xlu0 %675
        %v678 = vmul.f32 %v666, %v671
        %v679 = vmul.f32 %v667, %v676
        %v680 = vpack.c.bf16 %v679, %v678
        %v682 = vunpack.c.l.b16 %v680
        %v683 = vunpack.c.h.b16 %v680
        %v684 = vpack.c.b16 %v682, %v682
        %v685 = vpack.c.b16 %v683, %v683
        %vm688 = vcmask 125952
        %689 = vst.msk [vmem:[%s287] sm:$0xf] %vm688, %v684
        %690 = vst.msk [vmem:[%s287 + $0x4] sm:$0xf] %vm688, %v685
        %v691 = vld [vmem:[#allocation3] sm:$0xff]
        %v692 = vld [vmem:[#allocation3 + $0x8] sm:$0xff]
        %v693 = vrcp.pop %v691
        %v694 = vrcp.pop %v692
        %v695 = vld [vmem:[#allocation4] sm:$0xff]
        %v696 = vld [vmem:[#allocation4 + $0x8] sm:$0xff]
        %698 = vset.pattern.permute.xlu0 1
        %699 = vperm.xlu0 %698, %v693
        %v700 = vpop.permute.xlu0 %699
        %703 = vset.pattern.permute.xlu0 1
        %704 = vperm.xlu0 %703, %v694
        %v705 = vpop.permute.xlu0 %704
        %v707 = vmul.f32 %v695, %v700
        %v708 = vmul.f32 %v696, %v705
        %v709 = vpack.c.bf16 %v708, %v707
        %v711 = vunpack.c.l.b16 %v709
        %v712 = vunpack.c.h.b16 %v709
        %v713 = vpack.c.b16 %v711, %v711
        %v714 = vpack.c.b16 %v712, %v712
        %vm717 = vcmask 257152
        %718 = vst.msk [vmem:[%s287] sm:$0xf] %vm717, %v713
        %719 = vst.msk [vmem:[%s287 + $0x4] sm:$0xf] %vm717, %v714
      $region40: #{ltx_block_forward.7} parent=31 // pred_fallthru
        _
      %s720 = smul.u32 2, %s20
      %p721 = scmp.lt.s32.totalorder %s19, 1
      %s722 = scalar_select %p721, %s19, 1
      %p723 = scmp.lt.s32.totalorder %s720, 1
      %s724 = scalar_select %p723, %s720, 1
      %s725 = smul.addr %s722, 2
      %s726 = sadd.s32 %s724, %s725
      %s727 = smul.addr %s726, 4
      %s728 = scalar_lea.vmem %s3, %s727
      // Predicated region
      $region41: #{ltx_block_forward.7} parent=31 // pred_check
        %p729 = pneg %p137
      $region42: #{ltx_block_forward.7} parent=31 // pred_check_branch
        %731 = sbr.rel (%p729) target = $region44
      $region43: #{ltx_block_forward.7} parent=31 // pred_region
        %s732 = smul.u32 2, %s20
      $region44: #{ltx_block_forward.7} parent=31 // pred_fallthru
        _
    $region32: #{ltx_block_forward.7} parent=5 // pred_fallthru
      _
    %p733 = scmp.le.s32.totalorder 2, %s9
    // Predicated region
    $region45: #{ltx_block_forward.7} parent=5 // pred_check
      %p734 = pneg %p733
    $region46: #{ltx_block_forward.7} parent=5 // pred_check_branch
      %736 = sbr.rel (%p734) target = $region48
    $region47: #{ltx_block_forward.7} parent=5 // pred_region
      %s737 = ssub.s32 %s9, 2
      // Predicated region
      $region49: #{ltx_block_forward.7} parent=47 // pred_check
        %p738 = pneg %p143
      $region50: #{ltx_block_forward.7} parent=47 // pred_check_branch
        %740 = sbr.rel (%p738) target = $region52
      $region51: #{ltx_block_forward.7} parent=47 // pred_region
        %s741 = smul.u32 2, %s23
        %p742 = scmp.lt.s32.totalorder %s22, 1
        %s743 = scalar_select %p742, %s22, 1
        %p744 = scmp.lt.s32.totalorder %s741, 1
        %s745 = scalar_select %p744, %s741, 1
        %s746 = smul.addr %s743, 2
        %s747 = sadd.s32 %s745, %s746
        %s748 = smul.addr %s747, 4
        %s749 = scalar_lea.vmem %s3, %s748
      $region52: #{ltx_block_forward.7} parent=47 // pred_fallthru
        _
    $region48: #{ltx_block_forward.7} parent=5 // pred_fallthru
      _
  $region6: #{ltx_block_forward.7} parent=0 // loop_footer
    %s13 = sadd.s32 1, %s9
  $region7: #{ltx_block_forward.7} parent=0 // loop_footer_branch
    %8 = sbr.rel target = $region3
  $region8: #{ltx_block_forward.7} parent=0 // loop_exit
    _

// kernel: ltx_block_forward.10
$region0: #{ltx_block_forward.10}
  #allocation0 [shape = 'u32[]', space=smem, size = 0x4, offset = 0x4, fixed_abs, tag = 'smem constant byte address 0x4 - core index']
  #allocation1 [shape = 'u32[144,128]{1,0:T(1,128)}', space=vmem, size = 0x12000, scoped, tag = 'internal scratch']
  #allocation2 [shape = 'f32[16,2]{1,0:T(8,128)}', space=vmem, size = 0x2000, scoped, tag = 'scratch operand']
  #allocation3 [shape = 'f32[16,2]{1,0:T(8,128)}', space=vmem, size = 0x2000, scoped, tag = 'scratch operand']
  #allocation4 [shape = 'f32[16,32]{1,0:T(8,128)}', space=vmem, size = 0x2000, scoped, tag = 'scratch operand']
  %s0 = inlined_call_operand.vmem [shape: bf16[2,16,32], index: 0, kind: input, shape index: {}]
  %s1 = inlined_call_operand.vmem [shape: bf16[2,8,32], index: 1, kind: input, shape index: {}]
  %s2 = inlined_call_operand.vmem [shape: bf16[2,8,32], index: 2, kind: input, shape index: {}]
  %s3 = inlined_call_operand.vmem [shape: bf16[2,16,32], index: 3, kind: output, shape index: {}]
  %s4 = sld [smem:[#allocation0]]
  $region53: #{ltx_block_forward.10} parent=0
    _
  %s6 = ssub.s32 1, %s4
  %s7 = scalar_select 0, %s6, %s4
  loop: start=0, step=1, limit=4
  $region2: #{ltx_block_forward.10} parent=0 // loop_pre_header
    _
  $region3: #{ltx_block_forward.10} parent=0 // loop_header
    %s9 = sphi 0, %s13
    %p10 = scmp.ge.s32.totalorder %s9, 4
    %s16 = sphi 0, %s35
    %s17 = sphi 0, %s31
    %s18 = sphi 0, %s27
    %s19 = sphi 0, %s16
    %s20 = sphi 0, %s17
    %s21 = sphi 0, %s18
    %s22 = sphi 0, %s19
    %s23 = sphi 0, %s20
    %s24 = sphi 0, %s21
    %s40 = sphi 0, %s42
    %s43 = sphi 0, %s40
    %s44 = sphi 0, %s43
    %s60 = sphi 0, %s44
    %s68 = sphi 0, %s70
    %s71 = sphi 0, %s68
    %s72 = sphi 0, %s71
    %s88 = sphi 0, %s72
    %s96 = sphi 0, %s98
    %s99 = sphi 0, %s96
    %s100 = sphi 0, %s99
    %s116 = sphi 0, %s100
    %s124 = sphi 0, %s126
    %s127 = sphi 0, %s124
    %s128 = sphi 0, %s127
    %s144 = sphi 0, %s128
  $region4: #{ltx_block_forward.10} parent=0 // loop_header_branch
    %12 = sbr.rel (%p10) target = $region8
  $region5: #{ltx_block_forward.10} parent=0 // loop_body
    %s14 = ssub.s32 %s9, 1
    %s15 = ssub.s32 %s9, 2
    %s25 = sadd.s32 1, %s18
    %p26 = scmp.ge.s32.totalorder %s25, 1
    %s27 = scalar_select %p26, 0, %s25
    %s28 = sadd.s32 1, %s17
    %s29 = scalar_select %p26, %s28, %s17
    %p30 = scmp.ge.s32.totalorder %s29, 1
    %s31 = scalar_select %p30, 0, %s29
    %s32 = sadd.s32 1, %s16
    %s33 = scalar_select %p30, %s32, %s16
    %p34 = scmp.ge.s32.totalorder %s33, 2
    %s35 = scalar_select %p34, 0, %s33
    %s36 = ssub.s32 %s16, %s35
    %s37 = ssub.s32 %s17, %s31
    %s38 = sor.u32 %s36, %s37
    %p39 = scmp.eq.s32.totalorder %s38, 0
    %s41 = sadd.s32 %s40, 1
    %s42 = scalar_select %p39, %s40, %s41
    %p45 = pneg %p39
    %p46 = scmp.eq.s32.totalorder %s9, 1
    %p47 = por %p45, %p46
    %p48 = scmp.ne.s32.totalorder %s40, %s43
    %p49 = scmp.eq.s32.totalorder %s9, 0
    %p50 = por %p48, %p49
    %p51 = scmp.ne.s32.totalorder %s40, %s43
    %p52 = scmp.eq.s32.totalorder %s14, 1
    %p53 = por %p51, %p52
    %p54 = scmp.ne.s32.totalorder %s43, %s44
    %p55 = scmp.eq.s32.totalorder %s14, 0
    %p56 = por %p54, %p55
    %p57 = scmp.ne.s32.totalorder %s43, %s44
    %p58 = scmp.eq.s32.totalorder %s15, 1
    %p59 = por %p57, %p58
    %p61 = scmp.ne.s32.totalorder %s44, %s60
    %p62 = scmp.eq.s32.totalorder %s15, 0
    %p63 = por %p61, %p62
    %s64 = ssub.s32 %s16, %s35
    %s65 = ssub.s32 %s18, %s27
    %s66 = sor.u32 %s64, %s65
    %p67 = scmp.eq.s32.totalorder %s66, 0
    %s69 = sadd.s32 %s68, 1
    %s70 = scalar_select %p67, %s68, %s69
    %p73 = pneg %p67
    %p74 = scmp.eq.s32.totalorder %s9, 1
    %p75 = por %p73, %p74
    %p76 = scmp.ne.s32.totalorder %s68, %s71
    %p77 = scmp.eq.s32.totalorder %s9, 0
    %p78 = por %p76, %p77
    %p79 = scmp.ne.s32.totalorder %s68, %s71
    %p80 = scmp.eq.s32.totalorder %s14, 1
    %p81 = por %p79, %p80
    %p82 = scmp.ne.s32.totalorder %s71, %s72
    %p83 = scmp.eq.s32.totalorder %s14, 0
    %p84 = por %p82, %p83
    %p85 = scmp.ne.s32.totalorder %s71, %s72
    %p86 = scmp.eq.s32.totalorder %s15, 1
    %p87 = por %p85, %p86
    %p89 = scmp.ne.s32.totalorder %s72, %s88
    %p90 = scmp.eq.s32.totalorder %s15, 0
    %p91 = por %p89, %p90
    %s92 = ssub.s32 %s16, %s35
    %s93 = ssub.s32 %s18, %s27
    %s94 = sor.u32 %s92, %s93
    %p95 = scmp.eq.s32.totalorder %s94, 0
    %s97 = sadd.s32 %s96, 1
    %s98 = scalar_select %p95, %s96, %s97
    %p101 = pneg %p95
    %p102 = scmp.eq.s32.totalorder %s9, 1
    %p103 = por %p101, %p102
    %p104 = scmp.ne.s32.totalorder %s96, %s99
    %p105 = scmp.eq.s32.totalorder %s9, 0
    %p106 = por %p104, %p105
    %p107 = scmp.ne.s32.totalorder %s96, %s99
    %p108 = scmp.eq.s32.totalorder %s14, 1
    %p109 = por %p107, %p108
    %p110 = scmp.ne.s32.totalorder %s99, %s100
    %p111 = scmp.eq.s32.totalorder %s14, 0
    %p112 = por %p110, %p111
    %p113 = scmp.ne.s32.totalorder %s99, %s100
    %p114 = scmp.eq.s32.totalorder %s15, 1
    %p115 = por %p113, %p114
    %p117 = scmp.ne.s32.totalorder %s100, %s116
    %p118 = scmp.eq.s32.totalorder %s15, 0
    %p119 = por %p117, %p118
    %s120 = ssub.s32 %s16, %s35
    %s121 = ssub.s32 %s17, %s31
    %s122 = sor.u32 %s120, %s121
    %p123 = scmp.eq.s32.totalorder %s122, 0
    %s125 = sadd.s32 %s124, 1
    %s126 = scalar_select %p123, %s124, %s125
    %p129 = pneg %p123
    %p130 = scmp.eq.s32.totalorder %s9, 1
    %p131 = por %p129, %p130
    %p132 = scmp.ne.s32.totalorder %s124, %s127
    %p133 = scmp.eq.s32.totalorder %s9, 0
    %p134 = por %p132, %p133
    %p135 = scmp.ne.s32.totalorder %s124, %s127
    %p136 = scmp.eq.s32.totalorder %s14, 1
    %p137 = por %p135, %p136
    %p138 = scmp.ne.s32.totalorder %s127, %s128
    %p139 = scmp.eq.s32.totalorder %s14, 0
    %p140 = por %p138, %p139
    %p141 = scmp.ne.s32.totalorder %s127, %s128
    %p142 = scmp.eq.s32.totalorder %s15, 1
    %p143 = por %p141, %p142
    %p145 = scmp.ne.s32.totalorder %s128, %s144
    %p146 = scmp.eq.s32.totalorder %s15, 0
    %p147 = por %p145, %p146
    %p148 = scmp.le.s32.totalorder 1, %s9
    %p149 = scmp.lt.s32.totalorder %s9, 3
    %p150 = pnand %p148, %p149
    %p151 = pneg %p150
    // Predicated region
    $region9: #{ltx_block_forward.10} parent=5 // pred_check
      _
    $region10: #{ltx_block_forward.10} parent=5 // pred_check_branch
      %153 = sbr.rel (%p150) target = $region12
    $region11: #{ltx_block_forward.10} parent=5 // pred_region
      %s154 = ssub.s32 %s9, 1
    $region12: #{ltx_block_forward.10} parent=5 // pred_fallthru
      _
    %p155 = scmp.lt.s32.totalorder %s9, 2
    // Predicated region
    $region13: #{ltx_block_forward.10} parent=5 // pred_check
      %p156 = pneg %p155
    $region14: #{ltx_block_forward.10} parent=5 // pred_check_branch
      %158 = sbr.rel (%p156) target = $region16
    $region15: #{ltx_block_forward.10} parent=5 // pred_region
      // Predicated region
      $region17: #{ltx_block_forward.10} parent=15 // pred_check
        %p159 = pneg %p50
      $region18: #{ltx_block_forward.10} parent=15 // pred_check_branch
        %161 = sbr.rel (%p159) target = $region20
      $region19: #{ltx_block_forward.10} parent=15 // pred_region
        %s162 = smul.u32 2, %s17
        %p163 = scmp.lt.s32.totalorder %s16, 1
        %s164 = scalar_select %p163, %s16, 1
        %p165 = scmp.lt.s32.totalorder %s162, 1
        %s166 = scalar_select %p165, %s162, 1
        %s167 = smul.addr %s164, 2
        %s168 = sadd.s32 %s166, %s167
        %s169 = smul.addr %s168, 4
        %s170 = scalar_lea.vmem %s0, %s169
        %s171 = smul.u32 2, %s17
      $region20: #{ltx_block_forward.10} parent=15 // pred_fallthru
        _
      // Predicated region
      $region21: #{ltx_block_forward.10} parent=15 // pred_check
        %p172 = pneg %p78
      $region22: #{ltx_block_forward.10} parent=15 // pred_check_branch
        %174 = sbr.rel (%p172) target = $region24
      $region23: #{ltx_block_forward.10} parent=15 // pred_region
        %p175 = scmp.lt.s32.totalorder %s16, 1
        %s176 = scalar_select %p175, %s16, 1
        %p177 = scmp.lt.s32.totalorder %s18, 0
        %s178 = scalar_select %p177, %s18, 0
        %s179 = sadd.s32 %s178, %s176
        %s180 = smul.addr %s179, 4
        %s181 = scalar_lea.vmem %s1, %s180
      $region24: #{ltx_block_forward.10} parent=15 // pred_fallthru
        _
      // Predicated region
      $region25: #{ltx_block_forward.10} parent=15 // pred_check
        %p182 = pneg %p106
      $region26: #{ltx_block_forward.10} parent=15 // pred_check_branch
        %184 = sbr.rel (%p182) target = $region28
      $region27: #{ltx_block_forward.10} parent=15 // pred_region
        %p185 = scmp.lt.s32.totalorder %s16, 1
        %s186 = scalar_select %p185, %s16, 1
        %p187 = scmp.lt.s32.totalorder %s18, 0
        %s188 = scalar_select %p187, %s18, 0
        %s189 = sadd.s32 %s188, %s186
        %s190 = smul.addr %s189, 4
        %s191 = scalar_lea.vmem %s2, %s190
      $region28: #{ltx_block_forward.10} parent=15 // pred_fallthru
        _
    $region16: #{ltx_block_forward.10} parent=5 // pred_fallthru
      _
    %p192 = scmp.le.s32.totalorder 1, %s9
    %p193 = scmp.lt.s32.totalorder %s9, 3
    %p194 = pnand %p192, %p193
    %p195 = pneg %p194
    // Predicated region
    $region29: #{ltx_block_forward.10} parent=5 // pred_check
      _
    $region30: #{ltx_block_forward.10} parent=5 // pred_check_branch
      %197 = sbr.rel (%p194) target = $region32
    $region31: #{ltx_block_forward.10} parent=5 // pred_region
      %s198 = ssub.s32 %s9, 1
      %s199 = smul.u32 2, %s20
      %p200 = scmp.lt.s32.totalorder %s19, 1
      %s201 = scalar_select %p200, %s19, 1
      %p202 = scmp.lt.s32.totalorder %s199, 1
      %s203 = scalar_select %p202, %s199, 1
      %s204 = smul.addr %s201, 2
      %s205 = sadd.s32 %s203, %s204
      %s206 = smul.addr %s205, 4
      %s207 = scalar_lea.vmem %s0, %s206
      %p208 = pneg %p56
      %p209 = pneg %p53
      %p210 = scmp.lt.s32.totalorder %s19, 1
      %s211 = scalar_select %p210, %s19, 1
      %p212 = scmp.lt.s32.totalorder %s21, 0
      %s213 = scalar_select %p212, %s21, 0
      %s214 = sadd.s32 %s213, %s211
      %s215 = smul.addr %s214, 4
      %s216 = scalar_lea.vmem %s1, %s215
      %p217 = pneg %p84
      %p218 = pneg %p81
      %p219 = scmp.lt.s32.totalorder %s19, 1
      %s220 = scalar_select %p219, %s19, 1
      %p221 = scmp.lt.s32.totalorder %s21, 0
      %s222 = scalar_select %p221, %s21, 0
      %s223 = sadd.s32 %s222, %s220
      %s224 = smul.addr %s223, 4
      %s225 = scalar_lea.vmem %s2, %s224
      %p226 = pneg %p112
      %p227 = pneg %p109
      %p228 = pneg %p140
      %p229 = pneg %p137
      %s230 = smul.u32 2, %s20
      %p231 = scmp.lt.s32.totalorder %s19, 1
      %s232 = scalar_select %p231, %s19, 1
      %p233 = scmp.lt.s32.totalorder %s230, 1
      %s234 = scalar_select %p233, %s230, 1
      %s235 = smul.addr %s232, 2
      %s236 = sadd.s32 %s234, %s235
      %s237 = smul.addr %s236, 4
      %s238 = scalar_lea.vmem %s3, %s237
      %s239 = smul.u32 2, %s20
      %p240 = scmp.lt.s32.totalorder %s19, 1
      %s241 = scalar_select %p240, %s19, 1
      %p242 = scmp.lt.s32.totalorder %s239, 1
      %s243 = scalar_select %p242, %s239, 1
      %s244 = smul.addr %s241, 2
      %s245 = sadd.s32 %s243, %s244
      %s246 = smul.addr %s245, 4
      %s247 = scalar_lea.vmem %s0, %s246
      %s248 = smul.u32 2, %s20
      %p249 = scmp.lt.s32.totalorder %s19, 1
      %s250 = scalar_select %p249, %s19, 1
      %p251 = scmp.lt.s32.totalorder %s21, 0
      %s252 = scalar_select %p251, %s21, 0
      %s253 = sadd.s32 %s252, %s250
      %s254 = smul.addr %s253, 4
      %s255 = scalar_lea.vmem %s1, %s254
      %p256 = scmp.lt.s32.totalorder %s19, 1
      %s257 = scalar_select %p256, %s19, 1
      %p258 = scmp.lt.s32.totalorder %s21, 0
      %s259 = scalar_select %p258, %s21, 0
      %s260 = sadd.s32 %s259, %s257
      %s261 = smul.addr %s260, 4
      %s262 = scalar_lea.vmem %s2, %s261
      %s263 = smul.u32 2, %s20
      %p264 = scmp.lt.s32.totalorder %s19, 1
      %s265 = scalar_select %p264, %s19, 1
      %p266 = scmp.lt.s32.totalorder %s263, 1
      %s267 = scalar_select %p266, %s263, 1
      %s268 = smul.addr %s265, 2
      %s269 = sadd.s32 %s267, %s268
      %s270 = smul.addr %s269, 4
      %s271 = scalar_lea.vmem %s3, %s270
      %s272 = smul.u32 2, %s20
      %p274 = scmp.eq.s32.totalorder %s21, 0
      // Predicated region
      $region33: #{ltx_block_forward.10} parent=31 // pred_check
        %p275 = pneg %p274
      $region34: #{ltx_block_forward.10} parent=31 // pred_check_branch
        %277 = sbr.rel (%p275) target = $region36
      $region35: #{ltx_block_forward.10} parent=31 // pred_region
        %vm278 = vcmask 15360
        %279 = vst.msk [vmem:[#allocation2] sm:$0xff] %vm278, -inf
        %280 = vst.msk [vmem:[#allocation2 + $0x8] sm:$0xff] %vm278, -inf
        %281 = vst.msk [vmem:[#allocation3] sm:$0xff] %vm278, 0.0
        %282 = vst.msk [vmem:[#allocation3 + $0x8] sm:$0xff] %vm278, 0.0
        %vm283 = vcmask 261120
        %284 = vst.msk [vmem:[#allocation4] sm:$0xff] %vm283, 0.0
        %285 = vst.msk [vmem:[#allocation4 + $0x8] sm:$0xff] %vm283, 0.0
      $region36: #{ltx_block_forward.10} parent=31 // pred_fallthru
        _
      %v286 = vld [vmem:[%s247] sm:$0xf]
      %v287 = vld [vmem:[%s247 + $0x4] sm:$0xf]
      %v288 = vld [vmem:[%s255] sm:$0xf]
      %v289 = vld [vmem:[%s262] sm:$0xf]
      %v292 = vunpack.c.l.b16 %v286
      %v293 = vunpack.c.l.b16 %v287
      %v294 = vpack.c.b16 %v293, %v292
      %vm295 = vcmask 130048
      %v297 = vsel %vm295, %v294, 0
      %v300 = vsel %vm295, %v288, 0
      %302 = vmatprep.subr.bf16.mxu0 0
      %303 = vmatpush1.bf16.xpose.msra.mxu0 0
      %304 = vmatprep.subr.bf16.mxu0 0
      %305 = vmatpush1.bf16.xpose.msra.mxu0 0
      %306 = vmatprep.subr.bf16.mxu0 0
      %307 = vmatpush1.bf16.xpose.msra.mxu0 0
      %308 = vmatprep.subr.bf16.mxu0 0
      %309 = vmatpush1.bf16.xpose.msra.mxu0 0
      %310 = vmatprep.subr.bf16.mxu0 0
      %311 = vmatpush1.bf16.xpose.msra.mxu0 0
      %312 = vmatprep.subr.bf16.mxu0 0
      %313 = vmatpush1.bf16.xpose.msra.mxu0 0
      %314 = vmatprep.subr.bf16.mxu0 0
      %315 = vmatpush1.bf16.xpose.msra.mxu0 0
      %316 = vmatprep.subr.bf16.mxu0 0
      %317 = vmatpush1.bf16.xpose.msra.mxu0 %v300
      %318 = vmatprep.subr.bf16.mxu0 0
      %319 = vmatpush2.bf16.xpose.msra.mxu0 0
      %320 = vmatprep.subr.bf16.mxu0 0
      %321 = vmatpush2.bf16.xpose.msra.mxu0 0
      %322 = vmatprep.subr.bf16.mxu0 0
      %323 = vmatpush2.bf16.xpose.msra.mxu0 0
      %324 = vmatprep.subr.bf16.mxu0 0
      %325 = vmatpush2.bf16.xpose.msra.mxu0 0
      %326 = vmatprep.subr.bf16.mxu0 0
      %327 = vmatpush2.bf16.xpose.msra.mxu0 0
      %328 = vmatprep.subr.bf16.mxu0 0
      %329 = vmatpush2.bf16.xpose.msra.mxu0 0
      %330 = vmatprep.subr.bf16.mxu0 0
      %331 = vmatpush2.bf16.xpose.msra.mxu0 0
      %332 = vmatprep.subr.bf16.mxu0 0
      %333 = vmatpush2.bf16.xpose.msra.mxu0 0
      %334 = vmatprep.mubr.bf16.mxu0 0
      %335 = vmatmul.mubr.bf16.gmra.mxu0 %v297
      %v336 = vpop.f32.mrf.mxu0
      %v337 = vadd.f32 0.0, %v336
      %v338 = vpop.f32.mrf.mxu0
      %v339 = vpop.f32.mrf.mxu0
      %v340 = vadd.f32 0.0, %v339
      %v341 = vpop.f32.mrf.mxu0
      %342 = vdwg.mxu0
      %v343 = vld [vmem:[#allocation2] sm:$0xff]
      %v344 = vld [vmem:[#allocation2 + $0x8] sm:$0xff]
      %vm345 = vcmask 64512
      %v346 = vsel %vm345, %v337, -inf
      %347 = vmax.xlane.f32.xlu0 %v346
      %v348 = vpop.xlane.xlu0 %347
      %v349 = vsel %vm345, %v340, -inf
      %350 = vmax.xlane.f32.xlu0 %v349
      %v351 = vpop.xlane.xlu0 %350
      %v352 = vmax.f32 %v343, %v348
      %v353 = vmax.f32 %v344, %v351
      %v354 = vsub.f32 %v343, %v352
      %v355 = vsub.f32 %v344, %v353
      %v356 = vmul.f32 %v354, 1.442695
      %v357 = vpow.pop %v356
      %v358 = vmul.f32 %v355, 1.442695
      %v359 = vpow.pop %v358
      %361 = vset.pattern.permute.xlu0 0
      %362 = vperm.xlu0 %361, %v352
      %v363 = vpop.permute.xlu0 %362
      %366 = vset.pattern.permute.xlu0 0
      %367 = vperm.xlu0 %366, %v353
      %v368 = vpop.permute.xlu0 %367
      %v370 = vsub.f32 %v337, %v363
      %v371 = vsub.f32 %v340, %v368
      %v372 = vmul.f32 %v370, 1.442695
      %v373 = vpow.pop %v372
      %v374 = vmul.f32 %v371, 1.442695
      %v375 = vpow.pop %v374
      %v376 = vld [vmem:[#allocation3] sm:$0xff]
      %v377 = vld [vmem:[#allocation3 + $0x8] sm:$0xff]
      %v378 = vmul.f32 %v357, %v376
      %v379 = vmul.f32 %v359, %v377
      %v380 = vsel %vm345, %v373, 0.0
      %381 = vadd.xlane.f32.xlu0 %v380
      %v382 = vpop.xlane.xlu0 %381
      %v383 = vsel %vm345, %v375, 0.0
      %384 = vadd.xlane.f32.xlu0 %v383
      %v385 = vpop.xlane.xlu0 %384
      %v386 = vadd.f32 %v378, %v382
      %v387 = vadd.f32 %v379, %v385
      %vm388 = vcmask 7168
      %389 = vst.msk [vmem:[#allocation3] sm:$0xff] %vm388, %v386
      %390 = vst.msk [vmem:[#allocation3 + $0x8] sm:$0xff] %vm388, %v387
      %v391 = vld [vmem:[#allocation4] sm:$0xff]
      %v392 = vld [vmem:[#allocation4 + $0x8] sm:$0xff]
      %394 = vset.pattern.permute.xlu0 0
      %395 = vperm.xlu0 %394, %v357
      %v396 = vpop.permute.xlu0 %395
      %399 = vset.pattern.permute.xlu0 0
      %400 = vperm.xlu0 %399, %v359
      %v401 = vpop.permute.xlu0 %400
      %v403 = vmul.f32 %v396, %v391
      %v404 = vmul.f32 %v401, %v392
      %v405 = vpack.c.bf16 %v375, %v373
      %v407 = vsel %vm345, %v405, 0
      %vm409 = vcmask 1043456
      %v411 = vsel %vm409, %v289, 0
      %413 = vmatprep.subr.bf16.mxu0 0
      %414 = vmatpush1.bf16.msra.mxu0 0
      %415 = vmatprep.subr.bf16.mxu0 0
      %416 = vmatpush1.bf16.msra.mxu0 0
      %417 = vmatprep.subr.bf16.mxu0 0
      %418 = vmatpush1.bf16.msra.mxu0 0
      %419 = vmatprep.subr.bf16.mxu0 0
      %420 = vmatpush1.bf16.msra.mxu0 0
      %421 = vmatprep.subr.bf16.mxu0 0
      %422 = vmatpush1.bf16.msra.mxu0 0
      %423 = vmatprep.subr.bf16.mxu0 0
      %424 = vmatpush1.bf16.msra.mxu0 0
      %425 = vmatprep.subr.bf16.mxu0 0
      %426 = vmatpush1.bf16.msra.mxu0 0
      %427 = vmatprep.subr.bf16.mxu0 0
      %428 = vmatpush1.bf16.msra.mxu0 %v411
      %429 = vmatprep.subr.bf16.mxu0 0
      %430 = vmatpush2.bf16.msra.mxu0 0
      %431 = vmatprep.subr.bf16.mxu0 0
      %432 = vmatpush2.bf16.msra.mxu0 0
      %433 = vmatprep.subr.bf16.mxu0 0
      %434 = vmatpush2.bf16.msra.mxu0 0
      %435 = vmatprep.subr.bf16.mxu0 0
      %436 = vmatpush2.bf16.msra.mxu0 0
      %437 = vmatprep.subr.bf16.mxu0 0
      %438 = vmatpush2.bf16.msra.mxu0 0
      %439 = vmatprep.subr.bf16.mxu0 0
      %440 = vmatpush2.bf16.msra.mxu0 0
      %441 = vmatprep.subr.bf16.mxu0 0
      %442 = vmatpush2.bf16.msra.mxu0 0
      %443 = vmatprep.subr.bf16.mxu0 0
      %444 = vmatpush2.bf16.msra.mxu0 0
      %445 = vmatprep.mubr.bf16.mxu0 0
      %446 = vmatmul.mubr.bf16.gmra.mxu0 %v407
      %v447 = vpop.f32.mrf.mxu0
      %v448 = vadd.f32 0.0, %v447
      %v449 = vpop.f32.mrf.mxu0
      %v450 = vpop.f32.mrf.mxu0
      %v451 = vadd.f32 0.0, %v450
      %v452 = vpop.f32.mrf.mxu0
      %453 = vdwg.mxu0
      %v454 = vadd.f32 %v403, %v448
      %v455 = vadd.f32 %v404, %v451
      %456 = vst.msk [vmem:[#allocation4] sm:$0xff] %vm295, %v454
      %457 = vst.msk [vmem:[#allocation4 + $0x8] sm:$0xff] %vm295, %v455
      %458 = vst.msk [vmem:[#allocation2] sm:$0xff] %vm388, %v352
      %459 = vst.msk [vmem:[#allocation2 + $0x8] sm:$0xff] %vm388, %v353
      %460 = vrot.lane.b32.xlu0 %v294, 112
      %v461 = vpop.permute.xlu0 %460
      %v463 = vunpack.c.l.b16 %v288
      %v464 = vpack.c.b16 %v463, %v463
      %465 = vrot.lane.b32.xlu0 %v464, 112
      %v466 = vpop.permute.xlu0 %465
      %v468 = vsel %vm295, %v461, 0
      %v471 = vsel %vm295, %v466, 0
      %473 = vmatprep.subr.bf16.mxu0 0
      %474 = vmatpush1.bf16.xpose.msra.mxu0 0
      %475 = vmatprep.subr.bf16.mxu0 0
      %476 = vmatpush1.bf16.xpose.msra.mxu0 0
      %477 = vmatprep.subr.bf16.mxu0 0
      %478 = vmatpush1.bf16.xpose.msra.mxu0 0
      %479 = vmatprep.subr.bf16.mxu0 0
      %480 = vmatpush1.bf16.xpose.msra.mxu0 0
      %481 = vmatprep.subr.bf16.mxu0 0
      %482 = vmatpush1.bf16.xpose.msra.mxu0 0
      %483 = vmatprep.subr.bf16.mxu0 0
      %484 = vmatpush1.bf16.xpose.msra.mxu0 0
      %485 = vmatprep.subr.bf16.mxu0 0
      %486 = vmatpush1.bf16.xpose.msra.mxu0 0
      %487 = vmatprep.subr.bf16.mxu0 0
      %488 = vmatpush1.bf16.xpose.msra.mxu0 %v471
      %489 = vmatprep.subr.bf16.mxu0 0
      %490 = vmatpush2.bf16.xpose.msra.mxu0 0
      %491 = vmatprep.subr.bf16.mxu0 0
      %492 = vmatpush2.bf16.xpose.msra.mxu0 0
      %493 = vmatprep.subr.bf16.mxu0 0
      %494 = vmatpush2.bf16.xpose.msra.mxu0 0
      %495 = vmatprep.subr.bf16.mxu0 0
      %496 = vmatpush2.bf16.xpose.msra.mxu0 0
      %497 = vmatprep.subr.bf16.mxu0 0
      %498 = vmatpush2.bf16.xpose.msra.mxu0 0
      %499 = vmatprep.subr.bf16.mxu0 0
      %500 = vmatpush2.bf16.xpose.msra.mxu0 0
      %501 = vmatprep.subr.bf16.mxu0 0
      %502 = vmatpush2.bf16.xpose.msra.mxu0 0
      %503 = vmatprep.subr.bf16.mxu0 0
      %504 = vmatpush2.bf16.xpose.msra.mxu0 0
      %505 = vmatprep.mubr.bf16.mxu0 0
      %506 = vmatmul.mubr.bf16.gmra.mxu0 %v468
      %v507 = vpop.f32.mrf.mxu0
      %v508 = vadd.f32 0.0, %v507
      %v509 = vpop.f32.mrf.mxu0
      %v510 = vpop.f32.mrf.mxu0
      %v511 = vadd.f32 0.0, %v510
      %v512 = vpop.f32.mrf.mxu0
      %513 = vdwg.mxu0
      %v514 = vld [vmem:[#allocation2] sm:$0xff]
      %v515 = vld [vmem:[#allocation2 + $0x8] sm:$0xff]
      %v516 = vsel %vm345, %v508, -inf
      %517 = vmax.xlane.f32.xlu0 %v516
      %v518 = vpop.xlane.xlu0 %517
      %v519 = vsel %vm345, %v511, -inf
      %520 = vmax.xlane.f32.xlu0 %v519
      %v521 = vpop.xlane.xlu0 %520
      %v522 = vmax.f32 %v514, %v518
      %v523 = vmax.f32 %v515, %v521
      %v524 = vsub.f32 %v514, %v522
      %v525 = vsub.f32 %v515, %v523
      %v526 = vmul.f32 %v524, 1.442695
      %v527 = vpow.pop %v526
      %v528 = vmul.f32 %v525, 1.442695
      %v529 = vpow.pop %v528
      %531 = vset.pattern.permute.xlu0 1
      %532 = vperm.xlu0 %531, %v522
      %v533 = vpop.permute.xlu0 %532
      %536 = vset.pattern.permute.xlu0 1
      %537 = vperm.xlu0 %536, %v523
      %v538 = vpop.permute.xlu0 %537
      %v540 = vsub.f32 %v508, %v533
      %v541 = vsub.f32 %v511, %v538
      %v542 = vmul.f32 %v540, 1.442695
      %v543 = vpow.pop %v542
      %v544 = vmul.f32 %v541, 1.442695
      %v545 = vpow.pop %v544
      %v546 = vld [vmem:[#allocation3] sm:$0xff]
      %v547 = vld [vmem:[#allocation3 + $0x8] sm:$0xff]
      %v548 = vmul.f32 %v527, %v546
      %v549 = vmul.f32 %v529, %v547
      %v550 = vsel %vm345, %v543, 0.0
      %551 = vadd.xlane.f32.xlu0 %v550
      %v552 = vpop.xlane.xlu0 %551
      %v553 = vsel %vm345, %v545, 0.0
      %554 = vadd.xlane.f32.xlu0 %v553
      %v555 = vpop.xlane.xlu0 %554
      %v556 = vadd.f32 %v548, %v552
      %v557 = vadd.f32 %v549, %v555
      %vm558 = vcmask 15368
      %559 = vst.msk [vmem:[#allocation3] sm:$0xff] %vm558, %v556
      %560 = vst.msk [vmem:[#allocation3 + $0x8] sm:$0xff] %vm558, %v557
      %v561 = vld [vmem:[#allocation4] sm:$0xff]
      %v562 = vld [vmem:[#allocation4 + $0x8] sm:$0xff]
      %564 = vset.pattern.permute.xlu0 1
      %565 = vperm.xlu0 %564, %v527
      %v566 = vpop.permute.xlu0 %565
      %569 = vset.pattern.permute.xlu0 1
      %570 = vperm.xlu0 %569, %v529
      %v571 = vpop.permute.xlu0 %570
      %v573 = vmul.f32 %v566, %v561
      %v574 = vmul.f32 %v571, %v562
      %v575 = vpack.c.bf16 %v545, %v543
      %v577 = vunpack.c.l.b16 %v289
      %v578 = vpack.c.b16 %v577, %v577
      %579 = vrot.lane.b32.xlu0 %v578, 112
      %v580 = vpop.permute.xlu0 %579
      %v582 = vsel %vm345, %v575, 0
      %v585 = vsel %vm409, %v580, 0
      %587 = vmatprep.subr.bf16.mxu0 0
      %588 = vmatpush1.bf16.msra.mxu0 0
      %589 = vmatprep.subr.bf16.mxu0 0
      %590 = vmatpush1.bf16.msra.mxu0 0
      %591 = vmatprep.subr.bf16.mxu0 0
      %592 = vmatpush1.bf16.msra.mxu0 0
      %593 = vmatprep.subr.bf16.mxu0 0
      %594 = vmatpush1.bf16.msra.mxu0 0
      %595 = vmatprep.subr.bf16.mxu0 0
      %596 = vmatpush1.bf16.msra.mxu0 0
      %597 = vmatprep.subr.bf16.mxu0 0
      %598 = vmatpush1.bf16.msra.mxu0 0
      %599 = vmatprep.subr.bf16.mxu0 0
      %600 = vmatpush1.bf16.msra.mxu0 0
      %601 = vmatprep.subr.bf16.mxu0 0
      %602 = vmatpush1.bf16.msra.mxu0 %v585
      %603 = vmatprep.subr.bf16.mxu0 0
      %604 = vmatpush2.bf16.msra.mxu0 0
      %605 = vmatprep.subr.bf16.mxu0 0
      %606 = vmatpush2.bf16.msra.mxu0 0
      %607 = vmatprep.subr.bf16.mxu0 0
      %608 = vmatpush2.bf16.msra.mxu0 0
      %609 = vmatprep.subr.bf16.mxu0 0
      %610 = vmatpush2.bf16.msra.mxu0 0
      %611 = vmatprep.subr.bf16.mxu0 0
      %612 = vmatpush2.bf16.msra.mxu0 0
      %613 = vmatprep.subr.bf16.mxu0 0
      %614 = vmatpush2.bf16.msra.mxu0 0
      %615 = vmatprep.subr.bf16.mxu0 0
      %616 = vmatpush2.bf16.msra.mxu0 0
      %617 = vmatprep.subr.bf16.mxu0 0
      %618 = vmatpush2.bf16.msra.mxu0 0
      %619 = vmatprep.mubr.bf16.mxu0 0
      %620 = vmatmul.mubr.bf16.gmra.mxu0 %v582
      %v621 = vpop.f32.mrf.mxu0
      %v622 = vadd.f32 0.0, %v621
      %v623 = vpop.f32.mrf.mxu0
      %v624 = vpop.f32.mrf.mxu0
      %v625 = vadd.f32 0.0, %v624
      %v626 = vpop.f32.mrf.mxu0
      %627 = vdwg.mxu0
      %630 = vrot.lane.b32.xlu0 %v622, 16
      %v631 = vpop.permute.xlu0 %630
      %632 = vrot.lane.b32.xlu0 %v625, 16
      %v633 = vpop.permute.xlu0 %632
      %v636 = vadd.f32 %v573, %v631
      %v637 = vadd.f32 %v574, %v633
      %vm638 = vcmask 261248
      %639 = vst.msk [vmem:[#allocation4] sm:$0xff] %vm638, %v636
      %640 = vst.msk [vmem:[#allocation4 + $0x8] sm:$0xff] %vm638, %v637
      %641 = vst.msk [vmem:[#allocation2] sm:$0xff] %vm558, %v522
      %642 = vst.msk [vmem:[#allocation2 + $0x8] sm:$0xff] %vm558, %v523
      // Predicated region
      $region37: #{ltx_block_forward.10} parent=31 // pred_check
        %p643 = pneg %p274
      $region38: #{ltx_block_forward.10} parent=31 // pred_check_branch
        %645 = sbr.rel (%p643) target = $region40
      $region39: #{ltx_block_forward.10} parent=31 // pred_region
        %v646 = vld [vmem:[#allocation3] sm:$0xff]
        %v647 = vld [vmem:[#allocation3 + $0x8] sm:$0xff]
        %v648 = vrcp.pop %v646
        %v649 = vrcp.pop %v647
        %v650 = vld [vmem:[#allocation4] sm:$0xff]
        %v651 = vld [vmem:[#allocation4 + $0x8] sm:$0xff]
        %653 = vset.pattern.permute.xlu0 0
        %654 = vperm.xlu0 %653, %v648
        %v655 = vpop.permute.xlu0 %654
        %658 = vset.pattern.permute.xlu0 0
        %659 = vperm.xlu0 %658, %v649
        %v660 = vpop.permute.xlu0 %659
        %v662 = vmul.f32 %v650, %v655
        %v663 = vmul.f32 %v651, %v660
        %v664 = vpack.c.bf16 %v663, %v662
        %v666 = vunpack.c.l.b16 %v664
        %v667 = vunpack.c.h.b16 %v664
        %v668 = vpack.c.b16 %v666, %v666
        %v669 = vpack.c.b16 %v667, %v667
        %vm672 = vcmask 125952
        %673 = vst.msk [vmem:[%s271] sm:$0xf] %vm672, %v668
        %674 = vst.msk [vmem:[%s271 + $0x4] sm:$0xf] %vm672, %v669
        %v675 = vld [vmem:[#allocation3] sm:$0xff]
        %v676 = vld [vmem:[#allocation3 + $0x8] sm:$0xff]
        %v677 = vrcp.pop %v675
        %v678 = vrcp.pop %v676
        %v679 = vld [vmem:[#allocation4] sm:$0xff]
        %v680 = vld [vmem:[#allocation4 + $0x8] sm:$0xff]
        %682 = vset.pattern.permute.xlu0 1
        %683 = vperm.xlu0 %682, %v677
        %v684 = vpop.permute.xlu0 %683
        %687 = vset.pattern.permute.xlu0 1
        %688 = vperm.xlu0 %687, %v678
        %v689 = vpop.permute.xlu0 %688
        %v691 = vmul.f32 %v679, %v684
        %v692 = vmul.f32 %v680, %v689
        %v693 = vpack.c.bf16 %v692, %v691
        %v695 = vunpack.c.l.b16 %v693
        %v696 = vunpack.c.h.b16 %v693
        %v697 = vpack.c.b16 %v695, %v695
        %v698 = vpack.c.b16 %v696, %v696
        %vm701 = vcmask 257152
        %702 = vst.msk [vmem:[%s271] sm:$0xf] %vm701, %v697
        %703 = vst.msk [vmem:[%s271 + $0x4] sm:$0xf] %vm701, %v698
      $region40: #{ltx_block_forward.10} parent=31 // pred_fallthru
        _
      %s704 = smul.u32 2, %s20
      %p705 = scmp.lt.s32.totalorder %s19, 1
      %s706 = scalar_select %p705, %s19, 1
      %p707 = scmp.lt.s32.totalorder %s704, 1
      %s708 = scalar_select %p707, %s704, 1
      %s709 = smul.addr %s706, 2
      %s710 = sadd.s32 %s708, %s709
      %s711 = smul.addr %s710, 4
      %s712 = scalar_lea.vmem %s3, %s711
      // Predicated region
      $region41: #{ltx_block_forward.10} parent=31 // pred_check
        %p713 = pneg %p137
      $region42: #{ltx_block_forward.10} parent=31 // pred_check_branch
        %715 = sbr.rel (%p713) target = $region44
      $region43: #{ltx_block_forward.10} parent=31 // pred_region
        %s716 = smul.u32 2, %s20
      $region44: #{ltx_block_forward.10} parent=31 // pred_fallthru
        _
    $region32: #{ltx_block_forward.10} parent=5 // pred_fallthru
      _
    %p717 = scmp.le.s32.totalorder 2, %s9
    // Predicated region
    $region45: #{ltx_block_forward.10} parent=5 // pred_check
      %p718 = pneg %p717
    $region46: #{ltx_block_forward.10} parent=5 // pred_check_branch
      %720 = sbr.rel (%p718) target = $region48
    $region47: #{ltx_block_forward.10} parent=5 // pred_region
      %s721 = ssub.s32 %s9, 2
      // Predicated region
      $region49: #{ltx_block_forward.10} parent=47 // pred_check
        %p722 = pneg %p143
      $region50: #{ltx_block_forward.10} parent=47 // pred_check_branch
        %724 = sbr.rel (%p722) target = $region52
      $region51: #{ltx_block_forward.10} parent=47 // pred_region
        %s725 = smul.u32 2, %s23
        %p726 = scmp.lt.s32.totalorder %s22, 1
        %s727 = scalar_select %p726, %s22, 1
        %p728 = scmp.lt.s32.totalorder %s725, 1
        %s729 = scalar_select %p728, %s725, 1
        %s730 = smul.addr %s727, 2
        %s731 = sadd.s32 %s729, %s730
        %s732 = smul.addr %s731, 4
        %s733 = scalar_lea.vmem %s3, %s732
      $region52: #{ltx_block_forward.10} parent=47 // pred_fallthru
        _
    $region48: #{ltx_block_forward.10} parent=5 // pred_fallthru
      _
  $region6: #{ltx_block_forward.10} parent=0 // loop_footer
    %s13 = sadd.s32 1, %s9
  $region7: #{ltx_block_forward.10} parent=0 // loop_footer_branch
    %8 = sbr.rel target = $region3
  $region8: #{ltx_block_forward.10} parent=0 // loop_exit
    _

// kernel: ltx_block_forward.11
$region0: #{ltx_block_forward.11}
  #allocation0 [shape = 'u32[]', space=smem, size = 0x4, offset = 0x4, fixed_abs, tag = 'smem constant byte address 0x4 - core index']
  #allocation1 [shape = 'u32[144,128]{1,0:T(1,128)}', space=vmem, size = 0x12000, scoped, tag = 'internal scratch']
  #allocation2 [shape = 'f32[16,32]{1,0:T(8,128)}', space=vmem, size = 0x2000, scoped, tag = 'scratch operand']
  #allocation3 [shape = 'bf16[16,32]{1,0:T(8,128)(2,1)}', space=vmem, size = 0x1000, scoped, tag = 'scratch operand']
  #allocation4 [shape = 'f32[16,32]{1,0:T(8,128)}', space=vmem, size = 0x2000, scoped, tag = 'scratch operand']
  %s0 = inlined_call_operand.vmem [shape: bf16[2,16,32], index: 0, kind: input, shape index: {}]
  %s1 = inlined_call_operand.vmem [shape: bf16[32,32], index: 1, kind: input, shape index: {}]
  %s2 = inlined_call_operand.vmem [shape: f32[1,32], index: 2, kind: input, shape index: {}]
  %s3 = inlined_call_operand.vmem [shape: f32[2,16,32], index: 3, kind: input, shape index: {}]
  %s4 = inlined_call_operand.vmem [shape: f32[2,1,32], index: 4, kind: input, shape index: {}]
  %s5 = inlined_call_operand.vmem [shape: f32[2,1,32], index: 5, kind: input, shape index: {}]
  %s6 = inlined_call_operand.vmem [shape: f32[2,1,32], index: 6, kind: input, shape index: {}]
  %s7 = inlined_call_operand.vmem [shape: bf16[32,128], index: 7, kind: input, shape index: {}]
  %s8 = inlined_call_operand.vmem [shape: f32[1,128], index: 8, kind: input, shape index: {}]
  %s9 = inlined_call_operand.vmem [shape: bf16[128,32], index: 9, kind: input, shape index: {}]
  %s10 = inlined_call_operand.vmem [shape: f32[1,32], index: 10, kind: input, shape index: {}]
  %s11 = inlined_call_operand.hbm [shape: f32[2,16,32], index: 11, kind: output, shape index: {}]
  %s12 = sld [smem:[#allocation0]]
  $region85: #{ltx_block_forward.11} parent=0
    _
  %s14 = ssub.s32 1, %s12
  %s15 = scalar_select 0, %s14, %s12
  $region1: #{ltx_block_forward.11} parent=0
    #allocation5 [shape = 'u8[16384]{0}', space=vmem, size = 0x4000, scoped, tag = 'output window, operand 0']
    #allocation6 [shape = 's32[2]{0}', space=sflag, size = 0x8, scoped, tag = 'scoped memory for ltx_block_forward.11']
    %16 = vsyncpa [#allocation6], 0
    %s17 = scalar_lea.sflag [#allocation6], 1
    %18 = vsyncpa %s17, 0
    loop: start=0, step=1, limit=4
    $region2: #{ltx_block_forward.11} parent=1 // loop_pre_header
      _
    $region3: #{ltx_block_forward.11} parent=1 // loop_header
      %s20 = sphi 0, %s24
      %p21 = scmp.ge.s32.totalorder %s20, 4
      %s27 = sphi 0, %s46
      %s28 = sphi 0, %s42
      %s29 = sphi 0, %s38
      %s30 = sphi 0, %s27
      %s31 = sphi 0, %s28
      %s32 = sphi 0, %s29
      %s33 = sphi 0, %s30
      %s34 = sphi 0, %s31
      %s35 = sphi 0, %s32
      %s51 = sphi 0, %s53
      %s54 = sphi 0, %s51
      %s55 = sphi 0, %s54
      %s71 = sphi 0, %s55
      %s75 = sphi 0, %s75
      %s77 = sphi 0, %s75
      %s78 = sphi 0, %s77
      %s92 = sphi 0, %s78
      %s96 = sphi 0, %s96
      %s98 = sphi 0, %s96
      %s99 = sphi 0, %s98
      %s113 = sphi 0, %s99
      %s121 = sphi 0, %s123
      %s124 = sphi 0, %s121
      %s125 = sphi 0, %s124
      %s141 = sphi 0, %s125
      %s147 = sphi 0, %s149
      %s150 = sphi 0, %s147
      %s151 = sphi 0, %s150
      %s167 = sphi 0, %s151
      %s173 = sphi 0, %s175
      %s176 = sphi 0, %s173
      %s177 = sphi 0, %s176
      %s193 = sphi 0, %s177
      %s199 = sphi 0, %s201
      %s202 = sphi 0, %s199
      %s203 = sphi 0, %s202
      %s219 = sphi 0, %s203
      %s225 = sphi 0, %s227
      %s228 = sphi 0, %s225
      %s229 = sphi 0, %s228
      %s245 = sphi 0, %s229
      %s251 = sphi 0, %s253
      %s254 = sphi 0, %s251
      %s255 = sphi 0, %s254
      %s271 = sphi 0, %s255
      %s277 = sphi 0, %s279
      %s280 = sphi 0, %s277
      %s281 = sphi 0, %s280
      %s297 = sphi 0, %s281
      %s301 = sphi 0, %s301
      %s303 = sphi 0, %s301
      %s304 = sphi 0, %s303
      %s318 = sphi 0, %s304
      %s326 = sphi 0, %s328
      %s329 = sphi 0, %s326
      %s330 = sphi 0, %s329
      %s346 = sphi 0, %s330
    $region4: #{ltx_block_forward.11} parent=1 // loop_header_branch
      %23 = sbr.rel (%p21) target = $region8
    $region5: #{ltx_block_forward.11} parent=1 // loop_body
      %s25 = ssub.s32 %s20, 1
      %s26 = ssub.s32 %s20, 2
      %s36 = sadd.s32 1, %s29
      %p37 = scmp.ge.s32.totalorder %s36, 1
      %s38 = scalar_select %p37, 0, %s36
      %s39 = sadd.s32 1, %s28
      %s40 = scalar_select %p37, %s39, %s28
      %p41 = scmp.ge.s32.totalorder %s40, 1
      %s42 = scalar_select %p41, 0, %s40
      %s43 = sadd.s32 1, %s27
      %s44 = scalar_select %p41, %s43, %s27
      %p45 = scmp.ge.s32.totalorder %s44, 2
      %s46 = scalar_select %p45, 0, %s44
      %s47 = ssub.s32 %s27, %s46
      %s48 = ssub.s32 %s28, %s42
      %s49 = sor.u32 %s47, %s48
      %p50 = scmp.eq.s32.totalorder %s49, 0
      %s52 = sadd.s32 %s51, 1
      %s53 = scalar_select %p50, %s51, %s52
      %p56 = pneg %p50
      %p57 = scmp.eq.s32.totalorder %s20, 1
      %p58 = por %p56, %p57
      %p59 = scmp.ne.s32.totalorder %s51, %s54
      %p60 = scmp.eq.s32.totalorder %s20, 0
      %p61 = por %p59, %p60
      %p62 = scmp.ne.s32.totalorder %s51, %s54
      %p63 = scmp.eq.s32.totalorder %s25, 1
      %p64 = por %p62, %p63
      %p65 = scmp.ne.s32.totalorder %s54, %s55
      %p66 = scmp.eq.s32.totalorder %s25, 0
      %p67 = por %p65, %p66
      %p68 = scmp.ne.s32.totalorder %s54, %s55
      %p69 = scmp.eq.s32.totalorder %s26, 1
      %p70 = por %p68, %p69
      %p72 = scmp.ne.s32.totalorder %s55, %s71
      %p73 = scmp.eq.s32.totalorder %s26, 0
      %p74 = por %p72, %p73
      %s76 = sadd.s32 %s75, 1
      %p79 = scmp.eq.s32.totalorder %s20, 1
      %p80 = scmp.ne.s32.totalorder %s75, %s77
      %p81 = scmp.eq.s32.totalorder %s20, 0
      %p82 = por %p80, %p81
      %p83 = scmp.ne.s32.totalorder %s75, %s77
      %p84 = scmp.eq.s32.totalorder %s25, 1
      %p85 = por %p83, %p84
      %p86 = scmp.ne.s32.totalorder %s77, %s78
      %p87 = scmp.eq.s32.totalorder %s25, 0
      %p88 = por %p86, %p87
      %p89 = scmp.ne.s32.totalorder %s77, %s78
      %p90 = scmp.eq.s32.totalorder %s26, 1
      %p91 = por %p89, %p90
      %p93 = scmp.ne.s32.totalorder %s78, %s92
      %p94 = scmp.eq.s32.totalorder %s26, 0
      %p95 = por %p93, %p94
      %s97 = sadd.s32 %s96, 1
      %p100 = scmp.eq.s32.totalorder %s20, 1
      %p101 = scmp.ne.s32.totalorder %s96, %s98
      %p102 = scmp.eq.s32.totalorder %s20, 0
      %p103 = por %p101, %p102
      %p104 = scmp.ne.s32.totalorder %s96, %s98
      %p105 = scmp.eq.s32.totalorder %s25, 1
      %p106 = por %p104, %p105
      %p107 = scmp.ne.s32.totalorder %s98, %s99
      %p108 = scmp.eq.s32.totalorder %s25, 0
      %p109 = por %p107, %p108
      %p110 = scmp.ne.s32.totalorder %s98, %s99
      %p111 = scmp.eq.s32.totalorder %s26, 1
      %p112 = por %p110, %p111
      %p114 = scmp.ne.s32.totalorder %s99, %s113
      %p115 = scmp.eq.s32.totalorder %s26, 0
      %p116 = por %p114, %p115
      %s117 = ssub.s32 %s27, %s46
      %s118 = ssub.s32 %s28, %s42
      %s119 = sor.u32 %s117, %s118
      %p120 = scmp.eq.s32.totalorder %s119, 0
      %s122 = sadd.s32 %s121, 1
      %s123 = scalar_select %p120, %s121, %s122
      %p126 = pneg %p120
      %p127 = scmp.eq.s32.totalorder %s20, 1
      %p128 = por %p126, %p127
      %p129 = scmp.ne.s32.totalorder %s121, %s124
      %p130 = scmp.eq.s32.totalorder %s20, 0
      %p131 = por %p129, %p130
      %p132 = scmp.ne.s32.totalorder %s121, %s124
      %p133 = scmp.eq.s32.totalorder %s25, 1
      %p134 = por %p132, %p133
      %p135 = scmp.ne.s32.totalorder %s124, %s125
      %p136 = scmp.eq.s32.totalorder %s25, 0
      %p137 = por %p135, %p136
      %p138 = scmp.ne.s32.totalorder %s124, %s125
      %p139 = scmp.eq.s32.totalorder %s26, 1
      %p140 = por %p138, %p139
      %p142 = scmp.ne.s32.totalorder %s125, %s141
      %p143 = scmp.eq.s32.totalorder %s26, 0
      %p144 = por %p142, %p143
      %s145 = ssub.s32 %s27, %s46
      %p146 = scmp.eq.s32.totalorder %s145, 0
      %s148 = sadd.s32 %s147, 1
      %s149 = scalar_select %p146, %s147, %s148
      %p152 = pneg %p146
      %p153 = scmp.eq.s32.totalorder %s20, 1
      %p154 = por %p152, %p153
      %p155 = scmp.ne.s32.totalorder %s147, %s150
      %p156 = scmp.eq.s32.totalorder %s20, 0
      %p157 = por %p155, %p156
      %p158 = scmp.ne.s32.totalorder %s147, %s150
      %p159 = scmp.eq.s32.totalorder %s25, 1
      %p160 = por %p158, %p159
      %p161 = scmp.ne.s32.totalorder %s150, %s151
      %p162 = scmp.eq.s32.totalorder %s25, 0
      %p163 = por %p161, %p162
      %p164 = scmp.ne.s32.totalorder %s150, %s151
      %p165 = scmp.eq.s32.totalorder %s26, 1
      %p166 = por %p164, %p165
      %p168 = scmp.ne.s32.totalorder %s151, %s167
      %p169 = scmp.eq.s32.totalorder %s26, 0
      %p170 = por %p168, %p169
      %s171 = ssub.s32 %s27, %s46
      %p172 = scmp.eq.s32.totalorder %s171, 0
      %s174 = sadd.s32 %s173, 1
      %s175 = scalar_select %p172, %s173, %s174
      %p178 = pneg %p172
      %p179 = scmp.eq.s32.totalorder %s20, 1
      %p180 = por %p178, %p179
      %p181 = scmp.ne.s32.totalorder %s173, %s176
      %p182 = scmp.eq.s32.totalorder %s20, 0
      %p183 = por %p181, %p182
      %p184 = scmp.ne.s32.totalorder %s173, %s176
      %p185 = scmp.eq.s32.totalorder %s25, 1
      %p186 = por %p184, %p185
      %p187 = scmp.ne.s32.totalorder %s176, %s177
      %p188 = scmp.eq.s32.totalorder %s25, 0
      %p189 = por %p187, %p188
      %p190 = scmp.ne.s32.totalorder %s176, %s177
      %p191 = scmp.eq.s32.totalorder %s26, 1
      %p192 = por %p190, %p191
      %p194 = scmp.ne.s32.totalorder %s177, %s193
      %p195 = scmp.eq.s32.totalorder %s26, 0
      %p196 = por %p194, %p195
      %s197 = ssub.s32 %s27, %s46
      %p198 = scmp.eq.s32.totalorder %s197, 0
      %s200 = sadd.s32 %s199, 1
      %s201 = scalar_select %p198, %s199, %s200
      %p204 = pneg %p198
      %p205 = scmp.eq.s32.totalorder %s20, 1
      %p206 = por %p204, %p205
      %p207 = scmp.ne.s32.totalorder %s199, %s202
      %p208 = scmp.eq.s32.totalorder %s20, 0
      %p209 = por %p207, %p208
      %p210 = scmp.ne.s32.totalorder %s199, %s202
      %p211 = scmp.eq.s32.totalorder %s25, 1
      %p212 = por %p210, %p211
      %p213 = scmp.ne.s32.totalorder %s202, %s203
      %p214 = scmp.eq.s32.totalorder %s25, 0
      %p215 = por %p213, %p214
      %p216 = scmp.ne.s32.totalorder %s202, %s203
      %p217 = scmp.eq.s32.totalorder %s26, 1
      %p218 = por %p216, %p217
      %p220 = scmp.ne.s32.totalorder %s203, %s219
      %p221 = scmp.eq.s32.totalorder %s26, 0
      %p222 = por %p220, %p221
      %s223 = ssub.s32 %s29, %s38
      %p224 = scmp.eq.s32.totalorder %s223, 0
      %s226 = sadd.s32 %s225, 1
      %s227 = scalar_select %p224, %s225, %s226
      %p230 = pneg %p224
      %p231 = scmp.eq.s32.totalorder %s20, 1
      %p232 = por %p230, %p231
      %p233 = scmp.ne.s32.totalorder %s225, %s228
      %p234 = scmp.eq.s32.totalorder %s20, 0
      %p235 = por %p233, %p234
      %p236 = scmp.ne.s32.totalorder %s225, %s228
      %p237 = scmp.eq.s32.totalorder %s25, 1
      %p238 = por %p236, %p237
      %p239 = scmp.ne.s32.totalorder %s228, %s229
      %p240 = scmp.eq.s32.totalorder %s25, 0
      %p241 = por %p239, %p240
      %p242 = scmp.ne.s32.totalorder %s228, %s229
      %p243 = scmp.eq.s32.totalorder %s26, 1
      %p244 = por %p242, %p243
      %p246 = scmp.ne.s32.totalorder %s229, %s245
      %p247 = scmp.eq.s32.totalorder %s26, 0
      %p248 = por %p246, %p247
      %s249 = ssub.s32 %s29, %s38
      %p250 = scmp.eq.s32.totalorder %s249, 0
      %s252 = sadd.s32 %s251, 1
      %s253 = scalar_select %p250, %s251, %s252
      %p256 = pneg %p250
      %p257 = scmp.eq.s32.totalorder %s20, 1
      %p258 = por %p256, %p257
      %p259 = scmp.ne.s32.totalorder %s251, %s254
      %p260 = scmp.eq.s32.totalorder %s20, 0
      %p261 = por %p259, %p260
      %p262 = scmp.ne.s32.totalorder %s251, %s254
      %p263 = scmp.eq.s32.totalorder %s25, 1
      %p264 = por %p262, %p263
      %p265 = scmp.ne.s32.totalorder %s254, %s255
      %p266 = scmp.eq.s32.totalorder %s25, 0
      %p267 = por %p265, %p266
      %p268 = scmp.ne.s32.totalorder %s254, %s255
      %p269 = scmp.eq.s32.totalorder %s26, 1
      %p270 = por %p268, %p269
      %p272 = scmp.ne.s32.totalorder %s255, %s271
      %p273 = scmp.eq.s32.totalorder %s26, 0
      %p274 = por %p272, %p273
      %s275 = ssub.s32 %s29, %s38
      %p276 = scmp.eq.s32.totalorder %s275, 0
      %s278 = sadd.s32 %s277, 1
      %s279 = scalar_select %p276, %s277, %s278
      %p282 = pneg %p276
      %p283 = scmp.eq.s32.totalorder %s20, 1
      %p284 = por %p282, %p283
      %p285 = scmp.ne.s32.totalorder %s277, %s280
      %p286 = scmp.eq.s32.totalorder %s20, 0
      %p287 = por %p285, %p286
      %p288 = scmp.ne.s32.totalorder %s277, %s280
      %p289 = scmp.eq.s32.totalorder %s25, 1
      %p290 = por %p288, %p289
      %p291 = scmp.ne.s32.totalorder %s280, %s281
      %p292 = scmp.eq.s32.totalorder %s25, 0
      %p293 = por %p291, %p292
      %p294 = scmp.ne.s32.totalorder %s280, %s281
      %p295 = scmp.eq.s32.totalorder %s26, 1
      %p296 = por %p294, %p295
      %p298 = scmp.ne.s32.totalorder %s281, %s297
      %p299 = scmp.eq.s32.totalorder %s26, 0
      %p300 = por %p298, %p299
      %s302 = sadd.s32 %s301, 1
      %p305 = scmp.eq.s32.totalorder %s20, 1
      %p306 = scmp.ne.s32.totalorder %s301, %s303
      %p307 = scmp.eq.s32.totalorder %s20, 0
      %p308 = por %p306, %p307
      %p309 = scmp.ne.s32.totalorder %s301, %s303
      %p310 = scmp.eq.s32.totalorder %s25, 1
      %p311 = por %p309, %p310
      %p312 = scmp.ne.s32.totalorder %s303, %s304
      %p313 = scmp.eq.s32.totalorder %s25, 0
      %p314 = por %p312, %p313
      %p315 = scmp.ne.s32.totalorder %s303, %s304
      %p316 = scmp.eq.s32.totalorder %s26, 1
      %p317 = por %p315, %p316
      %p319 = scmp.ne.s32.totalorder %s304, %s318
      %p320 = scmp.eq.s32.totalorder %s26, 0
      %p321 = por %p319, %p320
      %s322 = ssub.s32 %s27, %s46
      %s323 = ssub.s32 %s28, %s42
      %s324 = sor.u32 %s322, %s323
      %p325 = scmp.eq.s32.totalorder %s324, 0
      %s327 = sadd.s32 %s326, 1
      %s328 = scalar_select %p325, %s326, %s327
      %p331 = pneg %p325
      %p332 = scmp.eq.s32.totalorder %s20, 1
      %p333 = por %p331, %p332
      %p334 = scmp.ne.s32.totalorder %s326, %s329
      %p335 = scmp.eq.s32.totalorder %s20, 0
      %p336 = por %p334, %p335
      %p337 = scmp.ne.s32.totalorder %s326, %s329
      %p338 = scmp.eq.s32.totalorder %s25, 1
      %p339 = por %p337, %p338
      %p340 = scmp.ne.s32.totalorder %s329, %s330
      %p341 = scmp.eq.s32.totalorder %s25, 0
      %p342 = por %p340, %p341
      %p343 = scmp.ne.s32.totalorder %s329, %s330
      %p344 = scmp.eq.s32.totalorder %s26, 1
      %p345 = por %p343, %p344
      %p347 = scmp.ne.s32.totalorder %s330, %s346
      %p348 = scmp.eq.s32.totalorder %s26, 0
      %p349 = por %p347, %p348
      %p350 = scmp.le.s32.totalorder 1, %s20
      %p351 = scmp.lt.s32.totalorder %s20, 3
      %p352 = pnand %p350, %p351
      %p353 = pneg %p352
      // Predicated region
      $region9: #{ltx_block_forward.11} parent=5 // pred_check
        _
      $region10: #{ltx_block_forward.11} parent=5 // pred_check_branch
        %355 = sbr.rel (%p352) target = $region12
      $region11: #{ltx_block_forward.11} parent=5 // pred_region
        %s356 = ssub.s32 %s20, 1
        // Predicated region
        $region13: #{ltx_block_forward.11} parent=11 // pred_check
          %p357 = pneg %p88
        $region14: #{ltx_block_forward.11} parent=11 // pred_check_branch
          %359 = sbr.rel (%p357) target = $region16
        $region15: #{ltx_block_forward.11} parent=11 // pred_region
          _
        $region16: #{ltx_block_forward.11} parent=11 // pred_fallthru
          _
        // Predicated region
        $region17: #{ltx_block_forward.11} parent=11 // pred_check
          %p360 = pneg %p109
        $region18: #{ltx_block_forward.11} parent=11 // pred_check_branch
          %362 = sbr.rel (%p360) target = $region20
        $region19: #{ltx_block_forward.11} parent=11 // pred_region
          _
        $region20: #{ltx_block_forward.11} parent=11 // pred_fallthru
          _
        // Predicated region
        $region21: #{ltx_block_forward.11} parent=11 // pred_check
          %p363 = pneg %p241
        $region22: #{ltx_block_forward.11} parent=11 // pred_check_branch
          %365 = sbr.rel (%p363) target = $region24
        $region23: #{ltx_block_forward.11} parent=11 // pred_region
          %p366 = scmp.lt.s32.totalorder %s32, 0
          %s367 = scalar_select %p366, %s32, 0
          %s368 = smul.addr %s367, 4
          %s369 = scalar_lea.vmem %s7, %s368
        $region24: #{ltx_block_forward.11} parent=11 // pred_fallthru
          _
        // Predicated region
        $region25: #{ltx_block_forward.11} parent=11 // pred_check
          %p370 = pneg %p267
        $region26: #{ltx_block_forward.11} parent=11 // pred_check_branch
          %372 = sbr.rel (%p370) target = $region28
        $region27: #{ltx_block_forward.11} parent=11 // pred_region
          %p373 = scmp.lt.s32.totalorder %s32, 0
          %s374 = scalar_select %p373, %s32, 0
          %s375 = scalar_lea.vmem %s8, %s374
        $region28: #{ltx_block_forward.11} parent=11 // pred_fallthru
          _
        // Predicated region
        $region29: #{ltx_block_forward.11} parent=11 // pred_check
          %p376 = pneg %p293
        $region30: #{ltx_block_forward.11} parent=11 // pred_check_branch
          %378 = sbr.rel (%p376) target = $region32
        $region31: #{ltx_block_forward.11} parent=11 // pred_region
          %s379 = smul.u32 16, %s32
          %p380 = scmp.lt.s32.totalorder %s379, 15
          %s381 = scalar_select %p380, %s379, 15
          %s382 = smul.addr %s381, 4
          %s383 = scalar_lea.vmem %s9, %s382
          %s384 = smul.u32 16, %s32
        $region32: #{ltx_block_forward.11} parent=11 // pred_fallthru
          _
        // Predicated region
        $region33: #{ltx_block_forward.11} parent=11 // pred_check
          %p385 = pneg %p314
        $region34: #{ltx_block_forward.11} parent=11 // pred_check_branch
          %387 = sbr.rel (%p385) target = $region36
        $region35: #{ltx_block_forward.11} parent=11 // pred_region
          _
        $region36: #{ltx_block_forward.11} parent=11 // pred_fallthru
          _
      $region12: #{ltx_block_forward.11} parent=5 // pred_fallthru
        _
      %p388 = scmp.lt.s32.totalorder %s20, 2
      // Predicated region
      $region37: #{ltx_block_forward.11} parent=5 // pred_check
        %p389 = pneg %p388
      $region38: #{ltx_block_forward.11} parent=5 // pred_check_branch
        %391 = sbr.rel (%p389) target = $region40
      $region39: #{ltx_block_forward.11} parent=5 // pred_region
        // Predicated region
        $region41: #{ltx_block_forward.11} parent=39 // pred_check
          %p392 = pneg %p61
        $region42: #{ltx_block_forward.11} parent=39 // pred_check_branch
          %394 = sbr.rel (%p392) target = $region44
        $region43: #{ltx_block_forward.11} parent=39 // pred_region
          %s395 = smul.u32 2, %s28
          %p396 = scmp.lt.s32.totalorder %s27, 1
          %s397 = scalar_select %p396, %s27, 1
          %p398 = scmp.lt.s32.totalorder %s395, 1
          %s399 = scalar_select %p398, %s395, 1
          %s400 = smul.addr %s397, 2
          %s401 = sadd.s32 %s399, %s400
          %s402 = smul.addr %s401, 4
          %s403 = scalar_lea.vmem %s0, %s402
          %s404 = smul.u32 2, %s28
        $region44: #{ltx_block_forward.11} parent=39 // pred_fallthru
          _
        // Predicated region
        $region45: #{ltx_block_forward.11} parent=39 // pred_check
          %p405 = pneg %p131
        $region46: #{ltx_block_forward.11} parent=39 // pred_check_branch
          %407 = sbr.rel (%p405) target = $region48
        $region47: #{ltx_block_forward.11} parent=39 // pred_region
          %s408 = smul.u32 2, %s28
          %p409 = scmp.lt.s32.totalorder %s27, 1
          %s410 = scalar_select %p409, %s27, 1
          %p411 = scmp.lt.s32.totalorder %s408, 1
          %s412 = scalar_select %p411, %s408, 1
          %s413 = smul.addr %s410, 2
          %s414 = sadd.s32 %s412, %s413
          %s415 = smul.addr %s414, 8
          %s416 = scalar_lea.vmem %s3, %s415
          %s417 = smul.u32 2, %s28
        $region48: #{ltx_block_forward.11} parent=39 // pred_fallthru
          _
        // Predicated region
        $region49: #{ltx_block_forward.11} parent=39 // pred_check
          %p418 = pneg %p157
        $region50: #{ltx_block_forward.11} parent=39 // pred_check_branch
          %420 = sbr.rel (%p418) target = $region52
        $region51: #{ltx_block_forward.11} parent=39 // pred_region
          %p421 = scmp.lt.s32.totalorder %s27, 1
          %s422 = scalar_select %p421, %s27, 1
          %s423 = scalar_lea.vmem %s4, %s422
        $region52: #{ltx_block_forward.11} parent=39 // pred_fallthru
          _
        // Predicated region
        $region53: #{ltx_block_forward.11} parent=39 // pred_check
          %p424 = pneg %p183
        $region54: #{ltx_block_forward.11} parent=39 // pred_check_branch
          %426 = sbr.rel (%p424) target = $region56
        $region55: #{ltx_block_forward.11} parent=39 // pred_region
          %p427 = scmp.lt.s32.totalorder %s27, 1
          %s428 = scalar_select %p427, %s27, 1
          %s429 = scalar_lea.vmem %s5, %s428
        $region56: #{ltx_block_forward.11} parent=39 // pred_fallthru
          _
        // Predicated region
        $region57: #{ltx_block_forward.11} parent=39 // pred_check
          %p430 = pneg %p209
        $region58: #{ltx_block_forward.11} parent=39 // pred_check_branch
          %432 = sbr.rel (%p430) target = $region60
        $region59: #{ltx_block_forward.11} parent=39 // pred_region
          %p433 = scmp.lt.s32.totalorder %s27, 1
          %s434 = scalar_select %p433, %s27, 1
          %s435 = scalar_lea.vmem %s6, %s434
        $region60: #{ltx_block_forward.11} parent=39 // pred_fallthru
          _
      $region40: #{ltx_block_forward.11} parent=5 // pred_fallthru
        _
      %p436 = scmp.le.s32.totalorder 1, %s20
      %p437 = scmp.lt.s32.totalorder %s20, 3
      %p438 = pnand %p436, %p437
      %p439 = pneg %p438
      // Predicated region
      $region61: #{ltx_block_forward.11} parent=5 // pred_check
        _
      $region62: #{ltx_block_forward.11} parent=5 // pred_check_branch
        %441 = sbr.rel (%p438) target = $region64
      $region63: #{ltx_block_forward.11} parent=5 // pred_region
        %s442 = ssub.s32 %s20, 1
        %s443 = smul.u32 2, %s31
        %p444 = scmp.lt.s32.totalorder %s30, 1
        %s445 = scalar_select %p444, %s30, 1
        %p446 = scmp.lt.s32.totalorder %s443, 1
        %s447 = scalar_select %p446, %s443, 1
        %s448 = smul.addr %s445, 2
        %s449 = sadd.s32 %s447, %s448
        %s450 = smul.addr %s449, 4
        %s451 = scalar_lea.vmem %s0, %s450
        %p452 = pneg %p67
        %p453 = pneg %p64
        %p454 = pneg %p88
        %p455 = pneg %p85
        %p456 = pneg %p109
        %p457 = pneg %p106
        %s458 = smul.u32 2, %s31
        %p459 = scmp.lt.s32.totalorder %s30, 1
        %s460 = scalar_select %p459, %s30, 1
        %p461 = scmp.lt.s32.totalorder %s458, 1
        %s462 = scalar_select %p461, %s458, 1
        %s463 = smul.addr %s460, 2
        %s464 = sadd.s32 %s462, %s463
        %s465 = smul.addr %s464, 8
        %s466 = scalar_lea.vmem %s3, %s465
        %p467 = pneg %p137
        %p468 = pneg %p134
        %p469 = scmp.lt.s32.totalorder %s30, 1
        %s470 = scalar_select %p469, %s30, 1
        %s471 = scalar_lea.vmem %s4, %s470
        %p472 = pneg %p163
        %p473 = pneg %p160
        %p474 = scmp.lt.s32.totalorder %s30, 1
        %s475 = scalar_select %p474, %s30, 1
        %s476 = scalar_lea.vmem %s5, %s475
        %p477 = pneg %p189
        %p478 = pneg %p186
        %p479 = scmp.lt.s32.totalorder %s30, 1
        %s480 = scalar_select %p479, %s30, 1
        %s481 = scalar_lea.vmem %s6, %s480
        %p482 = pneg %p215
        %p483 = pneg %p212
        %p484 = scmp.lt.s32.totalorder %s32, 0
        %s485 = scalar_select %p484, %s32, 0
        %s486 = smul.addr %s485, 4
        %s487 = scalar_lea.vmem %s7, %s486
        %p488 = pneg %p241
        %p489 = pneg %p238
        %p490 = scmp.lt.s32.totalorder %s32, 0
        %s491 = scalar_select %p490, %s32, 0
        %s492 = scalar_lea.vmem %s8, %s491
        %p493 = pneg %p267
        %p494 = pneg %p264
        %s495 = smul.u32 16, %s32
        %p496 = scmp.lt.s32.totalorder %s495, 15
        %s497 = scalar_select %p496, %s495, 15
        %s498 = smul.addr %s497, 4
        %s499 = scalar_lea.vmem %s9, %s498
        %p500 = pneg %p293
        %p501 = pneg %p290
        %p502 = pneg %p314
        %p503 = pneg %p311
        %p504 = pneg %p342
        %p505 = pneg %p339
        %s506 = sand.u32 %s329, 1
        %s507 = scalar_lea.sflag [#allocation6], %s506
        %s508 = sand.u32 %s329, 1
        %s509 = smul.addr %s508, 16
        %s510 = scalar_lea.vmem [#allocation5], %s509
        %s511 = smul.u32 2, %s31
        %p512 = scmp.lt.s32.totalorder %s30, 1
        %s513 = scalar_select %p512, %s30, 1
        %p514 = scmp.lt.s32.totalorder %s511, 1
        %s515 = scalar_select %p514, %s511, 1
        %s516 = smul.addr %s513, 2
        %s517 = sadd.s32 %s515, %s516
        %s518 = smul.addr %s517, 4
        %s519 = scalar_lea.vmem %s0, %s518
        %s520 = smul.u32 2, %s31
        %s521 = smul.u32 2, %s31
        %p522 = scmp.lt.s32.totalorder %s30, 1
        %s523 = scalar_select %p522, %s30, 1
        %p524 = scmp.lt.s32.totalorder %s521, 1
        %s525 = scalar_select %p524, %s521, 1
        %s526 = smul.addr %s523, 2
        %s527 = sadd.s32 %s525, %s526
        %s528 = smul.addr %s527, 8
        %s529 = scalar_lea.vmem %s3, %s528
        %s530 = smul.u32 2, %s31
        %p531 = scmp.lt.s32.totalorder %s30, 1
        %s532 = scalar_select %p531, %s30, 1
        %s533 = scalar_lea.vmem %s4, %s532
        %p534 = scmp.lt.s32.totalorder %s30, 1
        %s535 = scalar_select %p534, %s30, 1
        %s536 = scalar_lea.vmem %s5, %s535
        %p537 = scmp.lt.s32.totalorder %s30, 1
        %s538 = scalar_select %p537, %s30, 1
        %s539 = scalar_lea.vmem %s6, %s538
        %p540 = scmp.lt.s32.totalorder %s32, 0
        %s541 = scalar_select %p540, %s32, 0
        %s542 = smul.addr %s541, 4
        %s543 = scalar_lea.vmem %s7, %s542
        %p544 = scmp.lt.s32.totalorder %s32, 0
        %s545 = scalar_select %p544, %s32, 0
        %s546 = scalar_lea.vmem %s8, %s545
        %s547 = smul.u32 16, %s32
        %p548 = scmp.lt.s32.totalorder %s547, 15
        %s549 = scalar_select %p548, %s547, 15
        %s550 = smul.addr %s549, 4
        %s551 = scalar_lea.vmem %s9, %s550
        %s552 = smul.u32 16, %s32
        %s553 = smul.u32 2, %s31
        %p555 = scmp.eq.s32.totalorder %s32, 0
        // Predicated region
        $region65: #{ltx_block_forward.11} parent=63 // pred_check
          %p556 = pneg %p555
        $region66: #{ltx_block_forward.11} parent=63 // pred_check_branch
          %558 = sbr.rel (%p556) target = $region68
        $region67: #{ltx_block_forward.11} parent=63 // pred_region
          %v559 = vld [vmem:[%s519] sm:$0xf]
          %v560 = vld [vmem:[%s519 + $0x4] sm:$0xf]
          %v561 = vld [vmem:[%s1] sm:$0xf]
          %v562 = vld [vmem:[%s1 + $0x4] sm:$0xf]
          %v563 = vld [vmem:[%s1 + $0x8] sm:$0xf]
          %v564 = vld [vmem:[%s1 + $0xc] sm:$0xf]
          %v565 = vld [vmem:[%s2] sm:$0x1]
          %v567 = vlaneseq
          %v568 = vshrl.u32 %v567, 7
          %v569 = vsub.s32 0, %v568
          %v570 = vrot.slane %v565, %v569
          %v574 = vunpack.c.l.b16 %v559
          %v575 = vunpack.c.l.b16 %v560
          %v576 = vpack.c.b16 %v575, %v574
          %v581 = vunpack.c.l.b16 %v561
          %v582 = vunpack.c.l.b16 %v562
          %v583 = vunpack.c.l.b16 %v563
          %v584 = vunpack.c.l.b16 %v564
          %v585 = vpack.c.b16 %v582, %v581
          %v586 = vpack.c.b16 %v584, %v583
          %vm589 = vcmask 261120
          %v591 = vsel %vm589, %v576, 0
          %593 = vmatprep.subr.bf16.mxu0 0
          %594 = vmatpush1.bf16.msra.mxu0 0
          %595 = vmatprep.subr.bf16.mxu0 0
          %596 = vmatpush1.bf16.msra.mxu0 0
          %597 = vmatprep.subr.bf16.mxu0 0
          %598 = vmatpush1.bf16.msra.mxu0 0
          %599 = vmatprep.subr.bf16.mxu0 0
          %600 = vmatpush1.bf16.msra.mxu0 0
          %601 = vmatprep.subr.bf16.mxu0 0
          %602 = vmatpush1.bf16.msra.mxu0 0
          %603 = vmatprep.subr.bf16.mxu0 0
          %604 = vmatpush1.bf16.msra.mxu0 0
          %605 = vmatprep.subr.bf16.mxu0 0
          %606 = vmatpush1.bf16.msra.mxu0 %v586
          %607 = vmatprep.subr.bf16.mxu0 0
          %608 = vmatpush1.bf16.msra.mxu0 %v585
          %609 = vmatprep.subr.bf16.mxu0 0
          %610 = vmatpush2.bf16.msra.mxu0 0
          %611 = vmatprep.subr.bf16.mxu0 0
          %612 = vmatpush2.bf16.msra.mxu0 0
          %613 = vmatprep.subr.bf16.mxu0 0
          %614 = vmatpush2.bf16.msra.mxu0 0
          %615 = vmatprep.subr.bf16.mxu0 0
          %616 = vmatpush2.bf16.msra.mxu0 0
          %617 = vmatprep.subr.bf16.mxu0 0
          %618 = vmatpush2.bf16.msra.mxu0 0
          %619 = vmatprep.subr.bf16.mxu0 0
          %620 = vmatpush2.bf16.msra.mxu0 0
          %621 = vmatprep.subr.bf16.mxu0 0
          %622 = vmatpush2.bf16.msra.mxu0 0
          %623 = vmatprep.subr.bf16.mxu0 0
          %624 = vmatpush2.bf16.msra.mxu0 0
          %625 = vmatprep.mubr.bf16.mxu0 0
          %626 = vmatmul.mubr.bf16.gmra.mxu0 %v591
          %v627 = vpop.f32.mrf.mxu0
          %v628 = vadd.f32 %v570, %v627
          %v629 = vpop.f32.mrf.mxu0
          %v630 = vpop.f32.mrf.mxu0
          %v631 = vadd.f32 %v570, %v630
          %v632 = vpop.f32.mrf.mxu0
          %633 = vdwg.mxu0
          %v634 = vld [vmem:[%s529] sm:$0xff]
          %v635 = vld [vmem:[%s529 + $0x8] sm:$0xff]
          %v636 = vadd.f32 %v634, %v628
          %v637 = vadd.f32 %v635, %v631
          %638 = vst.msk [vmem:[#allocation2] sm:$0xff] %vm589, %v636
          %639 = vst.msk [vmem:[#allocation2 + $0x8] sm:$0xff] %vm589, %v637
          %v640 = vmul.f32 %v636, %v636
          %v641 = vmul.f32 %v637, %v637
          %v642 = vsel %vm589, %v640, 0.0
          %643 = vadd.xlane.f32.xlu0 %v642
          %v644 = vpop.xlane.xlu0 %643
          %v645 = vsel %vm589, %v641, 0.0
          %646 = vadd.xlane.f32.xlu0 %v645
          %v647 = vpop.xlane.xlu0 %646
          %v648 = vrcp.pop 32.0
          %v649 = vmul.f32 %v644, %v648
          %v650 = vmul.f32 %v647, %v648
          %v651 = vadd.f32 %v649, 1e-06
          %v652 = vadd.f32 %v650, 1e-06
          %v653 = vrsqrt.pop %v651
          %v654 = vrsqrt.pop %v652
          %v655 = vmul.f32 %v636, %v653
          %v656 = vmul.f32 %v637, %v654
          %v657 = vld [vmem:[%s533] sm:$0x1]
          %v658 = vadd.f32 %v657, 1.0
          %v660 = vlaneseq
          %v661 = vshrl.u32 %v660, 7
          %v662 = vsub.s32 0, %v661
          %v663 = vrot.slane %v658, %v662
          %v665 = vmul.f32 %v655, %v663
          %v666 = vmul.f32 %v656, %v663
          %v667 = vld [vmem:[%s536] sm:$0x1]
          %v669 = vlaneseq
          %v670 = vshrl.u32 %v669, 7
          %v671 = vsub.s32 0, %v670
          %v672 = vrot.slane %v667, %v671
          %v674 = vadd.f32 %v665, %v672
          %v675 = vadd.f32 %v666, %v672
          %v676 = vpack.c.bf16 %v675, %v674
          %v678 = vunpack.c.l.b16 %v676
          %v679 = vunpack.c.h.b16 %v676
          %v680 = vpack.c.b16 %v678, %v678
          %v681 = vpack.c.b16 %v679, %v679
          %vm684 = vcmask 257024
          %685 = vst.msk [vmem:[#allocation3] sm:$0xf] %vm684, %v680
          %686 = vst.msk [vmem:[#allocation3 + $0x4] sm:$0xf] %vm684, %v681
          %687 = vst.msk [vmem:[#allocation4] sm:$0xff] %vm589, 0.0
          %688 = vst.msk [vmem:[#allocation4 + $0x8] sm:$0xff] %vm589, 0.0
        $region68: #{ltx_block_forward.11} parent=63 // pred_fallthru
          _
        %v689 = vld [vmem:[#allocation3] sm:$0xf]
        %v690 = vld [vmem:[#allocation3 + $0x4] sm:$0xf]
        %v691 = vld [vmem:[%s543] sm:$0xf]
        %v692 = vld [vmem:[%s543 + $0x4] sm:$0xf]
        %v693 = vld [vmem:[%s543 + $0x8] sm:$0xf]
        %v694 = vld [vmem:[%s543 + $0xc] sm:$0xf]
        %v695 = vld [vmem:[%s546] sm:$0x1]
        %v697 = vlaneseq
        %v698 = vshrl.u32 %v697, 7
        %v699 = vsub.s32 0, %v698
        %v700 = vrot.slane %v695, %v699
        %v704 = vunpack.c.l.b16 %v689
        %v705 = vunpack.c.l.b16 %v690
        %v706 = vpack.c.b16 %v705, %v704
        %v711 = vunpack.c.l.b16 %v691
        %v712 = vunpack.c.l.b16 %v692
        %v713 = vunpack.c.l.b16 %v693
        %v714 = vunpack.c.l.b16 %v694
        %v715 = vpack.c.b16 %v712, %v711
        %v716 = vpack.c.b16 %v714, %v713
        %vm719 = vcmask 261120
        %v721 = vsel %vm719, %v706, 0
        %723 = vmatprep.subr.bf16.mxu0 0
        %724 = vmatpush1.bf16.msra.mxu0 0
        %725 = vmatprep.subr.bf16.mxu0 0
        %726 = vmatpush1.bf16.msra.mxu0 0
        %727 = vmatprep.subr.bf16.mxu0 0
        %728 = vmatpush1.bf16.msra.mxu0 0
        %729 = vmatprep.subr.bf16.mxu0 0
        %730 = vmatpush1.bf16.msra.mxu0 0
        %731 = vmatprep.subr.bf16.mxu0 0
        %732 = vmatpush1.bf16.msra.mxu0 0
        %733 = vmatprep.subr.bf16.mxu0 0
        %734 = vmatpush1.bf16.msra.mxu0 0
        %735 = vmatprep.subr.bf16.mxu0 0
        %736 = vmatpush1.bf16.msra.mxu0 %v716
        %737 = vmatprep.subr.bf16.mxu0 0
        %738 = vmatpush1.bf16.msra.mxu0 %v715
        %739 = vmatprep.subr.bf16.mxu0 0
        %740 = vmatpush2.bf16.msra.mxu0 0
        %741 = vmatprep.subr.bf16.mxu0 0
        %742 = vmatpush2.bf16.msra.mxu0 0
        %743 = vmatprep.subr.bf16.mxu0 0
        %744 = vmatpush2.bf16.msra.mxu0 0
        %745 = vmatprep.subr.bf16.mxu0 0
        %746 = vmatpush2.bf16.msra.mxu0 0
        %747 = vmatprep.subr.bf16.mxu0 0
        %748 = vmatpush2.bf16.msra.mxu0 0
        %749 = vmatprep.subr.bf16.mxu0 0
        %750 = vmatpush2.bf16.msra.mxu0 0
        %751 = vmatprep.subr.bf16.mxu0 0
        %752 = vmatpush2.bf16.msra.mxu0 0
        %753 = vmatprep.subr.bf16.mxu0 0
        %754 = vmatpush2.bf16.msra.mxu0 0
        %755 = vmatprep.mubr.bf16.mxu0 0
        %756 = vmatmul.mubr.bf16.gmra.mxu0 %v721
        %v757 = vpop.f32.mrf.mxu0
        %v758 = vadd.f32 %v700, %v757
        %v759 = vpop.f32.mrf.mxu0
        %v760 = vpop.f32.mrf.mxu0
        %v761 = vadd.f32 %v700, %v760
        %v762 = vpop.f32.mrf.mxu0
        %763 = vdwg.mxu0
        %v764 = vmul.f32 %v758, 0.5
        %v765 = vmul.f32 %v761, 0.5
        %v766 = vmul.f32 %v758, 0.044715
        %v767 = vmul.f32 %v761, 0.044715
        %v768 = vmul.f32 %v766, %v758
        %v769 = vmul.f32 %v767, %v761
        %v770 = vmul.f32 %v768, %v758
        %v771 = vmul.f32 %v769, %v761
        %v772 = vadd.f32 %v758, %v770
        %v773 = vadd.f32 %v761, %v771
        %v774 = vmul.f32 %v772, 0.7978846
        %v775 = vmul.f32 %v773, 0.7978846
        %v776 = vtanh.pop %v774
        %v777 = vtanh.pop %v775
        %v778 = vadd.f32 %v776, 1.0
        %v779 = vadd.f32 %v777, 1.0
        %v780 = vmul.f32 %v764, %v778
        %v781 = vmul.f32 %v765, %v779
        %v782 = vld [vmem:[#allocation4] sm:$0xff]
        %v783 = vld [vmem:[#allocation4 + $0x8] sm:$0xff]
        %v784 = vpack.c.bf16 %v781, %v780
        %v785 = vld [vmem:[%s551] sm:$0xf]
        %v786 = vld [vmem:[%s551 + $0x4] sm:$0xf]
        %v787 = vld [vmem:[%s551 + $0x8] sm:$0xf]
        %v788 = vld [vmem:[%s551 + $0xc] sm:$0xf]
        %v789 = vld [vmem:[%s551 + $0x10] sm:$0xf]
        %v790 = vld [vmem:[%s551 + $0x14] sm:$0xf]
        %v791 = vld [vmem:[%s551 + $0x18] sm:$0xf]
        %v792 = vld [vmem:[%s551 + $0x1c] sm:$0xf]
        %v793 = vld [vmem:[%s551 + $0x20] sm:$0xf]
        %v794 = vld [vmem:[%s551 + $0x24] sm:$0xf]
        %v795 = vld [vmem:[%s551 + $0x28] sm:$0xf]
        %v796 = vld [vmem:[%s551 + $0x2c] sm:$0xf]
        %v797 = vld [vmem:[%s551 + $0x30] sm:$0xf]
        %v798 = vld [vmem:[%s551 + $0x34] sm:$0xf]
        %v799 = vld [vmem:[%s551 + $0x38] sm:$0xf]
        %v800 = vld [vmem:[%s551 + $0x3c] sm:$0xf]
        %v817 = vunpack.c.l.b16 %v785
        %v818 = vunpack.c.l.b16 %v786
        %v819 = vunpack.c.l.b16 %v787
        %v820 = vunpack.c.l.b16 %v788
        %v821 = vunpack.c.l.b16 %v789
        %v822 = vunpack.c.l.b16 %v790
        %v823 = vunpack.c.l.b16 %v791
        %v824 = vunpack.c.l.b16 %v792
        %v825 = vunpack.c.l.b16 %v793
        %v826 = vunpack.c.l.b16 %v794
        %v827 = vunpack.c.l.b16 %v795
        %v828 = vunpack.c.l.b16 %v796
        %v829 = vunpack.c.l.b16 %v797
        %v830 = vunpack.c.l.b16 %v798
        %v831 = vunpack.c.l.b16 %v799
        %v832 = vunpack.c.l.b16 %v800
        %v833 = vpack.c.b16 %v818, %v817
        %v834 = vpack.c.b16 %v820, %v819
        %v835 = vpack.c.b16 %v822, %v821
        %v836 = vpack.c.b16 %v824, %v823
        %v837 = vpack.c.b16 %v826, %v825
        %v838 = vpack.c.b16 %v828, %v827
        %v839 = vpack.c.b16 %v830, %v829
        %v840 = vpack.c.b16 %v832, %v831
        %849 = vmatprep.subr.bf16.mxu0 0
        %850 = vmatpush1.bf16.msra.mxu0 %v840
        %851 = vmatprep.subr.bf16.mxu0 0
        %852 = vmatpush1.bf16.msra.mxu0 %v839
        %853 = vmatprep.subr.bf16.mxu0 0
        %854 = vmatpush1.bf16.msra.mxu0 %v838
        %855 = vmatprep.subr.bf16.mxu0 0
        %856 = vmatpush1.bf16.msra.mxu0 %v837
        %857 = vmatprep.subr.bf16.mxu0 0
        %858 = vmatpush1.bf16.msra.mxu0 %v836
        %859 = vmatprep.subr.bf16.mxu0 0
        %860 = vmatpush1.bf16.msra.mxu0 %v835
        %861 = vmatprep.subr.bf16.mxu0 0
        %862 = vmatpush1.bf16.msra.mxu0 %v834
        %863 = vmatprep.subr.bf16.mxu0 0
        %864 = vmatpush1.bf16.msra.mxu0 %v833
        %865 = vmatprep.subr.bf16.mxu0 0
        %866 = vmatpush2.bf16.msra.mxu0 0
        %867 = vmatprep.subr.bf16.mxu0 0
        %868 = vmatpush2.bf16.msra.mxu0 0
        %869 = vmatprep.subr.bf16.mxu0 0
        %870 = vmatpush2.bf16.msra.mxu0 0
        %871 = vmatprep.subr.bf16.mxu0 0
        %872 = vmatpush2.bf16.msra.mxu0 0
        %873 = vmatprep.subr.bf16.mxu0 0
        %874 = vmatpush2.bf16.msra.mxu0 0
        %875 = vmatprep.subr.bf16.mxu0 0
        %876 = vmatpush2.bf16.msra.mxu0 0
        %877 = vmatprep.subr.bf16.mxu0 0
        %878 = vmatpush2.bf16.msra.mxu0 0
        %879 = vmatprep.subr.bf16.mxu0 0
        %880 = vmatpush2.bf16.msra.mxu0 0
        %881 = vmatprep.mubr.bf16.mxu0 0
        %882 = vmatmul.mubr.bf16.gmra.mxu0 %v784
        %v883 = vpop.f32.mrf.mxu0
        %v884 = vadd.f32 0.0, %v883
        %v885 = vpop.f32.mrf.mxu0
        %v886 = vpop.f32.mrf.mxu0
        %v887 = vadd.f32 0.0, %v886
        %v888 = vpop.f32.mrf.mxu0
        %889 = vdwg.mxu0
        %v890 = vadd.f32 %v782, %v884
        %v891 = vadd.f32 %v783, %v887
        %892 = vst.msk [vmem:[#allocation4] sm:$0xff] %vm719, %v890
        %893 = vst.msk [vmem:[#allocation4 + $0x8] sm:$0xff] %vm719, %v891
        // Predicated region
        $region69: #{ltx_block_forward.11} parent=63 // pred_check
          %p894 = pneg %p555
        $region70: #{ltx_block_forward.11} parent=63 // pred_check_branch
          %896 = sbr.rel (%p894) target = $region72
        $region71: #{ltx_block_forward.11} parent=63 // pred_region
          %v897 = vld [vmem:[#allocation2] sm:$0xff]
          %v898 = vld [vmem:[#allocation2 + $0x8] sm:$0xff]
          %v899 = vld [vmem:[#allocation4] sm:$0xff]
          %v900 = vld [vmem:[#allocation4 + $0x8] sm:$0xff]
          %v901 = vld [vmem:[%s10] sm:$0x1]
          %v903 = vlaneseq
          %v904 = vshrl.u32 %v903, 7
          %v905 = vsub.s32 0, %v904
          %v906 = vrot.slane %v901, %v905
          %v908 = vadd.f32 %v899, %v906
          %v909 = vadd.f32 %v900, %v906
          %v910 = vld [vmem:[%s539] sm:$0x1]
          %v912 = vlaneseq
          %v913 = vshrl.u32 %v912, 7
          %v914 = vsub.s32 0, %v913
          %v915 = vrot.slane %v910, %v914
          %v917 = vmul.f32 %v908, %v915
          %v918 = vmul.f32 %v909, %v915
          %v919 = vadd.f32 %v897, %v917
          %v920 = vadd.f32 %v898, %v918
          %921 = vst.msk [vmem:[%s510] sm:$0xff] %vm719, %v919
          %922 = vst.msk [vmem:[%s510 + $0x8] sm:$0xff] %vm719, %v920
        $region72: #{ltx_block_forward.11} parent=63 // pred_fallthru
          _
        %s923 = sand.u32 %s329, 1
        %s924 = scalar_lea.sflag [#allocation6], %s923
        %s925 = sand.u32 %s329, 1
        %s926 = smul.addr %s925, 16
        %s927 = scalar_lea.vmem [#allocation5], %s926
        // Predicated region
        $region73: #{ltx_block_forward.11} parent=63 // pred_check
          %p928 = pneg %p339
        $region74: #{ltx_block_forward.11} parent=63 // pred_check_branch
          %930 = sbr.rel (%p928) target = $region76
        $region75: #{ltx_block_forward.11} parent=63 // pred_region
          %s931 = smul.u32 2, %s31
          %s933 = ssub.s32 256, 256
          %934 = vsyncadd %s924, %s933
          %s935 = smul.addr %s30, 2
          %s936 = sadd.s32 %s931, %s935
          %s937 = smul.addr %s936, 128
          %s938 = scalar_lea.hbm %s11, %s937
          %s939 = sshll.u32 %s927, 4
          %s940 = int_to_ptr.vmem [resolvable:$true] %s939
          %945 = dma.vmem_to_hbm [thread:$0]  %s940, 256, %s938, %s924, 128, 128, 8
        $region76: #{ltx_block_forward.11} parent=63 // pred_fallthru
          _
      $region64: #{ltx_block_forward.11} parent=5 // pred_fallthru
        _
      %p946 = scmp.le.s32.totalorder 2, %s20
      // Predicated region
      $region77: #{ltx_block_forward.11} parent=5 // pred_check
        %p947 = pneg %p946
      $region78: #{ltx_block_forward.11} parent=5 // pred_check_branch
        %949 = sbr.rel (%p947) target = $region80
      $region79: #{ltx_block_forward.11} parent=5 // pred_region
        %s950 = ssub.s32 %s20, 2
        // Predicated region
        $region81: #{ltx_block_forward.11} parent=79 // pred_check
          %p951 = pneg %p345
        $region82: #{ltx_block_forward.11} parent=79 // pred_check_branch
          %953 = sbr.rel (%p951) target = $region84
        $region83: #{ltx_block_forward.11} parent=79 // pred_region
          %s954 = sand.u32 %s330, 1
          %s955 = scalar_lea.sflag [#allocation6], %s954
          %s956 = sand.u32 %s330, 1
          %s957 = smul.addr %s956, 16
          %s958 = scalar_lea.vmem [#allocation5], %s957
          %959 = dma.done %s955, 256
        $region84: #{ltx_block_forward.11} parent=79 // pred_fallthru
          _
      $region80: #{ltx_block_forward.11} parent=5 // pred_fallthru
        _
    $region6: #{ltx_block_forward.11} parent=1 // loop_footer
      %s24 = sadd.s32 1, %s20
    $region7: #{ltx_block_forward.11} parent=1 // loop_footer_branch
      %19 = sbr.rel target = $region3
    $region8: #{ltx_block_forward.11} parent=1 // loop_exit
      _
    %960 = vsyncpa [#allocation6], 1
    %s961 = scalar_lea.sflag [#allocation6], 1
    %962 = vsyncpa %s961, 1

</llo_original>
